<compile_context>
chip_gen: v7x
topology: tpu7x:2x2x1
jax: 0.10.0
libtpu: 0.0.40
codegen_flags: <defaults>
</compile_context>

<pallas_src>
import jax
import jax.numpy as jnp
from jax import lax
from jax.experimental import pallas as pl
from jax.experimental.pallas import tpu as pltpu

N_EMBD = 384
N_HEAD = 4
HEAD_SIZE = N_EMBD // N_HEAD      # 96
BLOCK_SIZE = 128                  # causal-mask size (T must be <= BLOCK_SIZE)
NEG_INF = -1e30                   # finite mask value (avoids inf-inf NaN hazards)


def mha_kernel(x_ref, wqkv_ref, wp_ref, bp_ref, o_ref):
    """One grid step = one batch row: fused-QKV multi-head causal attention + proj."""
    x = x_ref[0]                                   # (T, C) bf16
    T = x.shape[0]

    # ---- fused Q/K/V projection: one MXU op (T,C)@(C,3C), f32 accumulation ----
    qkv = jnp.dot(x, wqkv_ref[...], preferred_element_type=jnp.float32)   # (T, 3C)
    q = qkv[:, :N_EMBD]                            # scale already folded into Wq
    k = qkv[:, N_EMBD:2 * N_EMBD]                  # slices at lane-aligned offsets
    v = qkv[:, 2 * N_EMBD:]

    row = lax.broadcasted_iota(jnp.int32, (T, T), 0)
    col = lax.broadcasted_iota(jnp.int32, (T, T), 1)
    causal = col <= row                            # == tril[:T,:T] != 0

    acc = jnp.zeros((T, N_EMBD), jnp.float32)      # output-projection accumulator
    for h in range(N_HEAD):                        # static unroll over 4 heads
        sl = slice(h * HEAD_SIZE, (h + 1) * HEAD_SIZE)
        qh = q[:, sl].astype(jnp.bfloat16)
        kh = k[:, sl].astype(jnp.bfloat16)
        vh = v[:, sl].astype(jnp.bfloat16)

        # score: contract the shared head dim directly (no explicit kh.T)
        s = lax.dot_general(qh, kh, (((1,), (1,)), ((), ())),
                            preferred_element_type=jnp.float32)           # (T, T)
        s = jnp.where(causal, s, NEG_INF)
        s = s - jnp.max(s, axis=-1, keepdims=True)
        p = jnp.exp(s)                             # unnormalized probs, f32
        inv = pl.reciprocal(jnp.sum(p, axis=-1, keepdims=True), approx=True)

        # dropout(p) -> identity (eval mode)
        oh = jnp.dot(p.astype(jnp.bfloat16), vh,
                     preferred_element_type=jnp.float32)                   # (T, 96)
        oh = oh * inv                              # deferred softmax normalization

        # fold output projection into the head loop (sublane-aligned 96-row slice)
        acc = acc + jnp.dot(oh.astype(jnp.bfloat16),
                            wp_ref[h * HEAD_SIZE:(h + 1) * HEAD_SIZE, :],
                            preferred_element_type=jnp.float32)            # (T, C)

    # dropout(proj) -> identity (eval mode)
    o_ref[0] = (acc + bp_ref[...]).astype(o_ref.dtype)


def mha_forward(x, params):
    """x: (B, T, C) f32. params = (wq, wk, wv, wp, bp), all f32, (in, out) layout."""
    wq, wk, wv, wp, bp = params
    B, T, C = x.shape

    # Host-side weight prep: fold the attention scale into Wq, pack Q|K|V
    # column-wise into a single (C, 3C) weight, and cast matmul operands to bf16.
    scale = HEAD_SIZE ** -0.5
    wqkv = jnp.concatenate([wq * scale, wk, wv], axis=1).astype(jnp.bfloat16)
    wp_bf = wp.astype(jnp.bfloat16)
    x_bf = x.astype(jnp.bfloat16)

    def full_spec(shape):
        return pl.BlockSpec(shape, lambda b: (0,) * len(shape))

    return pl.pallas_call(
        mha_kernel,
        out_shape=jax.ShapeDtypeStruct((B, T, C), jnp.float32),
        grid_spec=pltpu.PrefetchScalarGridSpec(
            num_scalar_prefetch=0,
            grid=(B,),
            in_specs=[
                pl.BlockSpec((1, T, C), lambda b: (b, 0, 0)),   # x: one batch row/step
                full_spec(wqkv.shape),                          # packed QKV weight
                full_spec(wp_bf.shape),                         # output projection
                full_spec(bp.shape),                            # projection bias (f32)
            ],
            out_specs=pl.BlockSpec((1, T, C), lambda b: (b, 0, 0)),
        ),
        compiler_params=pltpu.CompilerParams(
            dimension_semantics=("parallel",),
            vmem_limit_bytes=32 * 1024 * 1024,   # sized to real footprint; v7x-safe
        ),
    )(x_bf, wqkv, wp_bf, bp)


def init_params(key):
    ks = jax.random.split(key, 5)
    s = 0.02
    wq = s * jax.random.normal(ks[0], (N_EMBD, N_EMBD), jnp.float32)
    wk = s * jax.random.normal(ks[1], (N_EMBD, N_EMBD), jnp.float32)
    wv = s * jax.random.normal(ks[2], (N_EMBD, N_EMBD), jnp.float32)
    wp = s * jax.random.normal(ks[3], (N_EMBD, N_EMBD), jnp.float32)
    bp = s * jax.random.normal(ks[4], (1, N_EMBD), jnp.float32)
    return (wq, wk, wv, wp, bp)


def mha_reference(x, params):
    """Pure-JAX f32 reference mirroring the PyTorch forward (eval mode)."""
    wq, wk, wv, wp, bp = params
    B, T, C = x.shape
    q = x @ wq
    k = x @ wk
    v = x @ wv
    qh = q.reshape(B, T, N_HEAD, HEAD_SIZE).transpose(0, 2, 1, 3)
    kh = k.reshape(B, T, N_HEAD, HEAD_SIZE).transpose(0, 2, 1, 3)
    vh = v.reshape(B, T, N_HEAD, HEAD_SIZE).transpose(0, 2, 1, 3)
    s = jnp.einsum('bhqd,bhkd->bhqk', qh, kh) * HEAD_SIZE ** -0.5
    mask = jnp.tril(jnp.ones((T, T), bool))
    s = jnp.where(mask, s, -jnp.inf)
    p = jax.nn.softmax(s, axis=-1)
    o = jnp.einsum('bhqk,bhkd->bhqd', p, vh).transpose(0, 2, 1, 3).reshape(B, T, C)
    return o @ wp + bp[0]


if __name__ == "__main__":
    # TODO(synk): nn.Dropout (train-mode stochastic masking) is treated as identity
    # (eval semantics); it could be added with pltpu.prng_seed/prng_random_bits.
    key = jax.random.PRNGKey(0)
    kx, kp = jax.random.split(key)
    B, T = 2, BLOCK_SIZE                  # (2, 128, 384)
    x = jax.random.normal(kx, (B, T, N_EMBD), jnp.float32)
    params = init_params(kp)

    out = mha_forward(x, params)
    out = jax.block_until_ready(out)

    ref = mha_reference(x, params)
    assert out.shape == (B, T, N_EMBD)
    max_err = float(jnp.abs(out - ref).max())
    # tolerance loosened for bf16 matmul operands (f32 accumulation)
    assert jnp.allclose(out, ref, atol=1e-2, rtol=1e-2), max_err
    print("KERNEL_OK")
</pallas_src>

<mosaic_0001>
module attributes {stable_mosaic.version = 11 : i64} {
  func.func @mha_kernel(%arg0: i32, %arg1: memref<1x128x384xbf16, #tpu.memory_space<vmem>>, %arg2: memref<384x1152xbf16, #tpu.memory_space<vmem>>, %arg3: memref<384x384xbf16, #tpu.memory_space<vmem>>, %arg4: memref<1x384xf32, #tpu.memory_space<vmem>>, %arg5: memref<1x128x384xf32, #tpu.memory_space<vmem>>) attributes {dimension_semantics = [#tpu.dimension_semantics<parallel>], iteration_bounds = array<i64: 2>, scalar_prefetch = 0 : i64, scratch_operands = 0 : i64, tpu.core_type = #tpu.core_type<tc>, window_params = [{transform_indices = @transform_0, window_bounds = array<i64: 1, 128, 384>}, {pipeline_mode = #tpu.pipeline_mode<synchronous>, transform_indices = @transform_1, window_bounds = array<i64: 384, 1152>}, {pipeline_mode = #tpu.pipeline_mode<synchronous>, transform_indices = @transform_2, window_bounds = array<i64: 384, 384>}, {pipeline_mode = #tpu.pipeline_mode<synchronous>, transform_indices = @transform_3, window_bounds = array<i64: 1, 384>}, {transform_indices = @transform_4, window_bounds = array<i64: 1, 128, 384>}]} {
    %c0 = arith.constant 0 : index
    %c0_0 = arith.constant 0 : index
    %c0_1 = arith.constant 0 : index
    %0 = vector.load %arg1[%c0, %c0_0, %c0_1] : memref<1x128x384xbf16, #tpu.memory_space<vmem>>, vector<1x128x384xbf16>
    %1 = vector.shape_cast %0 : vector<1x128x384xbf16> to vector<128x384xbf16>
    %c0_2 = arith.constant 0 : index
    %c0_3 = arith.constant 0 : index
    %2 = vector.load %arg2[%c0_2, %c0_3] : memref<384x1152xbf16, #tpu.memory_space<vmem>>, vector<384x1152xbf16>
    %cst = arith.constant dense<0.000000e+00> : vector<128x1152xf32>
    %3 = tpu.matmul %1, %2, %cst {dimension_numbers = #tpu.dot_dimension_numbers<[1], [0], [0], [1], [0, 0, 1, 1], [], []>} : vector<128x384xbf16>, vector<384x1152xbf16>, vector<128x1152xf32> -> vector<128x1152xf32>
    %4 = vector.extract_strided_slice %3 {offsets = [0, 0], sizes = [128, 384], strides = [1, 1]} : vector<128x1152xf32> to vector<128x384xf32>
    %5 = vector.extract_strided_slice %3 {offsets = [0, 384], sizes = [128, 384], strides = [1, 1]} : vector<128x1152xf32> to vector<128x384xf32>
    %6 = vector.extract_strided_slice %3 {offsets = [0, 768], sizes = [128, 384], strides = [1, 1]} : vector<128x1152xf32> to vector<128x384xf32>
    %7 = tpu.iota {dimensions = array<i32: 0>} : vector<128x128xi32>
    %8 = tpu.iota {dimensions = array<i32: 1>} : vector<128x128xi32>
    %9 = arith.cmpi sle, %8, %7 : vector<128x128xi32>
    %cst_4 = arith.constant 0.000000e+00 : f32
    %10 = vector.broadcast %cst_4 : f32 to vector<128x384xf32>
    %11 = vector.extract_strided_slice %4 {offsets = [0, 0], sizes = [128, 96], strides = [1, 1]} : vector<128x384xf32> to vector<128x96xf32>
    %12 = arith.truncf %11 : vector<128x96xf32> to vector<128x96xbf16>
    %13 = vector.extract_strided_slice %5 {offsets = [0, 0], sizes = [128, 96], strides = [1, 1]} : vector<128x384xf32> to vector<128x96xf32>
    %14 = arith.truncf %13 : vector<128x96xf32> to vector<128x96xbf16>
    %15 = vector.extract_strided_slice %6 {offsets = [0, 0], sizes = [128, 96], strides = [1, 1]} : vector<128x384xf32> to vector<128x96xf32>
    %16 = arith.truncf %15 : vector<128x96xf32> to vector<128x96xbf16>
    %cst_5 = arith.constant dense<0.000000e+00> : vector<128x128xf32>
    %17 = tpu.matmul %12, %14, %cst_5 {dimension_numbers = #tpu.dot_dimension_numbers<[1], [1], [0], [0], [0, 0, 1, 0], [], []>} : vector<128x96xbf16>, vector<128x96xbf16>, vector<128x128xf32> -> vector<128x128xf32>
    %cst_6 = arith.constant -1.000000e+30 : f32
    %18 = vector.broadcast %cst_6 : f32 to vector<128x128xf32>
    %19 = arith.select %9, %17, %18 : vector<128x128xi1>, vector<128x128xf32>
    %cst_7 = arith.constant dense<0xFF800000> : vector<128xf32>
    %20 = vector.multi_reduction <maximumf>, %19, %cst_7 [1] : vector<128x128xf32> to vector<128xf32>
    %21 = vector.shape_cast %20 : vector<128xf32> to vector<128x1xf32>
    %22 = vector.broadcast %21 : vector<128x1xf32> to vector<128x128xf32>
    %23 = arith.subf %19, %22 : vector<128x128xf32>
    %24 = math.exp %23 : vector<128x128xf32>
    %cst_8 = arith.constant dense<0.000000e+00> : vector<128xf32>
    %25 = vector.multi_reduction <add>, %24, %cst_8 [1] : vector<128x128xf32> to vector<128xf32>
    %26 = vector.shape_cast %25 : vector<128xf32> to vector<128x1xf32>
    %27 = tpu.reciprocal %26 {approx = true} : vector<128x1xf32> -> vector<128x1xf32>
    %28 = arith.truncf %24 : vector<128x128xf32> to vector<128x128xbf16>
    %cst_9 = arith.constant dense<0.000000e+00> : vector<128x96xf32>
    %29 = tpu.matmul %28, %16, %cst_9 {dimension_numbers = #tpu.dot_dimension_numbers<[1], [0], [0], [1], [0, 0, 1, 1], [], []>} : vector<128x128xbf16>, vector<128x96xbf16>, vector<128x96xf32> -> vector<128x96xf32>
    %30 = vector.broadcast %27 : vector<128x1xf32> to vector<128x96xf32>
    %31 = arith.mulf %29, %30 : vector<128x96xf32>
    %32 = arith.truncf %31 : vector<128x96xf32> to vector<128x96xbf16>
    %c0_10 = arith.constant 0 : index
    %c0_11 = arith.constant 0 : index
    %33 = vector.load %arg3[%c0_10, %c0_11] : memref<384x384xbf16, #tpu.memory_space<vmem>>, vector<96x384xbf16>
    %cst_12 = arith.constant dense<0.000000e+00> : vector<128x384xf32>
    %34 = tpu.matmul %32, %33, %cst_12 {dimension_numbers = #tpu.dot_dimension_numbers<[1], [0], [0], [1], [0, 0, 1, 1], [], []>} : vector<128x96xbf16>, vector<96x384xbf16>, vector<128x384xf32> -> vector<128x384xf32>
    %35 = arith.addf %10, %34 : vector<128x384xf32>
    %36 = vector.extract_strided_slice %4 {offsets = [0, 96], sizes = [128, 96], strides = [1, 1]} : vector<128x384xf32> to vector<128x96xf32>
    %37 = arith.truncf %36 : vector<128x96xf32> to vector<128x96xbf16>
    %38 = vector.extract_strided_slice %5 {offsets = [0, 96], sizes = [128, 96], strides = [1, 1]} : vector<128x384xf32> to vector<128x96xf32>
    %39 = arith.truncf %38 : vector<128x96xf32> to vector<128x96xbf16>
    %40 = vector.extract_strided_slice %6 {offsets = [0, 96], sizes = [128, 96], strides = [1, 1]} : vector<128x384xf32> to vector<128x96xf32>
    %41 = arith.truncf %40 : vector<128x96xf32> to vector<128x96xbf16>
    %cst_13 = arith.constant dense<0.000000e+00> : vector<128x128xf32>
    %42 = tpu.matmul %37, %39, %cst_13 {dimension_numbers = #tpu.dot_dimension_numbers<[1], [1], [0], [0], [0, 0, 1, 0], [], []>} : vector<128x96xbf16>, vector<128x96xbf16>, vector<128x128xf32> -> vector<128x128xf32>
    %cst_14 = arith.constant -1.000000e+30 : f32
    %43 = vector.broadcast %cst_14 : f32 to vector<128x128xf32>
    %44 = arith.select %9, %42, %43 : vector<128x128xi1>, vector<128x128xf32>
    %cst_15 = arith.constant dense<0xFF800000> : vector<128xf32>
    %45 = vector.multi_reduction <maximumf>, %44, %cst_15 [1] : vector<128x128xf32> to vector<128xf32>
    %46 = vector.shape_cast %45 : vector<128xf32> to vector<128x1xf32>
    %47 = vector.broadcast %46 : vector<128x1xf32> to vector<128x128xf32>
    %48 = arith.subf %44, %47 : vector<128x128xf32>
    %49 = math.exp %48 : vector<128x128xf32>
    %cst_16 = arith.constant dense<0.000000e+00> : vector<128xf32>
    %50 = vector.multi_reduction <add>, %49, %cst_16 [1] : vector<128x128xf32> to vector<128xf32>
    %51 = vector.shape_cast %50 : vector<128xf32> to vector<128x1xf32>
    %52 = tpu.reciprocal %51 {approx = true} : vector<128x1xf32> -> vector<128x1xf32>
    %53 = arith.truncf %49 : vector<128x128xf32> to vector<128x128xbf16>
    %cst_17 = arith.constant dense<0.000000e+00> : vector<128x96xf32>
    %54 = tpu.matmul %53, %41, %cst_17 {dimension_numbers = #tpu.dot_dimension_numbers<[1], [0], [0], [1], [0, 0, 1, 1], [], []>} : vector<128x128xbf16>, vector<128x96xbf16>, vector<128x96xf32> -> vector<128x96xf32>
    %55 = vector.broadcast %52 : vector<128x1xf32> to vector<128x96xf32>
    %56 = arith.mulf %54, %55 : vector<128x96xf32>
    %57 = arith.truncf %56 : vector<128x96xf32> to vector<128x96xbf16>
    %c96 = arith.constant 96 : index
    %c0_18 = arith.constant 0 : index
    %58 = vector.load %arg3[%c96, %c0_18] : memref<384x384xbf16, #tpu.memory_space<vmem>>, vector<96x384xbf16>
    %cst_19 = arith.constant dense<0.000000e+00> : vector<128x384xf32>
    %59 = tpu.matmul %57, %58, %cst_19 {dimension_numbers = #tpu.dot_dimension_numbers<[1], [0], [0], [1], [0, 0, 1, 1], [], []>} : vector<128x96xbf16>, vector<96x384xbf16>, vector<128x384xf32> -> vector<128x384xf32>
    %60 = arith.addf %35, %59 : vector<128x384xf32>
    %61 = vector.extract_strided_slice %4 {offsets = [0, 192], sizes = [128, 96], strides = [1, 1]} : vector<128x384xf32> to vector<128x96xf32>
    %62 = arith.truncf %61 : vector<128x96xf32> to vector<128x96xbf16>
    %63 = vector.extract_strided_slice %5 {offsets = [0, 192], sizes = [128, 96], strides = [1, 1]} : vector<128x384xf32> to vector<128x96xf32>
    %64 = arith.truncf %63 : vector<128x96xf32> to vector<128x96xbf16>
    %65 = vector.extract_strided_slice %6 {offsets = [0, 192], sizes = [128, 96], strides = [1, 1]} : vector<128x384xf32> to vector<128x96xf32>
    %66 = arith.truncf %65 : vector<128x96xf32> to vector<128x96xbf16>
    %cst_20 = arith.constant dense<0.000000e+00> : vector<128x128xf32>
    %67 = tpu.matmul %62, %64, %cst_20 {dimension_numbers = #tpu.dot_dimension_numbers<[1], [1], [0], [0], [0, 0, 1, 0], [], []>} : vector<128x96xbf16>, vector<128x96xbf16>, vector<128x128xf32> -> vector<128x128xf32>
    %cst_21 = arith.constant -1.000000e+30 : f32
    %68 = vector.broadcast %cst_21 : f32 to vector<128x128xf32>
    %69 = arith.select %9, %67, %68 : vector<128x128xi1>, vector<128x128xf32>
    %cst_22 = arith.constant dense<0xFF800000> : vector<128xf32>
    %70 = vector.multi_reduction <maximumf>, %69, %cst_22 [1] : vector<128x128xf32> to vector<128xf32>
    %71 = vector.shape_cast %70 : vector<128xf32> to vector<128x1xf32>
    %72 = vector.broadcast %71 : vector<128x1xf32> to vector<128x128xf32>
    %73 = arith.subf %69, %72 : vector<128x128xf32>
    %74 = math.exp %73 : vector<128x128xf32>
    %cst_23 = arith.constant dense<0.000000e+00> : vector<128xf32>
    %75 = vector.multi_reduction <add>, %74, %cst_23 [1] : vector<128x128xf32> to vector<128xf32>
    %76 = vector.shape_cast %75 : vector<128xf32> to vector<128x1xf32>
    %77 = tpu.reciprocal %76 {approx = true} : vector<128x1xf32> -> vector<128x1xf32>
    %78 = arith.truncf %74 : vector<128x128xf32> to vector<128x128xbf16>
    %cst_24 = arith.constant dense<0.000000e+00> : vector<128x96xf32>
    %79 = tpu.matmul %78, %66, %cst_24 {dimension_numbers = #tpu.dot_dimension_numbers<[1], [0], [0], [1], [0, 0, 1, 1], [], []>} : vector<128x128xbf16>, vector<128x96xbf16>, vector<128x96xf32> -> vector<128x96xf32>
    %80 = vector.broadcast %77 : vector<128x1xf32> to vector<128x96xf32>
    %81 = arith.mulf %79, %80 : vector<128x96xf32>
    %82 = arith.truncf %81 : vector<128x96xf32> to vector<128x96xbf16>
    %c192 = arith.constant 192 : index
    %c0_25 = arith.constant 0 : index
    %83 = vector.load %arg3[%c192, %c0_25] : memref<384x384xbf16, #tpu.memory_space<vmem>>, vector<96x384xbf16>
    %cst_26 = arith.constant dense<0.000000e+00> : vector<128x384xf32>
    %84 = tpu.matmul %82, %83, %cst_26 {dimension_numbers = #tpu.dot_dimension_numbers<[1], [0], [0], [1], [0, 0, 1, 1], [], []>} : vector<128x96xbf16>, vector<96x384xbf16>, vector<128x384xf32> -> vector<128x384xf32>
    %85 = arith.addf %60, %84 : vector<128x384xf32>
    %86 = vector.extract_strided_slice %4 {offsets = [0, 288], sizes = [128, 96], strides = [1, 1]} : vector<128x384xf32> to vector<128x96xf32>
    %87 = arith.truncf %86 : vector<128x96xf32> to vector<128x96xbf16>
    %88 = vector.extract_strided_slice %5 {offsets = [0, 288], sizes = [128, 96], strides = [1, 1]} : vector<128x384xf32> to vector<128x96xf32>
    %89 = arith.truncf %88 : vector<128x96xf32> to vector<128x96xbf16>
    %90 = vector.extract_strided_slice %6 {offsets = [0, 288], sizes = [128, 96], strides = [1, 1]} : vector<128x384xf32> to vector<128x96xf32>
    %91 = arith.truncf %90 : vector<128x96xf32> to vector<128x96xbf16>
    %cst_27 = arith.constant dense<0.000000e+00> : vector<128x128xf32>
    %92 = tpu.matmul %87, %89, %cst_27 {dimension_numbers = #tpu.dot_dimension_numbers<[1], [1], [0], [0], [0, 0, 1, 0], [], []>} : vector<128x96xbf16>, vector<128x96xbf16>, vector<128x128xf32> -> vector<128x128xf32>
    %cst_28 = arith.constant -1.000000e+30 : f32
    %93 = vector.broadcast %cst_28 : f32 to vector<128x128xf32>
    %94 = arith.select %9, %92, %93 : vector<128x128xi1>, vector<128x128xf32>
    %cst_29 = arith.constant dense<0xFF800000> : vector<128xf32>
    %95 = vector.multi_reduction <maximumf>, %94, %cst_29 [1] : vector<128x128xf32> to vector<128xf32>
    %96 = vector.shape_cast %95 : vector<128xf32> to vector<128x1xf32>
    %97 = vector.broadcast %96 : vector<128x1xf32> to vector<128x128xf32>
    %98 = arith.subf %94, %97 : vector<128x128xf32>
    %99 = math.exp %98 : vector<128x128xf32>
    %cst_30 = arith.constant dense<0.000000e+00> : vector<128xf32>
    %100 = vector.multi_reduction <add>, %99, %cst_30 [1] : vector<128x128xf32> to vector<128xf32>
    %101 = vector.shape_cast %100 : vector<128xf32> to vector<128x1xf32>
    %102 = tpu.reciprocal %101 {approx = true} : vector<128x1xf32> -> vector<128x1xf32>
    %103 = arith.truncf %99 : vector<128x128xf32> to vector<128x128xbf16>
    %cst_31 = arith.constant dense<0.000000e+00> : vector<128x96xf32>
    %104 = tpu.matmul %103, %91, %cst_31 {dimension_numbers = #tpu.dot_dimension_numbers<[1], [0], [0], [1], [0, 0, 1, 1], [], []>} : vector<128x128xbf16>, vector<128x96xbf16>, vector<128x96xf32> -> vector<128x96xf32>
    %105 = vector.broadcast %102 : vector<128x1xf32> to vector<128x96xf32>
    %106 = arith.mulf %104, %105 : vector<128x96xf32>
    %107 = arith.truncf %106 : vector<128x96xf32> to vector<128x96xbf16>
    %c288 = arith.constant 288 : index
    %c0_32 = arith.constant 0 : index
    %108 = vector.load %arg3[%c288, %c0_32] : memref<384x384xbf16, #tpu.memory_space<vmem>>, vector<96x384xbf16>
    %cst_33 = arith.constant dense<0.000000e+00> : vector<128x384xf32>
    %109 = tpu.matmul %107, %108, %cst_33 {dimension_numbers = #tpu.dot_dimension_numbers<[1], [0], [0], [1], [0, 0, 1, 1], [], []>} : vector<128x96xbf16>, vector<96x384xbf16>, vector<128x384xf32> -> vector<128x384xf32>
    %110 = arith.addf %85, %109 : vector<128x384xf32>
    %c0_34 = arith.constant 0 : index
    %c0_35 = arith.constant 0 : index
    %111 = vector.load %arg4[%c0_34, %c0_35] : memref<1x384xf32, #tpu.memory_space<vmem>>, vector<1x384xf32>
    %112 = vector.broadcast %111 : vector<1x384xf32> to vector<128x384xf32>
    %113 = arith.addf %110, %112 : vector<128x384xf32>
    %c0_36 = arith.constant 0 : index
    %c0_37 = arith.constant 0 : index
    %c0_38 = arith.constant 0 : index
    %114 = vector.load %arg5[%c0_36, %c0_37, %c0_38] : memref<1x128x384xf32, #tpu.memory_space<vmem>>, vector<1x128x384xf32>
    %115 = vector.shape_cast %114 : vector<1x128x384xf32> to vector<128x384xf32>
    %116 = vector.shape_cast %113 : vector<128x384xf32> to vector<1x128x384xf32>
    tpu.vector_store %arg5[%c0_36, %c0_37, %c0_38], %116 {strides = array<i32>} : memref<1x128x384xf32, #tpu.memory_space<vmem>>, vector<1x128x384xf32>,
    return
  }
  func.func @transform_0(%arg0: i32) -> (i32, i32, i32) {
    %c0_i32 = arith.constant 0 : i32
    %c0_i32_0 = arith.constant 0 : i32
    %c0_i32_1 = arith.constant 0 : i32
    return %arg0, %c0_i32, %c0_i32_0 : i32, i32, i32
  }
  func.func @transform_1(%arg0: i32) -> (i32, i32) {
    %c0_i32 = arith.constant 0 : i32
    %c0_i32_0 = arith.constant 0 : i32
    %c0_i32_1 = arith.constant 0 : i32
    return %c0_i32, %c0_i32_0 : i32, i32
  }
  func.func @transform_2(%arg0: i32) -> (i32, i32) {
    %c0_i32 = arith.constant 0 : i32
    %c0_i32_0 = arith.constant 0 : i32
    %c0_i32_1 = arith.constant 0 : i32
    return %c0_i32, %c0_i32_0 : i32, i32
  }
  func.func @transform_3(%arg0: i32) -> (i32, i32) {
    %c0_i32 = arith.constant 0 : i32
    %c0_i32_0 = arith.constant 0 : i32
    %c0_i32_1 = arith.constant 0 : i32
    return %c0_i32, %c0_i32_0 : i32, i32
  }
  func.func @transform_4(%arg0: i32) -> (i32, i32, i32) {
    %c0_i32 = arith.constant 0 : i32
    %c0_i32_0 = arith.constant 0 : i32
    %c0_i32_1 = arith.constant 0 : i32
    return %arg0, %c0_i32, %c0_i32_0 : i32, i32, i32
  }
}

</mosaic_0001>

<llo_original>
// kernel: tpu_custom_call.1
$region0: #{tpu_custom_call.1}
  #allocation0 [shape = 'u32[]', space=smem, size = 0x4, offset = 0x4, fixed_abs, tag = 'smem constant byte address 0x4 - core index']
  #allocation1 [shape = 'u32[144,128]{1,0:T(1,128)}', space=vmem, size = 0x12000, scoped, tag = 'internal scratch']
  %s0 = inlined_call_operand.hbm [shape: bf16[2,128,384], index: 0, kind: input, shape index: {}]
  %s1 = inlined_call_operand.hbm [shape: bf16[384,1152], index: 1, kind: input, shape index: {}]
  %s2 = inlined_call_operand.hbm [shape: bf16[384,384], index: 2, kind: input, shape index: {}]
  %s3 = inlined_call_operand.vmem [shape: f32[1,384], index: 3, kind: input, shape index: {}]
  %s4 = inlined_call_operand.hbm [shape: f32[2,128,384], index: 4, kind: output, shape index: {}]
  %s5 = sld [smem:[#allocation0]]
  $region61: #{tpu_custom_call.1} parent=0
    _
  %s7 = ssub.s32 1, %s5
  %s8 = scalar_select 0, %s7, %s5
  $region1: #{tpu_custom_call.1} parent=0
    #allocation2 [shape = 'u8[196608]{0}', space=vmem, size = 0x30000, scoped, tag = 'input window, operand 0']
    #allocation3 [shape = 's32[2]{0}', space=sflag, size = 0x8, scoped, tag = 'scoped memory for tpu_custom_call.1']
    #allocation4 [shape = 's32[2]{0}', space=sflag, size = 0x8, scoped, tag = 'scoped memory for tpu_custom_call.1']
    #allocation5 [shape = 'u8[884736]{0}', space=vmem, size = 0xd8000, scoped, tag = 'input window, operand 1, single buffered']
    #allocation6 [shape = 's32[1]{0}', space=sflag, size = 0x4, scoped, tag = 'scoped memory for tpu_custom_call.1']
    #allocation7 [shape = 'u8[294912]{0}', space=vmem, size = 0x48000, scoped, tag = 'input window, operand 2, single buffered']
    #allocation8 [shape = 'u8[393216]{0}', space=vmem, size = 0x60000, scoped, tag = 'output window, operand 0']
    %9 = vsyncpa [#allocation3], 0
    %s10 = scalar_lea.sflag [#allocation3], 1
    %11 = vsyncpa %s10, 0
    %12 = vsyncpa [#allocation6], 0
    %13 = vsyncpa [#allocation4], 0
    %s14 = scalar_lea.sflag [#allocation4], 1
    %15 = vsyncpa %s14, 0
    loop: start=0, step=1, limit=4
    $region2: #{tpu_custom_call.1} parent=1 // loop_pre_header
      _
    $region3: #{tpu_custom_call.1} parent=1 // loop_header
      %s17 = sphi 0, %s21
      %p18 = scmp.ge.s32.totalorder %s17, 4
      %s27 = sphi 0, %s29
      %s30 = sphi 0, %s27
      %s31 = sphi 0, %s30
      %s47 = sphi 0, %s31
      %s51 = sphi 0, %s51
      %s53 = sphi 0, %s51
      %s54 = sphi 0, %s53
      %s68 = sphi 0, %s54
      %s72 = sphi 0, %s72
      %s74 = sphi 0, %s72
      %s75 = sphi 0, %s74
      %s89 = sphi 0, %s75
      %s93 = sphi 0, %s93
      %s95 = sphi 0, %s93
      %s96 = sphi 0, %s95
      %s110 = sphi 0, %s96
      %s116 = sphi 0, %s118
      %s119 = sphi 0, %s116
      %s120 = sphi 0, %s119
      %s136 = sphi 0, %s120
    $region4: #{tpu_custom_call.1} parent=1 // loop_header_branch
      %20 = sbr.rel (%p18) target = $region8
    $region5: #{tpu_custom_call.1} parent=1 // loop_body
      %s22 = ssub.s32 %s17, 1
      %s23 = ssub.s32 %s17, 2
      %s24 = sadd.s32 %s17, 1
      %s25 = ssub.s32 %s17, %s24
      %p26 = scmp.eq.s32.totalorder %s25, 0
      %s28 = sadd.s32 %s27, 1
      %s29 = scalar_select %p26, %s27, %s28
      %p32 = pneg %p26
      %p33 = scmp.eq.s32.totalorder %s17, 1
      %p34 = por %p32, %p33
      %p35 = scmp.ne.s32.totalorder %s27, %s30
      %p36 = scmp.eq.s32.totalorder %s17, 0
      %p37 = por %p35, %p36
      %p38 = scmp.ne.s32.totalorder %s27, %s30
      %p39 = scmp.eq.s32.totalorder %s22, 1
      %p40 = por %p38, %p39
      %p41 = scmp.ne.s32.totalorder %s30, %s31
      %p42 = scmp.eq.s32.totalorder %s22, 0
      %p43 = por %p41, %p42
      %p44 = scmp.ne.s32.totalorder %s30, %s31
      %p45 = scmp.eq.s32.totalorder %s23, 1
      %p46 = por %p44, %p45
      %p48 = scmp.ne.s32.totalorder %s31, %s47
      %p49 = scmp.eq.s32.totalorder %s23, 0
      %p50 = por %p48, %p49
      %s52 = sadd.s32 %s51, 1
      %p55 = scmp.eq.s32.totalorder %s17, 1
      %p56 = scmp.ne.s32.totalorder %s51, %s53
      %p57 = scmp.eq.s32.totalorder %s17, 0
      %p58 = por %p56, %p57
      %p59 = scmp.ne.s32.totalorder %s51, %s53
      %p60 = scmp.eq.s32.totalorder %s22, 1
      %p61 = por %p59, %p60
      %p62 = scmp.ne.s32.totalorder %s53, %s54
      %p63 = scmp.eq.s32.totalorder %s22, 0
      %p64 = por %p62, %p63
      %p65 = scmp.ne.s32.totalorder %s53, %s54
      %p66 = scmp.eq.s32.totalorder %s23, 1
      %p67 = por %p65, %p66
      %p69 = scmp.ne.s32.totalorder %s54, %s68
      %p70 = scmp.eq.s32.totalorder %s23, 0
      %p71 = por %p69, %p70
      %s73 = sadd.s32 %s72, 1
      %p76 = scmp.eq.s32.totalorder %s17, 1
      %p77 = scmp.ne.s32.totalorder %s72, %s74
      %p78 = scmp.eq.s32.totalorder %s17, 0
      %p79 = por %p77, %p78
      %p80 = scmp.ne.s32.totalorder %s72, %s74
      %p81 = scmp.eq.s32.totalorder %s22, 1
      %p82 = por %p80, %p81
      %p83 = scmp.ne.s32.totalorder %s74, %s75
      %p84 = scmp.eq.s32.totalorder %s22, 0
      %p85 = por %p83, %p84
      %p86 = scmp.ne.s32.totalorder %s74, %s75
      %p87 = scmp.eq.s32.totalorder %s23, 1
      %p88 = por %p86, %p87
      %p90 = scmp.ne.s32.totalorder %s75, %s89
      %p91 = scmp.eq.s32.totalorder %s23, 0
      %p92 = por %p90, %p91
      %s94 = sadd.s32 %s93, 1
      %p97 = scmp.eq.s32.totalorder %s17, 1
      %p98 = scmp.ne.s32.totalorder %s93, %s95
      %p99 = scmp.eq.s32.totalorder %s17, 0
      %p100 = por %p98, %p99
      %p101 = scmp.ne.s32.totalorder %s93, %s95
      %p102 = scmp.eq.s32.totalorder %s22, 1
      %p103 = por %p101, %p102
      %p104 = scmp.ne.s32.totalorder %s95, %s96
      %p105 = scmp.eq.s32.totalorder %s22, 0
      %p106 = por %p104, %p105
      %p107 = scmp.ne.s32.totalorder %s95, %s96
      %p108 = scmp.eq.s32.totalorder %s23, 1
      %p109 = por %p107, %p108
      %p111 = scmp.ne.s32.totalorder %s96, %s110
      %p112 = scmp.eq.s32.totalorder %s23, 0
      %p113 = por %p111, %p112
      %s114 = ssub.s32 %s17, %s24
      %p115 = scmp.eq.s32.totalorder %s114, 0
      %s117 = sadd.s32 %s116, 1
      %s118 = scalar_select %p115, %s116, %s117
      %p121 = pneg %p115
      %p122 = scmp.eq.s32.totalorder %s17, 1
      %p123 = por %p121, %p122
      %p124 = scmp.ne.s32.totalorder %s116, %s119
      %p125 = scmp.eq.s32.totalorder %s17, 0
      %p126 = por %p124, %p125
      %p127 = scmp.ne.s32.totalorder %s116, %s119
      %p128 = scmp.eq.s32.totalorder %s22, 1
      %p129 = por %p127, %p128
      %p130 = scmp.ne.s32.totalorder %s119, %s120
      %p131 = scmp.eq.s32.totalorder %s22, 0
      %p132 = por %p130, %p131
      %p133 = scmp.ne.s32.totalorder %s119, %s120
      %p134 = scmp.eq.s32.totalorder %s23, 1
      %p135 = por %p133, %p134
      %p137 = scmp.ne.s32.totalorder %s120, %s136
      %p138 = scmp.eq.s32.totalorder %s23, 0
      %p139 = por %p137, %p138
      %p140 = scmp.le.s32.totalorder 1, %s17
      %p141 = scmp.lt.s32.totalorder %s17, 3
      %p142 = pnand %p140, %p141
      %p143 = pneg %p142
      // Predicated region
      $region9: #{tpu_custom_call.1} parent=5 // pred_check
        _
      $region10: #{tpu_custom_call.1} parent=5 // pred_check_branch
        %145 = sbr.rel (%p142) target = $region12
      $region11: #{tpu_custom_call.1} parent=5 // pred_region
        %s146 = ssub.s32 %s17, 1
        // Predicated region
        $region13: #{tpu_custom_call.1} parent=11 // pred_check
          %p147 = pneg %p64
        $region14: #{tpu_custom_call.1} parent=11 // pred_check_branch
          %149 = sbr.rel (%p147) target = $region16
        $region15: #{tpu_custom_call.1} parent=11 // pred_region
          %s151 = ssub.s32 27648, 27648
          %152 = vsyncadd [#allocation6], %s151
          %s153 = sshll.u32 [#allocation5], 4
          %s154 = int_to_ptr.vmem [resolvable:$true] %s153
          %159 = dma.hbm_to_vmem [thread:$0]  %s1, 27648, %s154, [#allocation6], 576, 576, 36
        $region16: #{tpu_custom_call.1} parent=11 // pred_fallthru
          _
        // Predicated region
        $region17: #{tpu_custom_call.1} parent=11 // pred_check
          %p160 = pneg %p85
        $region18: #{tpu_custom_call.1} parent=11 // pred_check_branch
          %162 = sbr.rel (%p160) target = $region20
        $region19: #{tpu_custom_call.1} parent=11 // pred_region
          %s164 = ssub.s32 9216, 9216
          %165 = vsyncadd [#allocation6], %s164
          %s166 = sshll.u32 [#allocation7], 4
          %s167 = int_to_ptr.vmem [resolvable:$true] %s166
          %172 = dma.hbm_to_vmem [thread:$0]  %s2, 9216, %s167, [#allocation6], 192, 192, 12
        $region20: #{tpu_custom_call.1} parent=11 // pred_fallthru
          _
        // Predicated region
        $region21: #{tpu_custom_call.1} parent=11 // pred_check
          %p173 = pneg %p106
        $region22: #{tpu_custom_call.1} parent=11 // pred_check_branch
          %175 = sbr.rel (%p173) target = $region24
        $region23: #{tpu_custom_call.1} parent=11 // pred_region
          _
        $region24: #{tpu_custom_call.1} parent=11 // pred_fallthru
          _
      $region12: #{tpu_custom_call.1} parent=5 // pred_fallthru
        _
      %p176 = scmp.lt.s32.totalorder %s17, 2
      // Predicated region
      $region25: #{tpu_custom_call.1} parent=5 // pred_check
        %p177 = pneg %p176
      $region26: #{tpu_custom_call.1} parent=5 // pred_check_branch
        %179 = sbr.rel (%p177) target = $region28
      $region27: #{tpu_custom_call.1} parent=5 // pred_region
        // Predicated region
        $region29: #{tpu_custom_call.1} parent=27 // pred_check
          %p180 = pneg %p37
        $region30: #{tpu_custom_call.1} parent=27 // pred_check_branch
          %182 = sbr.rel (%p180) target = $region32
        $region31: #{tpu_custom_call.1} parent=27 // pred_region
          %s183 = sand.u32 %s27, 1
          %s184 = scalar_lea.sflag [#allocation3], %s183
          %s185 = sand.u32 %s27, 1
          %s186 = smul.addr %s185, 192
          %s187 = scalar_lea.vmem [#allocation2], %s186
          %s189 = ssub.s32 3072, 3072
          %190 = vsyncadd %s184, %s189
          %s191 = smul.addr %s17, 48
          %s192 = smul.addr %s191, 64
          %s193 = scalar_lea.hbm %s0, %s192
          %s194 = sshll.u32 %s187, 4
          %s195 = int_to_ptr.vmem [resolvable:$true] %s194
          %200 = dma.hbm_to_vmem [thread:$0]  %s193, 3072, %s195, %s184, 192, 192, 12
        $region32: #{tpu_custom_call.1} parent=27 // pred_fallthru
          _
      $region28: #{tpu_custom_call.1} parent=5 // pred_fallthru
        _
      %p201 = scmp.le.s32.totalorder 1, %s17
      %p202 = scmp.lt.s32.totalorder %s17, 3
      %p203 = pnand %p201, %p202
      %p204 = pneg %p203
      // Predicated region
      $region33: #{tpu_custom_call.1} parent=5 // pred_check
        _
      $region34: #{tpu_custom_call.1} parent=5 // pred_check_branch
        %206 = sbr.rel (%p203) target = $region36
      $region35: #{tpu_custom_call.1} parent=5 // pred_region
        %s207 = ssub.s32 %s17, 1
        %s208 = sand.u32 %s30, 1
        %s209 = scalar_lea.sflag [#allocation3], %s208
        %s210 = sand.u32 %s30, 1
        %s211 = smul.addr %s210, 192
        %s212 = scalar_lea.vmem [#allocation2], %s211
        // Predicated region
        $region37: #{tpu_custom_call.1} parent=35 // pred_check
          %p213 = pneg %p43
        $region38: #{tpu_custom_call.1} parent=35 // pred_check_branch
          %215 = sbr.rel (%p213) target = $region40
        $region39: #{tpu_custom_call.1} parent=35 // pred_region
          %216 = dma.done %s209, 3072
        $region40: #{tpu_custom_call.1} parent=35 // pred_fallthru
          _
        // Predicated region
        $region41: #{tpu_custom_call.1} parent=35 // pred_check
          %p217 = pneg %p64
        $region42: #{tpu_custom_call.1} parent=35 // pred_check_branch
          %219 = sbr.rel (%p217) target = $region44
        $region43: #{tpu_custom_call.1} parent=35 // pred_region
          %220 = dma.done [#allocation6], 27648
        $region44: #{tpu_custom_call.1} parent=35 // pred_fallthru
          _
        // Predicated region
        $region45: #{tpu_custom_call.1} parent=35 // pred_check
          %p221 = pneg %p85
        $region46: #{tpu_custom_call.1} parent=35 // pred_check_branch
          %223 = sbr.rel (%p221) target = $region48
        $region47: #{tpu_custom_call.1} parent=35 // pred_region
          %224 = dma.done [#allocation6], 9216
        $region48: #{tpu_custom_call.1} parent=35 // pred_fallthru
          _
        %s225 = sand.u32 %s30, 1
        %s226 = scalar_lea.sflag [#allocation3], %s225
        %s227 = sand.u32 %s30, 1
        %s228 = smul.addr %s227, 192
        %s229 = scalar_lea.vmem [#allocation2], %s228
        %p230 = pneg %p43
        %p231 = pneg %p40
        %p232 = pneg %p64
        %p233 = pneg %p61
        %p234 = pneg %p85
        %p235 = pneg %p82
        %p236 = pneg %p106
        %p237 = pneg %p103
        %p238 = pneg %p132
        %p239 = pneg %p129
        %s240 = sand.u32 %s119, 1
        %s241 = scalar_lea.sflag [#allocation4], %s240
        %s242 = sand.u32 %s119, 1
        %s243 = smul.addr %s242, 384
        %s244 = scalar_lea.vmem [#allocation8], %s243
        %v246 = vld [vmem:[%s212] sm:$0xff]
        %v247 = vld [vmem:[%s212 + $0x8] sm:$0xf]
        %v248 = vld [vmem:[%s212 + $0xc] sm:$0xff]
        %v249 = vld [vmem:[%s212 + $0x14] sm:$0xf]
        %v250 = vld [vmem:[%s212 + $0x18] sm:$0xff]
        %v251 = vld [vmem:[%s212 + $0x20] sm:$0xf]
        %v252 = vld [vmem:[%s212 + $0x24] sm:$0xff]
        %v253 = vld [vmem:[%s212 + $0x2c] sm:$0xf]
        %v254 = vld [vmem:[%s212 + $0x30] sm:$0xff]
        %v255 = vld [vmem:[%s212 + $0x38] sm:$0xf]
        %v256 = vld [vmem:[%s212 + $0x3c] sm:$0xff]
        %v257 = vld [vmem:[%s212 + $0x44] sm:$0xf]
        %v258 = vld [vmem:[%s212 + $0x48] sm:$0xff]
        %v259 = vld [vmem:[%s212 + $0x50] sm:$0xf]
        %v260 = vld [vmem:[%s212 + $0x54] sm:$0xff]
        %v261 = vld [vmem:[%s212 + $0x5c] sm:$0xf]
        %v262 = vld [vmem:[%s212 + $0x60] sm:$0xff]
        %v263 = vld [vmem:[%s212 + $0x68] sm:$0xf]
        %v264 = vld [vmem:[%s212 + $0x6c] sm:$0xff]
        %v265 = vld [vmem:[%s212 + $0x74] sm:$0xf]
        %v266 = vld [vmem:[%s212 + $0x78] sm:$0xff]
        %v267 = vld [vmem:[%s212 + $0x80] sm:$0xf]
        %v268 = vld [vmem:[%s212 + $0x84] sm:$0xff]
        %v269 = vld [vmem:[%s212 + $0x8c] sm:$0xf]
        %v270 = vld [vmem:[%s212 + $0x90] sm:$0xff]
        %v271 = vld [vmem:[%s212 + $0x98] sm:$0xf]
        %v272 = vld [vmem:[%s212 + $0x9c] sm:$0xff]
        %v273 = vld [vmem:[%s212 + $0xa4] sm:$0xf]
        %v274 = vld [vmem:[%s212 + $0xa8] sm:$0xff]
        %v275 = vld [vmem:[%s212 + $0xb0] sm:$0xf]
        %v276 = vld [vmem:[%s212 + $0xb4] sm:$0xff]
        %v277 = vld [vmem:[%s212 + $0xbc] sm:$0xf]
        %v278 = vld [vmem:[#allocation5] sm:$0xff]
        %v279 = vld [vmem:[#allocation5 + $0x8] sm:$0xff]
        %v280 = vld [vmem:[#allocation5 + $0x10] sm:$0xff]
        %v281 = vld [vmem:[#allocation5 + $0x18] sm:$0xff]
        %v282 = vld [vmem:[#allocation5 + $0x20] sm:$0xf]
        %v283 = vld [vmem:[#allocation5 + $0x24] sm:$0xff]
        %v284 = vld [vmem:[#allocation5 + $0x2c] sm:$0xff]
        %v285 = vld [vmem:[#allocation5 + $0x34] sm:$0xff]
        %v286 = vld [vmem:[#allocation5 + $0x3c] sm:$0xff]
        %v287 = vld [vmem:[#allocation5 + $0x44] sm:$0xf]
        %v288 = vld [vmem:[#allocation5 + $0x48] sm:$0xff]
        %v289 = vld [vmem:[#allocation5 + $0x50] sm:$0xff]
        %v290 = vld [vmem:[#allocation5 + $0x58] sm:$0xff]
        %v291 = vld [vmem:[#allocation5 + $0x60] sm:$0xff]
        %v292 = vld [vmem:[#allocation5 + $0x68] sm:$0xf]
        %v293 = vld [vmem:[#allocation5 + $0x6c] sm:$0xff]
        %v294 = vld [vmem:[#allocation5 + $0x74] sm:$0xff]
        %v295 = vld [vmem:[#allocation5 + $0x7c] sm:$0xff]
        %v296 = vld [vmem:[#allocation5 + $0x84] sm:$0xff]
        %v297 = vld [vmem:[#allocation5 + $0x8c] sm:$0xf]
        %v298 = vld [vmem:[#allocation5 + $0x90] sm:$0xff]
        %v299 = vld [vmem:[#allocation5 + $0x98] sm:$0xff]
        %v300 = vld [vmem:[#allocation5 + $0xa0] sm:$0xff]
        %v301 = vld [vmem:[#allocation5 + $0xa8] sm:$0xff]
        %v302 = vld [vmem:[#allocation5 + $0xb0] sm:$0xf]
        %v303 = vld [vmem:[#allocation5 + $0xb4] sm:$0xff]
        %v304 = vld [vmem:[#allocation5 + $0xbc] sm:$0xff]
        %v305 = vld [vmem:[#allocation5 + $0xc4] sm:$0xff]
        %v306 = vld [vmem:[#allocation5 + $0xcc] sm:$0xff]
        %v307 = vld [vmem:[#allocation5 + $0xd4] sm:$0xf]
        %v308 = vld [vmem:[#allocation5 + $0xd8] sm:$0xff]
        %v309 = vld [vmem:[#allocation5 + $0xe0] sm:$0xff]
        %v310 = vld [vmem:[#allocation5 + $0xe8] sm:$0xff]
        %v311 = vld [vmem:[#allocation5 + $0xf0] sm:$0xff]
        %v312 = vld [vmem:[#allocation5 + $0xf8] sm:$0xf]
        %v313 = vld [vmem:[#allocation5 + $0xfc] sm:$0xff]
        %v314 = vld [vmem:[#allocation5 + $0x104] sm:$0xff]
        %v315 = vld [vmem:[#allocation5 + $0x10c] sm:$0xff]
        %v316 = vld [vmem:[#allocation5 + $0x114] sm:$0xff]
        %v317 = vld [vmem:[#allocation5 + $0x11c] sm:$0xf]
        %v318 = vld [vmem:[#allocation5 + $0x120] sm:$0xff]
        %v319 = vld [vmem:[#allocation5 + $0x128] sm:$0xff]
        %v320 = vld [vmem:[#allocation5 + $0x130] sm:$0xff]
        %v321 = vld [vmem:[#allocation5 + $0x138] sm:$0xff]
        %v322 = vld [vmem:[#allocation5 + $0x140] sm:$0xf]
        %v323 = vld [vmem:[#allocation5 + $0x144] sm:$0xff]
        %v324 = vld [vmem:[#allocation5 + $0x14c] sm:$0xff]
        %v325 = vld [vmem:[#allocation5 + $0x154] sm:$0xff]
        %v326 = vld [vmem:[#allocation5 + $0x15c] sm:$0xff]
        %v327 = vld [vmem:[#allocation5 + $0x164] sm:$0xf]
        %v328 = vld [vmem:[#allocation5 + $0x168] sm:$0xff]
        %v329 = vld [vmem:[#allocation5 + $0x170] sm:$0xff]
        %v330 = vld [vmem:[#allocation5 + $0x178] sm:$0xff]
        %v331 = vld [vmem:[#allocation5 + $0x180] sm:$0xff]
        %v332 = vld [vmem:[#allocation5 + $0x188] sm:$0xf]
        %v333 = vld [vmem:[#allocation5 + $0x18c] sm:$0xff]
        %v334 = vld [vmem:[#allocation5 + $0x194] sm:$0xff]
        %v335 = vld [vmem:[#allocation5 + $0x19c] sm:$0xff]
        %v336 = vld [vmem:[#allocation5 + $0x1a4] sm:$0xff]
        %v337 = vld [vmem:[#allocation5 + $0x1ac] sm:$0xf]
        %v338 = vld [vmem:[#allocation5 + $0x1b0] sm:$0xff]
        %v339 = vld [vmem:[#allocation5 + $0x1b8] sm:$0xff]
        %v340 = vld [vmem:[#allocation5 + $0x1c0] sm:$0xff]
        %v341 = vld [vmem:[#allocation5 + $0x1c8] sm:$0xff]
        %v342 = vld [vmem:[#allocation5 + $0x1d0] sm:$0xf]
        %v343 = vld [vmem:[#allocation5 + $0x1d4] sm:$0xff]
        %v344 = vld [vmem:[#allocation5 + $0x1dc] sm:$0xff]
        %v345 = vld [vmem:[#allocation5 + $0x1e4] sm:$0xff]
        %v346 = vld [vmem:[#allocation5 + $0x1ec] sm:$0xff]
        %v347 = vld [vmem:[#allocation5 + $0x1f4] sm:$0xf]
        %v348 = vld [vmem:[#allocation5 + $0x1f8] sm:$0xff]
        %v349 = vld [vmem:[#allocation5 + $0x200] sm:$0xff]
        %v350 = vld [vmem:[#allocation5 + $0x208] sm:$0xff]
        %v351 = vld [vmem:[#allocation5 + $0x210] sm:$0xff]
        %v352 = vld [vmem:[#allocation5 + $0x218] sm:$0xf]
        %v353 = vld [vmem:[#allocation5 + $0x21c] sm:$0xff]
        %v354 = vld [vmem:[#allocation5 + $0x224] sm:$0xff]
        %v355 = vld [vmem:[#allocation5 + $0x22c] sm:$0xff]
        %v356 = vld [vmem:[#allocation5 + $0x234] sm:$0xff]
        %v357 = vld [vmem:[#allocation5 + $0x23c] sm:$0xf]
        %v358 = vld [vmem:[#allocation5 + $0x240] sm:$0xff]
        %v359 = vld [vmem:[#allocation5 + $0x248] sm:$0xff]
        %v360 = vld [vmem:[#allocation5 + $0x250] sm:$0xff]
        %v361 = vld [vmem:[#allocation5 + $0x258] sm:$0xff]
        %v362 = vld [vmem:[#allocation5 + $0x260] sm:$0xf]
        %v363 = vld [vmem:[#allocation5 + $0x264] sm:$0xff]
        %v364 = vld [vmem:[#allocation5 + $0x26c] sm:$0xff]
        %v365 = vld [vmem:[#allocation5 + $0x274] sm:$0xff]
        %v366 = vld [vmem:[#allocation5 + $0x27c] sm:$0xff]
        %v367 = vld [vmem:[#allocation5 + $0x284] sm:$0xf]
        %v368 = vld [vmem:[#allocation5 + $0x288] sm:$0xff]
        %v369 = vld [vmem:[#allocation5 + $0x290] sm:$0xff]
        %v370 = vld [vmem:[#allocation5 + $0x298] sm:$0xff]
        %v371 = vld [vmem:[#allocation5 + $0x2a0] sm:$0xff]
        %v372 = vld [vmem:[#allocation5 + $0x2a8] sm:$0xf]
        %v373 = vld [vmem:[#allocation5 + $0x2ac] sm:$0xff]
        %v374 = vld [vmem:[#allocation5 + $0x2b4] sm:$0xff]
        %v375 = vld [vmem:[#allocation5 + $0x2bc] sm:$0xff]
        %v376 = vld [vmem:[#allocation5 + $0x2c4] sm:$0xff]
        %v377 = vld [vmem:[#allocation5 + $0x2cc] sm:$0xf]
        %v378 = vld [vmem:[#allocation5 + $0x2d0] sm:$0xff]
        %v379 = vld [vmem:[#allocation5 + $0x2d8] sm:$0xff]
        %v380 = vld [vmem:[#allocation5 + $0x2e0] sm:$0xff]
        %v381 = vld [vmem:[#allocation5 + $0x2e8] sm:$0xff]
        %v382 = vld [vmem:[#allocation5 + $0x2f0] sm:$0xf]
        %v383 = vld [vmem:[#allocation5 + $0x2f4] sm:$0xff]
        %v384 = vld [vmem:[#allocation5 + $0x2fc] sm:$0xff]
        %v385 = vld [vmem:[#allocation5 + $0x304] sm:$0xff]
        %v386 = vld [vmem:[#allocation5 + $0x30c] sm:$0xff]
        %v387 = vld [vmem:[#allocation5 + $0x314] sm:$0xf]
        %v388 = vld [vmem:[#allocation5 + $0x318] sm:$0xff]
        %v389 = vld [vmem:[#allocation5 + $0x320] sm:$0xff]
        %v390 = vld [vmem:[#allocation5 + $0x328] sm:$0xff]
        %v391 = vld [vmem:[#allocation5 + $0x330] sm:$0xff]
        %v392 = vld [vmem:[#allocation5 + $0x338] sm:$0xf]
        %v393 = vld [vmem:[#allocation5 + $0x33c] sm:$0xff]
        %v394 = vld [vmem:[#allocation5 + $0x344] sm:$0xff]
        %v395 = vld [vmem:[#allocation5 + $0x34c] sm:$0xff]
        %v396 = vld [vmem:[#allocation5 + $0x354] sm:$0xff]
        %v397 = vld [vmem:[#allocation5 + $0x35c] sm:$0xf]
        %v398 = vld [vmem:[#allocation5 + $0x360] sm:$0xff]
        %v399 = vld [vmem:[#allocation5 + $0x368] sm:$0xff]
        %v400 = vld [vmem:[#allocation5 + $0x370] sm:$0xff]
        %v401 = vld [vmem:[#allocation5 + $0x378] sm:$0xff]
        %v402 = vld [vmem:[#allocation5 + $0x380] sm:$0xf]
        %v403 = vld [vmem:[#allocation5 + $0x384] sm:$0xff]
        %v404 = vld [vmem:[#allocation5 + $0x38c] sm:$0xff]
        %v405 = vld [vmem:[#allocation5 + $0x394] sm:$0xff]
        %v406 = vld [vmem:[#allocation5 + $0x39c] sm:$0xff]
        %v407 = vld [vmem:[#allocation5 + $0x3a4] sm:$0xf]
        %v408 = vld [vmem:[#allocation5 + $0x3a8] sm:$0xff]
        %v409 = vld [vmem:[#allocation5 + $0x3b0] sm:$0xff]
        %v410 = vld [vmem:[#allocation5 + $0x3b8] sm:$0xff]
        %v411 = vld [vmem:[#allocation5 + $0x3c0] sm:$0xff]
        %v412 = vld [vmem:[#allocation5 + $0x3c8] sm:$0xf]
        %v413 = vld [vmem:[#allocation5 + $0x3cc] sm:$0xff]
        %v414 = vld [vmem:[#allocation5 + $0x3d4] sm:$0xff]
        %v415 = vld [vmem:[#allocation5 + $0x3dc] sm:$0xff]
        %v416 = vld [vmem:[#allocation5 + $0x3e4] sm:$0xff]
        %v417 = vld [vmem:[#allocation5 + $0x3ec] sm:$0xf]
        %v418 = vld [vmem:[#allocation5 + $0x3f0] sm:$0xff]
        %v419 = vld [vmem:[#allocation5 + $0x3f8] sm:$0xff]
        %v420 = vld [vmem:[#allocation5 + $0x400] sm:$0xff]
        %v421 = vld [vmem:[#allocation5 + $0x408] sm:$0xff]
        %v422 = vld [vmem:[#allocation5 + $0x410] sm:$0xf]
        %v423 = vld [vmem:[#allocation5 + $0x414] sm:$0xff]
        %v424 = vld [vmem:[#allocation5 + $0x41c] sm:$0xff]
        %v425 = vld [vmem:[#allocation5 + $0x424] sm:$0xff]
        %v426 = vld [vmem:[#allocation5 + $0x42c] sm:$0xff]
        %v427 = vld [vmem:[#allocation5 + $0x434] sm:$0xf]
        %v428 = vld [vmem:[#allocation5 + $0x438] sm:$0xff]
        %v429 = vld [vmem:[#allocation5 + $0x440] sm:$0xff]
        %v430 = vld [vmem:[#allocation5 + $0x448] sm:$0xff]
        %v431 = vld [vmem:[#allocation5 + $0x450] sm:$0xff]
        %v432 = vld [vmem:[#allocation5 + $0x458] sm:$0xf]
        %v433 = vld [vmem:[#allocation5 + $0x45c] sm:$0xff]
        %v434 = vld [vmem:[#allocation5 + $0x464] sm:$0xff]
        %v435 = vld [vmem:[#allocation5 + $0x46c] sm:$0xff]
        %v436 = vld [vmem:[#allocation5 + $0x474] sm:$0xff]
        %v437 = vld [vmem:[#allocation5 + $0x47c] sm:$0xf]
        %v438 = vld [vmem:[#allocation5 + $0x480] sm:$0xff]
        %v439 = vld [vmem:[#allocation5 + $0x488] sm:$0xff]
        %v440 = vld [vmem:[#allocation5 + $0x490] sm:$0xff]
        %v441 = vld [vmem:[#allocation5 + $0x498] sm:$0xff]
        %v442 = vld [vmem:[#allocation5 + $0x4a0] sm:$0xf]
        %v443 = vld [vmem:[#allocation5 + $0x4a4] sm:$0xff]
        %v444 = vld [vmem:[#allocation5 + $0x4ac] sm:$0xff]
        %v445 = vld [vmem:[#allocation5 + $0x4b4] sm:$0xff]
        %v446 = vld [vmem:[#allocation5 + $0x4bc] sm:$0xff]
        %v447 = vld [vmem:[#allocation5 + $0x4c4] sm:$0xf]
        %v448 = vld [vmem:[#allocation5 + $0x4c8] sm:$0xff]
        %v449 = vld [vmem:[#allocation5 + $0x4d0] sm:$0xff]
        %v450 = vld [vmem:[#allocation5 + $0x4d8] sm:$0xff]
        %v451 = vld [vmem:[#allocation5 + $0x4e0] sm:$0xff]
        %v452 = vld [vmem:[#allocation5 + $0x4e8] sm:$0xf]
        %v453 = vld [vmem:[#allocation5 + $0x4ec] sm:$0xff]
        %v454 = vld [vmem:[#allocation5 + $0x4f4] sm:$0xff]
        %v455 = vld [vmem:[#allocation5 + $0x4fc] sm:$0xff]
        %v456 = vld [vmem:[#allocation5 + $0x504] sm:$0xff]
        %v457 = vld [vmem:[#allocation5 + $0x50c] sm:$0xf]
        %v458 = vld [vmem:[#allocation5 + $0x510] sm:$0xff]
        %v459 = vld [vmem:[#allocation5 + $0x518] sm:$0xff]
        %v460 = vld [vmem:[#allocation5 + $0x520] sm:$0xff]
        %v461 = vld [vmem:[#allocation5 + $0x528] sm:$0xff]
        %v462 = vld [vmem:[#allocation5 + $0x530] sm:$0xf]
        %v463 = vld [vmem:[#allocation5 + $0x534] sm:$0xff]
        %v464 = vld [vmem:[#allocation5 + $0x53c] sm:$0xff]
        %v465 = vld [vmem:[#allocation5 + $0x544] sm:$0xff]
        %v466 = vld [vmem:[#allocation5 + $0x54c] sm:$0xff]
        %v467 = vld [vmem:[#allocation5 + $0x554] sm:$0xf]
        %v468 = vld [vmem:[#allocation5 + $0x558] sm:$0xff]
        %v469 = vld [vmem:[#allocation5 + $0x560] sm:$0xff]
        %v470 = vld [vmem:[#allocation5 + $0x568] sm:$0xff]
        %v471 = vld [vmem:[#allocation5 + $0x570] sm:$0xff]
        %v472 = vld [vmem:[#allocation5 + $0x578] sm:$0xf]
        %v473 = vld [vmem:[#allocation5 + $0x57c] sm:$0xff]
        %v474 = vld [vmem:[#allocation5 + $0x584] sm:$0xff]
        %v475 = vld [vmem:[#allocation5 + $0x58c] sm:$0xff]
        %v476 = vld [vmem:[#allocation5 + $0x594] sm:$0xff]
        %v477 = vld [vmem:[#allocation5 + $0x59c] sm:$0xf]
        %v478 = vld [vmem:[#allocation5 + $0x5a0] sm:$0xff]
        %v479 = vld [vmem:[#allocation5 + $0x5a8] sm:$0xff]
        %v480 = vld [vmem:[#allocation5 + $0x5b0] sm:$0xff]
        %v481 = vld [vmem:[#allocation5 + $0x5b8] sm:$0xff]
        %v482 = vld [vmem:[#allocation5 + $0x5c0] sm:$0xf]
        %v483 = vld [vmem:[#allocation5 + $0x5c4] sm:$0xff]
        %v484 = vld [vmem:[#allocation5 + $0x5cc] sm:$0xff]
        %v485 = vld [vmem:[#allocation5 + $0x5d4] sm:$0xff]
        %v486 = vld [vmem:[#allocation5 + $0x5dc] sm:$0xff]
        %v487 = vld [vmem:[#allocation5 + $0x5e4] sm:$0xf]
        %v488 = vld [vmem:[#allocation5 + $0x5e8] sm:$0xff]
        %v489 = vld [vmem:[#allocation5 + $0x5f0] sm:$0xff]
        %v490 = vld [vmem:[#allocation5 + $0x5f8] sm:$0xff]
        %v491 = vld [vmem:[#allocation5 + $0x600] sm:$0xff]
        %v492 = vld [vmem:[#allocation5 + $0x608] sm:$0xf]
        %v493 = vld [vmem:[#allocation5 + $0x60c] sm:$0xff]
        %v494 = vld [vmem:[#allocation5 + $0x614] sm:$0xff]
        %v495 = vld [vmem:[#allocation5 + $0x61c] sm:$0xff]
        %v496 = vld [vmem:[#allocation5 + $0x624] sm:$0xff]
        %v497 = vld [vmem:[#allocation5 + $0x62c] sm:$0xf]
        %v498 = vld [vmem:[#allocation5 + $0x630] sm:$0xff]
        %v499 = vld [vmem:[#allocation5 + $0x638] sm:$0xff]
        %v500 = vld [vmem:[#allocation5 + $0x640] sm:$0xff]
        %v501 = vld [vmem:[#allocation5 + $0x648] sm:$0xff]
        %v502 = vld [vmem:[#allocation5 + $0x650] sm:$0xf]
        %v503 = vld [vmem:[#allocation5 + $0x654] sm:$0xff]
        %v504 = vld [vmem:[#allocation5 + $0x65c] sm:$0xff]
        %v505 = vld [vmem:[#allocation5 + $0x664] sm:$0xff]
        %v506 = vld [vmem:[#allocation5 + $0x66c] sm:$0xff]
        %v507 = vld [vmem:[#allocation5 + $0x674] sm:$0xf]
        %v508 = vld [vmem:[#allocation5 + $0x678] sm:$0xff]
        %v509 = vld [vmem:[#allocation5 + $0x680] sm:$0xff]
        %v510 = vld [vmem:[#allocation5 + $0x688] sm:$0xff]
        %v511 = vld [vmem:[#allocation5 + $0x690] sm:$0xff]
        %v512 = vld [vmem:[#allocation5 + $0x698] sm:$0xf]
        %v513 = vld [vmem:[#allocation5 + $0x69c] sm:$0xff]
        %v514 = vld [vmem:[#allocation5 + $0x6a4] sm:$0xff]
        %v515 = vld [vmem:[#allocation5 + $0x6ac] sm:$0xff]
        %v516 = vld [vmem:[#allocation5 + $0x6b4] sm:$0xff]
        %v517 = vld [vmem:[#allocation5 + $0x6bc] sm:$0xf]
        %v550 = vunpack.c.l.b16 %v246
        %v551 = vunpack.c.h.b16 %v246
        %v552 = vunpack.c.l.b16 %v247
        %v553 = vunpack.c.l.b16 %v248
        %v554 = vunpack.c.h.b16 %v248
        %v555 = vunpack.c.l.b16 %v249
        %v556 = vunpack.c.l.b16 %v250
        %v557 = vunpack.c.h.b16 %v250
        %v558 = vunpack.c.l.b16 %v251
        %v559 = vunpack.c.l.b16 %v252
        %v560 = vunpack.c.h.b16 %v252
        %v561 = vunpack.c.l.b16 %v253
        %v562 = vunpack.c.l.b16 %v254
        %v563 = vunpack.c.h.b16 %v254
        %v564 = vunpack.c.l.b16 %v255
        %v565 = vunpack.c.l.b16 %v256
        %v566 = vunpack.c.h.b16 %v256
        %v567 = vunpack.c.l.b16 %v257
        %v568 = vunpack.c.l.b16 %v258
        %v569 = vunpack.c.h.b16 %v258
        %v570 = vunpack.c.l.b16 %v259
        %v571 = vunpack.c.l.b16 %v260
        %v572 = vunpack.c.h.b16 %v260
        %v573 = vunpack.c.l.b16 %v261
        %v574 = vunpack.c.l.b16 %v262
        %v575 = vunpack.c.h.b16 %v262
        %v576 = vunpack.c.l.b16 %v263
        %v577 = vunpack.c.l.b16 %v264
        %v578 = vunpack.c.h.b16 %v264
        %v579 = vunpack.c.l.b16 %v265
        %v580 = vunpack.c.l.b16 %v266
        %v581 = vunpack.c.h.b16 %v266
        %v582 = vunpack.c.l.b16 %v267
        %v583 = vunpack.c.l.b16 %v268
        %v584 = vunpack.c.h.b16 %v268
        %v585 = vunpack.c.l.b16 %v269
        %v586 = vunpack.c.l.b16 %v270
        %v587 = vunpack.c.h.b16 %v270
        %v588 = vunpack.c.l.b16 %v271
        %v589 = vunpack.c.l.b16 %v272
        %v590 = vunpack.c.h.b16 %v272
        %v591 = vunpack.c.l.b16 %v273
        %v592 = vunpack.c.l.b16 %v274
        %v593 = vunpack.c.h.b16 %v274
        %v594 = vunpack.c.l.b16 %v275
        %v595 = vunpack.c.l.b16 %v276
        %v596 = vunpack.c.h.b16 %v276
        %v597 = vunpack.c.l.b16 %v277
        %v598 = vpack.c.b16 %v553, %v550
        %v599 = vpack.c.b16 %v554, %v551
        %v600 = vpack.c.b16 %v555, %v552
        %v601 = vpack.c.b16 %v559, %v556
        %v602 = vpack.c.b16 %v560, %v557
        %v603 = vpack.c.b16 %v561, %v558
        %v604 = vpack.c.b16 %v565, %v562
        %v605 = vpack.c.b16 %v566, %v563
        %v606 = vpack.c.b16 %v567, %v564
        %v607 = vpack.c.b16 %v571, %v568
        %v608 = vpack.c.b16 %v572, %v569
        %v609 = vpack.c.b16 %v573, %v570
        %v610 = vpack.c.b16 %v577, %v574
        %v611 = vpack.c.b16 %v578, %v575
        %v612 = vpack.c.b16 %v579, %v576
        %v613 = vpack.c.b16 %v583, %v580
        %v614 = vpack.c.b16 %v584, %v581
        %v615 = vpack.c.b16 %v585, %v582
        %v616 = vpack.c.b16 %v589, %v586
        %v617 = vpack.c.b16 %v590, %v587
        %v618 = vpack.c.b16 %v591, %v588
        %v619 = vpack.c.b16 %v595, %v592
        %v620 = vpack.c.b16 %v596, %v593
        %v621 = vpack.c.b16 %v597, %v594
        %v886 = vunpack.c.l.b16 %v278
        %v887 = vunpack.c.h.b16 %v278
        %v888 = vunpack.c.l.b16 %v279
        %v889 = vunpack.c.h.b16 %v279
        %v890 = vunpack.c.l.b16 %v280
        %v891 = vunpack.c.h.b16 %v280
        %v892 = vunpack.c.l.b16 %v281
        %v893 = vunpack.c.h.b16 %v281
        %v894 = vunpack.c.l.b16 %v282
        %v895 = vunpack.c.l.b16 %v283
        %v896 = vunpack.c.h.b16 %v283
        %v897 = vunpack.c.l.b16 %v284
        %v898 = vunpack.c.h.b16 %v284
        %v899 = vunpack.c.l.b16 %v285
        %v900 = vunpack.c.h.b16 %v285
        %v901 = vunpack.c.l.b16 %v286
        %v902 = vunpack.c.h.b16 %v286
        %v903 = vunpack.c.l.b16 %v287
        %v904 = vunpack.c.l.b16 %v288
        %v905 = vunpack.c.h.b16 %v288
        %v906 = vunpack.c.l.b16 %v289
        %v907 = vunpack.c.h.b16 %v289
        %v908 = vunpack.c.l.b16 %v290
        %v909 = vunpack.c.h.b16 %v290
        %v910 = vunpack.c.l.b16 %v291
        %v911 = vunpack.c.h.b16 %v291
        %v912 = vunpack.c.l.b16 %v292
        %v913 = vunpack.c.l.b16 %v293
        %v914 = vunpack.c.h.b16 %v293
        %v915 = vunpack.c.l.b16 %v294
        %v916 = vunpack.c.h.b16 %v294
        %v917 = vunpack.c.l.b16 %v295
        %v918 = vunpack.c.h.b16 %v295
        %v919 = vunpack.c.l.b16 %v296
        %v920 = vunpack.c.h.b16 %v296
        %v921 = vunpack.c.l.b16 %v297
        %v922 = vunpack.c.l.b16 %v298
        %v923 = vunpack.c.h.b16 %v298
        %v924 = vunpack.c.l.b16 %v299
        %v925 = vunpack.c.h.b16 %v299
        %v926 = vunpack.c.l.b16 %v300
        %v927 = vunpack.c.h.b16 %v300
        %v928 = vunpack.c.l.b16 %v301
        %v929 = vunpack.c.h.b16 %v301
        %v930 = vunpack.c.l.b16 %v302
        %v931 = vunpack.c.l.b16 %v303
        %v932 = vunpack.c.h.b16 %v303
        %v933 = vunpack.c.l.b16 %v304
        %v934 = vunpack.c.h.b16 %v304
        %v935 = vunpack.c.l.b16 %v305
        %v936 = vunpack.c.h.b16 %v305
        %v937 = vunpack.c.l.b16 %v306
        %v938 = vunpack.c.h.b16 %v306
        %v939 = vunpack.c.l.b16 %v307
        %v940 = vunpack.c.l.b16 %v308
        %v941 = vunpack.c.h.b16 %v308
        %v942 = vunpack.c.l.b16 %v309
        %v943 = vunpack.c.h.b16 %v309
        %v944 = vunpack.c.l.b16 %v310
        %v945 = vunpack.c.h.b16 %v310
        %v946 = vunpack.c.l.b16 %v311
        %v947 = vunpack.c.h.b16 %v311
        %v948 = vunpack.c.l.b16 %v312
        %v949 = vunpack.c.l.b16 %v313
        %v950 = vunpack.c.h.b16 %v313
        %v951 = vunpack.c.l.b16 %v314
        %v952 = vunpack.c.h.b16 %v314
        %v953 = vunpack.c.l.b16 %v315
        %v954 = vunpack.c.h.b16 %v315
        %v955 = vunpack.c.l.b16 %v316
        %v956 = vunpack.c.h.b16 %v316
        %v957 = vunpack.c.l.b16 %v317
        %v958 = vunpack.c.l.b16 %v318
        %v959 = vunpack.c.h.b16 %v318
        %v960 = vunpack.c.l.b16 %v319
        %v961 = vunpack.c.h.b16 %v319
        %v962 = vunpack.c.l.b16 %v320
        %v963 = vunpack.c.h.b16 %v320
        %v964 = vunpack.c.l.b16 %v321
        %v965 = vunpack.c.h.b16 %v321
        %v966 = vunpack.c.l.b16 %v322
        %v967 = vunpack.c.l.b16 %v323
        %v968 = vunpack.c.h.b16 %v323
        %v969 = vunpack.c.l.b16 %v324
        %v970 = vunpack.c.h.b16 %v324
        %v971 = vunpack.c.l.b16 %v325
        %v972 = vunpack.c.h.b16 %v325
        %v973 = vunpack.c.l.b16 %v326
        %v974 = vunpack.c.h.b16 %v326
        %v975 = vunpack.c.l.b16 %v327
        %v976 = vunpack.c.l.b16 %v328
        %v977 = vunpack.c.h.b16 %v328
        %v978 = vunpack.c.l.b16 %v329
        %v979 = vunpack.c.h.b16 %v329
        %v980 = vunpack.c.l.b16 %v330
        %v981 = vunpack.c.h.b16 %v330
        %v982 = vunpack.c.l.b16 %v331
        %v983 = vunpack.c.h.b16 %v331
        %v984 = vunpack.c.l.b16 %v332
        %v985 = vunpack.c.l.b16 %v333
        %v986 = vunpack.c.h.b16 %v333
        %v987 = vunpack.c.l.b16 %v334
        %v988 = vunpack.c.h.b16 %v334
        %v989 = vunpack.c.l.b16 %v335
        %v990 = vunpack.c.h.b16 %v335
        %v991 = vunpack.c.l.b16 %v336
        %v992 = vunpack.c.h.b16 %v336
        %v993 = vunpack.c.l.b16 %v337
        %v994 = vunpack.c.l.b16 %v338
        %v995 = vunpack.c.h.b16 %v338
        %v996 = vunpack.c.l.b16 %v339
        %v997 = vunpack.c.h.b16 %v339
        %v998 = vunpack.c.l.b16 %v340
        %v999 = vunpack.c.h.b16 %v340
        %v1000 = vunpack.c.l.b16 %v341
        %v1001 = vunpack.c.h.b16 %v341
        %v1002 = vunpack.c.l.b16 %v342
        %v1003 = vunpack.c.l.b16 %v343
        %v1004 = vunpack.c.h.b16 %v343
        %v1005 = vunpack.c.l.b16 %v344
        %v1006 = vunpack.c.h.b16 %v344
        %v1007 = vunpack.c.l.b16 %v345
        %v1008 = vunpack.c.h.b16 %v345
        %v1009 = vunpack.c.l.b16 %v346
        %v1010 = vunpack.c.h.b16 %v346
        %v1011 = vunpack.c.l.b16 %v347
        %v1012 = vunpack.c.l.b16 %v348
        %v1013 = vunpack.c.h.b16 %v348
        %v1014 = vunpack.c.l.b16 %v349
        %v1015 = vunpack.c.h.b16 %v349
        %v1016 = vunpack.c.l.b16 %v350
        %v1017 = vunpack.c.h.b16 %v350
        %v1018 = vunpack.c.l.b16 %v351
        %v1019 = vunpack.c.h.b16 %v351
        %v1020 = vunpack.c.l.b16 %v352
        %v1021 = vunpack.c.l.b16 %v353
        %v1022 = vunpack.c.h.b16 %v353
        %v1023 = vunpack.c.l.b16 %v354
        %v1024 = vunpack.c.h.b16 %v354
        %v1025 = vunpack.c.l.b16 %v355
        %v1026 = vunpack.c.h.b16 %v355
        %v1027 = vunpack.c.l.b16 %v356
        %v1028 = vunpack.c.h.b16 %v356
        %v1029 = vunpack.c.l.b16 %v357
        %v1030 = vunpack.c.l.b16 %v358
        %v1031 = vunpack.c.h.b16 %v358
        %v1032 = vunpack.c.l.b16 %v359
        %v1033 = vunpack.c.h.b16 %v359
        %v1034 = vunpack.c.l.b16 %v360
        %v1035 = vunpack.c.h.b16 %v360
        %v1036 = vunpack.c.l.b16 %v361
        %v1037 = vunpack.c.h.b16 %v361
        %v1038 = vunpack.c.l.b16 %v362
        %v1039 = vunpack.c.l.b16 %v363
        %v1040 = vunpack.c.h.b16 %v363
        %v1041 = vunpack.c.l.b16 %v364
        %v1042 = vunpack.c.h.b16 %v364
        %v1043 = vunpack.c.l.b16 %v365
        %v1044 = vunpack.c.h.b16 %v365
        %v1045 = vunpack.c.l.b16 %v366
        %v1046 = vunpack.c.h.b16 %v366
        %v1047 = vunpack.c.l.b16 %v367
        %v1048 = vunpack.c.l.b16 %v368
        %v1049 = vunpack.c.h.b16 %v368
        %v1050 = vunpack.c.l.b16 %v369
        %v1051 = vunpack.c.h.b16 %v369
        %v1052 = vunpack.c.l.b16 %v370
        %v1053 = vunpack.c.h.b16 %v370
        %v1054 = vunpack.c.l.b16 %v371
        %v1055 = vunpack.c.h.b16 %v371
        %v1056 = vunpack.c.l.b16 %v372
        %v1057 = vunpack.c.l.b16 %v373
        %v1058 = vunpack.c.h.b16 %v373
        %v1059 = vunpack.c.l.b16 %v374
        %v1060 = vunpack.c.h.b16 %v374
        %v1061 = vunpack.c.l.b16 %v375
        %v1062 = vunpack.c.h.b16 %v375
        %v1063 = vunpack.c.l.b16 %v376
        %v1064 = vunpack.c.h.b16 %v376
        %v1065 = vunpack.c.l.b16 %v377
        %v1066 = vunpack.c.l.b16 %v378
        %v1067 = vunpack.c.h.b16 %v378
        %v1068 = vunpack.c.l.b16 %v379
        %v1069 = vunpack.c.h.b16 %v379
        %v1070 = vunpack.c.l.b16 %v380
        %v1071 = vunpack.c.h.b16 %v380
        %v1072 = vunpack.c.l.b16 %v381
        %v1073 = vunpack.c.h.b16 %v381
        %v1074 = vunpack.c.l.b16 %v382
        %v1075 = vunpack.c.l.b16 %v383
        %v1076 = vunpack.c.h.b16 %v383
        %v1077 = vunpack.c.l.b16 %v384
        %v1078 = vunpack.c.h.b16 %v384
        %v1079 = vunpack.c.l.b16 %v385
        %v1080 = vunpack.c.h.b16 %v385
        %v1081 = vunpack.c.l.b16 %v386
        %v1082 = vunpack.c.h.b16 %v386
        %v1083 = vunpack.c.l.b16 %v387
        %v1084 = vunpack.c.l.b16 %v388
        %v1085 = vunpack.c.h.b16 %v388
        %v1086 = vunpack.c.l.b16 %v389
        %v1087 = vunpack.c.h.b16 %v389
        %v1088 = vunpack.c.l.b16 %v390
        %v1089 = vunpack.c.h.b16 %v390
        %v1090 = vunpack.c.l.b16 %v391
        %v1091 = vunpack.c.h.b16 %v391
        %v1092 = vunpack.c.l.b16 %v392
        %v1093 = vunpack.c.l.b16 %v393
        %v1094 = vunpack.c.h.b16 %v393
        %v1095 = vunpack.c.l.b16 %v394
        %v1096 = vunpack.c.h.b16 %v394
        %v1097 = vunpack.c.l.b16 %v395
        %v1098 = vunpack.c.h.b16 %v395
        %v1099 = vunpack.c.l.b16 %v396
        %v1100 = vunpack.c.h.b16 %v396
        %v1101 = vunpack.c.l.b16 %v397
        %v1102 = vunpack.c.l.b16 %v398
        %v1103 = vunpack.c.h.b16 %v398
        %v1104 = vunpack.c.l.b16 %v399
        %v1105 = vunpack.c.h.b16 %v399
        %v1106 = vunpack.c.l.b16 %v400
        %v1107 = vunpack.c.h.b16 %v400
        %v1108 = vunpack.c.l.b16 %v401
        %v1109 = vunpack.c.h.b16 %v401
        %v1110 = vunpack.c.l.b16 %v402
        %v1111 = vunpack.c.l.b16 %v403
        %v1112 = vunpack.c.h.b16 %v403
        %v1113 = vunpack.c.l.b16 %v404
        %v1114 = vunpack.c.h.b16 %v404
        %v1115 = vunpack.c.l.b16 %v405
        %v1116 = vunpack.c.h.b16 %v405
        %v1117 = vunpack.c.l.b16 %v406
        %v1118 = vunpack.c.h.b16 %v406
        %v1119 = vunpack.c.l.b16 %v407
        %v1120 = vunpack.c.l.b16 %v408
        %v1121 = vunpack.c.h.b16 %v408
        %v1122 = vunpack.c.l.b16 %v409
        %v1123 = vunpack.c.h.b16 %v409
        %v1124 = vunpack.c.l.b16 %v410
        %v1125 = vunpack.c.h.b16 %v410
        %v1126 = vunpack.c.l.b16 %v411
        %v1127 = vunpack.c.h.b16 %v411
        %v1128 = vunpack.c.l.b16 %v412
        %v1129 = vunpack.c.l.b16 %v413
        %v1130 = vunpack.c.h.b16 %v413
        %v1131 = vunpack.c.l.b16 %v414
        %v1132 = vunpack.c.h.b16 %v414
        %v1133 = vunpack.c.l.b16 %v415
        %v1134 = vunpack.c.h.b16 %v415
        %v1135 = vunpack.c.l.b16 %v416
        %v1136 = vunpack.c.h.b16 %v416
        %v1137 = vunpack.c.l.b16 %v417
        %v1138 = vunpack.c.l.b16 %v418
        %v1139 = vunpack.c.h.b16 %v418
        %v1140 = vunpack.c.l.b16 %v419
        %v1141 = vunpack.c.h.b16 %v419
        %v1142 = vunpack.c.l.b16 %v420
        %v1143 = vunpack.c.h.b16 %v420
        %v1144 = vunpack.c.l.b16 %v421
        %v1145 = vunpack.c.h.b16 %v421
        %v1146 = vunpack.c.l.b16 %v422
        %v1147 = vunpack.c.l.b16 %v423
        %v1148 = vunpack.c.h.b16 %v423
        %v1149 = vunpack.c.l.b16 %v424
        %v1150 = vunpack.c.h.b16 %v424
        %v1151 = vunpack.c.l.b16 %v425
        %v1152 = vunpack.c.h.b16 %v425
        %v1153 = vunpack.c.l.b16 %v426
        %v1154 = vunpack.c.h.b16 %v426
        %v1155 = vunpack.c.l.b16 %v427
        %v1156 = vunpack.c.l.b16 %v428
        %v1157 = vunpack.c.h.b16 %v428
        %v1158 = vunpack.c.l.b16 %v429
        %v1159 = vunpack.c.h.b16 %v429
        %v1160 = vunpack.c.l.b16 %v430
        %v1161 = vunpack.c.h.b16 %v430
        %v1162 = vunpack.c.l.b16 %v431
        %v1163 = vunpack.c.h.b16 %v431
        %v1164 = vunpack.c.l.b16 %v432
        %v1165 = vunpack.c.l.b16 %v433
        %v1166 = vunpack.c.h.b16 %v433
        %v1167 = vunpack.c.l.b16 %v434
        %v1168 = vunpack.c.h.b16 %v434
        %v1169 = vunpack.c.l.b16 %v435
        %v1170 = vunpack.c.h.b16 %v435
        %v1171 = vunpack.c.l.b16 %v436
        %v1172 = vunpack.c.h.b16 %v436
        %v1173 = vunpack.c.l.b16 %v437
        %v1174 = vunpack.c.l.b16 %v438
        %v1175 = vunpack.c.h.b16 %v438
        %v1176 = vunpack.c.l.b16 %v439
        %v1177 = vunpack.c.h.b16 %v439
        %v1178 = vunpack.c.l.b16 %v440
        %v1179 = vunpack.c.h.b16 %v440
        %v1180 = vunpack.c.l.b16 %v441
        %v1181 = vunpack.c.h.b16 %v441
        %v1182 = vunpack.c.l.b16 %v442
        %v1183 = vunpack.c.l.b16 %v443
        %v1184 = vunpack.c.h.b16 %v443
        %v1185 = vunpack.c.l.b16 %v444
        %v1186 = vunpack.c.h.b16 %v444
        %v1187 = vunpack.c.l.b16 %v445
        %v1188 = vunpack.c.h.b16 %v445
        %v1189 = vunpack.c.l.b16 %v446
        %v1190 = vunpack.c.h.b16 %v446
        %v1191 = vunpack.c.l.b16 %v447
        %v1192 = vunpack.c.l.b16 %v448
        %v1193 = vunpack.c.h.b16 %v448
        %v1194 = vunpack.c.l.b16 %v449
        %v1195 = vunpack.c.h.b16 %v449
        %v1196 = vunpack.c.l.b16 %v450
        %v1197 = vunpack.c.h.b16 %v450
        %v1198 = vunpack.c.l.b16 %v451
        %v1199 = vunpack.c.h.b16 %v451
        %v1200 = vunpack.c.l.b16 %v452
        %v1201 = vunpack.c.l.b16 %v453
        %v1202 = vunpack.c.h.b16 %v453
        %v1203 = vunpack.c.l.b16 %v454
        %v1204 = vunpack.c.h.b16 %v454
        %v1205 = vunpack.c.l.b16 %v455
        %v1206 = vunpack.c.h.b16 %v455
        %v1207 = vunpack.c.l.b16 %v456
        %v1208 = vunpack.c.h.b16 %v456
        %v1209 = vunpack.c.l.b16 %v457
        %v1210 = vunpack.c.l.b16 %v458
        %v1211 = vunpack.c.h.b16 %v458
        %v1212 = vunpack.c.l.b16 %v459
        %v1213 = vunpack.c.h.b16 %v459
        %v1214 = vunpack.c.l.b16 %v460
        %v1215 = vunpack.c.h.b16 %v460
        %v1216 = vunpack.c.l.b16 %v461
        %v1217 = vunpack.c.h.b16 %v461
        %v1218 = vunpack.c.l.b16 %v462
        %v1219 = vunpack.c.l.b16 %v463
        %v1220 = vunpack.c.h.b16 %v463
        %v1221 = vunpack.c.l.b16 %v464
        %v1222 = vunpack.c.h.b16 %v464
        %v1223 = vunpack.c.l.b16 %v465
        %v1224 = vunpack.c.h.b16 %v465
        %v1225 = vunpack.c.l.b16 %v466
        %v1226 = vunpack.c.h.b16 %v466
        %v1227 = vunpack.c.l.b16 %v467
        %v1228 = vunpack.c.l.b16 %v468
        %v1229 = vunpack.c.h.b16 %v468
        %v1230 = vunpack.c.l.b16 %v469
        %v1231 = vunpack.c.h.b16 %v469
        %v1232 = vunpack.c.l.b16 %v470
        %v1233 = vunpack.c.h.b16 %v470
        %v1234 = vunpack.c.l.b16 %v471
        %v1235 = vunpack.c.h.b16 %v471
        %v1236 = vunpack.c.l.b16 %v472
        %v1237 = vunpack.c.l.b16 %v473
        %v1238 = vunpack.c.h.b16 %v473
        %v1239 = vunpack.c.l.b16 %v474
        %v1240 = vunpack.c.h.b16 %v474
        %v1241 = vunpack.c.l.b16 %v475
        %v1242 = vunpack.c.h.b16 %v475
        %v1243 = vunpack.c.l.b16 %v476
        %v1244 = vunpack.c.h.b16 %v476
        %v1245 = vunpack.c.l.b16 %v477
        %v1246 = vunpack.c.l.b16 %v478
        %v1247 = vunpack.c.h.b16 %v478
        %v1248 = vunpack.c.l.b16 %v479
        %v1249 = vunpack.c.h.b16 %v479
        %v1250 = vunpack.c.l.b16 %v480
        %v1251 = vunpack.c.h.b16 %v480
        %v1252 = vunpack.c.l.b16 %v481
        %v1253 = vunpack.c.h.b16 %v481
        %v1254 = vunpack.c.l.b16 %v482
        %v1255 = vunpack.c.l.b16 %v483
        %v1256 = vunpack.c.h.b16 %v483
        %v1257 = vunpack.c.l.b16 %v484
        %v1258 = vunpack.c.h.b16 %v484
        %v1259 = vunpack.c.l.b16 %v485
        %v1260 = vunpack.c.h.b16 %v485
        %v1261 = vunpack.c.l.b16 %v486
        %v1262 = vunpack.c.h.b16 %v486
        %v1263 = vunpack.c.l.b16 %v487
        %v1264 = vunpack.c.l.b16 %v488
        %v1265 = vunpack.c.h.b16 %v488
        %v1266 = vunpack.c.l.b16 %v489
        %v1267 = vunpack.c.h.b16 %v489
        %v1268 = vunpack.c.l.b16 %v490
        %v1269 = vunpack.c.h.b16 %v490
        %v1270 = vunpack.c.l.b16 %v491
        %v1271 = vunpack.c.h.b16 %v491
        %v1272 = vunpack.c.l.b16 %v492
        %v1273 = vunpack.c.l.b16 %v493
        %v1274 = vunpack.c.h.b16 %v493
        %v1275 = vunpack.c.l.b16 %v494
        %v1276 = vunpack.c.h.b16 %v494
        %v1277 = vunpack.c.l.b16 %v495
        %v1278 = vunpack.c.h.b16 %v495
        %v1279 = vunpack.c.l.b16 %v496
        %v1280 = vunpack.c.h.b16 %v496
        %v1281 = vunpack.c.l.b16 %v497
        %v1282 = vunpack.c.l.b16 %v498
        %v1283 = vunpack.c.h.b16 %v498
        %v1284 = vunpack.c.l.b16 %v499
        %v1285 = vunpack.c.h.b16 %v499
        %v1286 = vunpack.c.l.b16 %v500
        %v1287 = vunpack.c.h.b16 %v500
        %v1288 = vunpack.c.l.b16 %v501
        %v1289 = vunpack.c.h.b16 %v501
        %v1290 = vunpack.c.l.b16 %v502
        %v1291 = vunpack.c.l.b16 %v503
        %v1292 = vunpack.c.h.b16 %v503
        %v1293 = vunpack.c.l.b16 %v504
        %v1294 = vunpack.c.h.b16 %v504
        %v1295 = vunpack.c.l.b16 %v505
        %v1296 = vunpack.c.h.b16 %v505
        %v1297 = vunpack.c.l.b16 %v506
        %v1298 = vunpack.c.h.b16 %v506
        %v1299 = vunpack.c.l.b16 %v507
        %v1300 = vunpack.c.l.b16 %v508
        %v1301 = vunpack.c.h.b16 %v508
        %v1302 = vunpack.c.l.b16 %v509
        %v1303 = vunpack.c.h.b16 %v509
        %v1304 = vunpack.c.l.b16 %v510
        %v1305 = vunpack.c.h.b16 %v510
        %v1306 = vunpack.c.l.b16 %v511
        %v1307 = vunpack.c.h.b16 %v511
        %v1308 = vunpack.c.l.b16 %v512
        %v1309 = vunpack.c.l.b16 %v513
        %v1310 = vunpack.c.h.b16 %v513
        %v1311 = vunpack.c.l.b16 %v514
        %v1312 = vunpack.c.h.b16 %v514
        %v1313 = vunpack.c.l.b16 %v515
        %v1314 = vunpack.c.h.b16 %v515
        %v1315 = vunpack.c.l.b16 %v516
        %v1316 = vunpack.c.h.b16 %v516
        %v1317 = vunpack.c.l.b16 %v517
        %v1318 = vpack.c.b16 %v895, %v886
        %v1319 = vpack.c.b16 %v896, %v887
        %v1320 = vpack.c.b16 %v897, %v888
        %v1321 = vpack.c.b16 %v898, %v889
        %v1322 = vpack.c.b16 %v899, %v890
        %v1323 = vpack.c.b16 %v900, %v891
        %v1324 = vpack.c.b16 %v901, %v892
        %v1325 = vpack.c.b16 %v902, %v893
        %v1326 = vpack.c.b16 %v903, %v894
        %v1327 = vpack.c.b16 %v913, %v904
        %v1328 = vpack.c.b16 %v914, %v905
        %v1329 = vpack.c.b16 %v915, %v906
        %v1330 = vpack.c.b16 %v916, %v907
        %v1331 = vpack.c.b16 %v917, %v908
        %v1332 = vpack.c.b16 %v918, %v909
        %v1333 = vpack.c.b16 %v919, %v910
        %v1334 = vpack.c.b16 %v920, %v911
        %v1335 = vpack.c.b16 %v921, %v912
        %v1336 = vpack.c.b16 %v931, %v922
        %v1337 = vpack.c.b16 %v932, %v923
        %v1338 = vpack.c.b16 %v933, %v924
        %v1339 = vpack.c.b16 %v934, %v925
        %v1340 = vpack.c.b16 %v935, %v926
        %v1341 = vpack.c.b16 %v936, %v927
        %v1342 = vpack.c.b16 %v937, %v928
        %v1343 = vpack.c.b16 %v938, %v929
        %v1344 = vpack.c.b16 %v939, %v930
        %v1345 = vpack.c.b16 %v949, %v940
        %v1346 = vpack.c.b16 %v950, %v941
        %v1347 = vpack.c.b16 %v951, %v942
        %v1348 = vpack.c.b16 %v952, %v943
        %v1349 = vpack.c.b16 %v953, %v944
        %v1350 = vpack.c.b16 %v954, %v945
        %v1351 = vpack.c.b16 %v955, %v946
        %v1352 = vpack.c.b16 %v956, %v947
        %v1353 = vpack.c.b16 %v957, %v948
        %v1354 = vpack.c.b16 %v967, %v958
        %v1355 = vpack.c.b16 %v968, %v959
        %v1356 = vpack.c.b16 %v969, %v960
        %v1357 = vpack.c.b16 %v970, %v961
        %v1358 = vpack.c.b16 %v971, %v962
        %v1359 = vpack.c.b16 %v972, %v963
        %v1360 = vpack.c.b16 %v973, %v964
        %v1361 = vpack.c.b16 %v974, %v965
        %v1362 = vpack.c.b16 %v975, %v966
        %v1363 = vpack.c.b16 %v985, %v976
        %v1364 = vpack.c.b16 %v986, %v977
        %v1365 = vpack.c.b16 %v987, %v978
        %v1366 = vpack.c.b16 %v988, %v979
        %v1367 = vpack.c.b16 %v989, %v980
        %v1368 = vpack.c.b16 %v990, %v981
        %v1369 = vpack.c.b16 %v991, %v982
        %v1370 = vpack.c.b16 %v992, %v983
        %v1371 = vpack.c.b16 %v993, %v984
        %v1372 = vpack.c.b16 %v1003, %v994
        %v1373 = vpack.c.b16 %v1004, %v995
        %v1374 = vpack.c.b16 %v1005, %v996
        %v1375 = vpack.c.b16 %v1006, %v997
        %v1376 = vpack.c.b16 %v1007, %v998
        %v1377 = vpack.c.b16 %v1008, %v999
        %v1378 = vpack.c.b16 %v1009, %v1000
        %v1379 = vpack.c.b16 %v1010, %v1001
        %v1380 = vpack.c.b16 %v1011, %v1002
        %v1381 = vpack.c.b16 %v1021, %v1012
        %v1382 = vpack.c.b16 %v1022, %v1013
        %v1383 = vpack.c.b16 %v1023, %v1014
        %v1384 = vpack.c.b16 %v1024, %v1015
        %v1385 = vpack.c.b16 %v1025, %v1016
        %v1386 = vpack.c.b16 %v1026, %v1017
        %v1387 = vpack.c.b16 %v1027, %v1018
        %v1388 = vpack.c.b16 %v1028, %v1019
        %v1389 = vpack.c.b16 %v1029, %v1020
        %v1390 = vpack.c.b16 %v1039, %v1030
        %v1391 = vpack.c.b16 %v1040, %v1031
        %v1392 = vpack.c.b16 %v1041, %v1032
        %v1393 = vpack.c.b16 %v1042, %v1033
        %v1394 = vpack.c.b16 %v1043, %v1034
        %v1395 = vpack.c.b16 %v1044, %v1035
        %v1396 = vpack.c.b16 %v1045, %v1036
        %v1397 = vpack.c.b16 %v1046, %v1037
        %v1398 = vpack.c.b16 %v1047, %v1038
        %v1399 = vpack.c.b16 %v1057, %v1048
        %v1400 = vpack.c.b16 %v1058, %v1049
        %v1401 = vpack.c.b16 %v1059, %v1050
        %v1402 = vpack.c.b16 %v1060, %v1051
        %v1403 = vpack.c.b16 %v1061, %v1052
        %v1404 = vpack.c.b16 %v1062, %v1053
        %v1405 = vpack.c.b16 %v1063, %v1054
        %v1406 = vpack.c.b16 %v1064, %v1055
        %v1407 = vpack.c.b16 %v1065, %v1056
        %v1408 = vpack.c.b16 %v1075, %v1066
        %v1409 = vpack.c.b16 %v1076, %v1067
        %v1410 = vpack.c.b16 %v1077, %v1068
        %v1411 = vpack.c.b16 %v1078, %v1069
        %v1412 = vpack.c.b16 %v1079, %v1070
        %v1413 = vpack.c.b16 %v1080, %v1071
        %v1414 = vpack.c.b16 %v1081, %v1072
        %v1415 = vpack.c.b16 %v1082, %v1073
        %v1416 = vpack.c.b16 %v1083, %v1074
        %v1417 = vpack.c.b16 %v1093, %v1084
        %v1418 = vpack.c.b16 %v1094, %v1085
        %v1419 = vpack.c.b16 %v1095, %v1086
        %v1420 = vpack.c.b16 %v1096, %v1087
        %v1421 = vpack.c.b16 %v1097, %v1088
        %v1422 = vpack.c.b16 %v1098, %v1089
        %v1423 = vpack.c.b16 %v1099, %v1090
        %v1424 = vpack.c.b16 %v1100, %v1091
        %v1425 = vpack.c.b16 %v1101, %v1092
        %v1426 = vpack.c.b16 %v1111, %v1102
        %v1427 = vpack.c.b16 %v1112, %v1103
        %v1428 = vpack.c.b16 %v1113, %v1104
        %v1429 = vpack.c.b16 %v1114, %v1105
        %v1430 = vpack.c.b16 %v1115, %v1106
        %v1431 = vpack.c.b16 %v1116, %v1107
        %v1432 = vpack.c.b16 %v1117, %v1108
        %v1433 = vpack.c.b16 %v1118, %v1109
        %v1434 = vpack.c.b16 %v1119, %v1110
        %v1435 = vpack.c.b16 %v1129, %v1120
        %v1436 = vpack.c.b16 %v1130, %v1121
        %v1437 = vpack.c.b16 %v1131, %v1122
        %v1438 = vpack.c.b16 %v1132, %v1123
        %v1439 = vpack.c.b16 %v1133, %v1124
        %v1440 = vpack.c.b16 %v1134, %v1125
        %v1441 = vpack.c.b16 %v1135, %v1126
        %v1442 = vpack.c.b16 %v1136, %v1127
        %v1443 = vpack.c.b16 %v1137, %v1128
        %v1444 = vpack.c.b16 %v1147, %v1138
        %v1445 = vpack.c.b16 %v1148, %v1139
        %v1446 = vpack.c.b16 %v1149, %v1140
        %v1447 = vpack.c.b16 %v1150, %v1141
        %v1448 = vpack.c.b16 %v1151, %v1142
        %v1449 = vpack.c.b16 %v1152, %v1143
        %v1450 = vpack.c.b16 %v1153, %v1144
        %v1451 = vpack.c.b16 %v1154, %v1145
        %v1452 = vpack.c.b16 %v1155, %v1146
        %v1453 = vpack.c.b16 %v1165, %v1156
        %v1454 = vpack.c.b16 %v1166, %v1157
        %v1455 = vpack.c.b16 %v1167, %v1158
        %v1456 = vpack.c.b16 %v1168, %v1159
        %v1457 = vpack.c.b16 %v1169, %v1160
        %v1458 = vpack.c.b16 %v1170, %v1161
        %v1459 = vpack.c.b16 %v1171, %v1162
        %v1460 = vpack.c.b16 %v1172, %v1163
        %v1461 = vpack.c.b16 %v1173, %v1164
        %v1462 = vpack.c.b16 %v1183, %v1174
        %v1463 = vpack.c.b16 %v1184, %v1175
        %v1464 = vpack.c.b16 %v1185, %v1176
        %v1465 = vpack.c.b16 %v1186, %v1177
        %v1466 = vpack.c.b16 %v1187, %v1178
        %v1467 = vpack.c.b16 %v1188, %v1179
        %v1468 = vpack.c.b16 %v1189, %v1180
        %v1469 = vpack.c.b16 %v1190, %v1181
        %v1470 = vpack.c.b16 %v1191, %v1182
        %v1471 = vpack.c.b16 %v1201, %v1192
        %v1472 = vpack.c.b16 %v1202, %v1193
        %v1473 = vpack.c.b16 %v1203, %v1194
        %v1474 = vpack.c.b16 %v1204, %v1195
        %v1475 = vpack.c.b16 %v1205, %v1196
        %v1476 = vpack.c.b16 %v1206, %v1197
        %v1477 = vpack.c.b16 %v1207, %v1198
        %v1478 = vpack.c.b16 %v1208, %v1199
        %v1479 = vpack.c.b16 %v1209, %v1200
        %v1480 = vpack.c.b16 %v1219, %v1210
        %v1481 = vpack.c.b16 %v1220, %v1211
        %v1482 = vpack.c.b16 %v1221, %v1212
        %v1483 = vpack.c.b16 %v1222, %v1213
        %v1484 = vpack.c.b16 %v1223, %v1214
        %v1485 = vpack.c.b16 %v1224, %v1215
        %v1486 = vpack.c.b16 %v1225, %v1216
        %v1487 = vpack.c.b16 %v1226, %v1217
        %v1488 = vpack.c.b16 %v1227, %v1218
        %v1489 = vpack.c.b16 %v1237, %v1228
        %v1490 = vpack.c.b16 %v1238, %v1229
        %v1491 = vpack.c.b16 %v1239, %v1230
        %v1492 = vpack.c.b16 %v1240, %v1231
        %v1493 = vpack.c.b16 %v1241, %v1232
        %v1494 = vpack.c.b16 %v1242, %v1233
        %v1495 = vpack.c.b16 %v1243, %v1234
        %v1496 = vpack.c.b16 %v1244, %v1235
        %v1497 = vpack.c.b16 %v1245, %v1236
        %v1498 = vpack.c.b16 %v1255, %v1246
        %v1499 = vpack.c.b16 %v1256, %v1247
        %v1500 = vpack.c.b16 %v1257, %v1248
        %v1501 = vpack.c.b16 %v1258, %v1249
        %v1502 = vpack.c.b16 %v1259, %v1250
        %v1503 = vpack.c.b16 %v1260, %v1251
        %v1504 = vpack.c.b16 %v1261, %v1252
        %v1505 = vpack.c.b16 %v1262, %v1253
        %v1506 = vpack.c.b16 %v1263, %v1254
        %v1507 = vpack.c.b16 %v1273, %v1264
        %v1508 = vpack.c.b16 %v1274, %v1265
        %v1509 = vpack.c.b16 %v1275, %v1266
        %v1510 = vpack.c.b16 %v1276, %v1267
        %v1511 = vpack.c.b16 %v1277, %v1268
        %v1512 = vpack.c.b16 %v1278, %v1269
        %v1513 = vpack.c.b16 %v1279, %v1270
        %v1514 = vpack.c.b16 %v1280, %v1271
        %v1515 = vpack.c.b16 %v1281, %v1272
        %v1516 = vpack.c.b16 %v1291, %v1282
        %v1517 = vpack.c.b16 %v1292, %v1283
        %v1518 = vpack.c.b16 %v1293, %v1284
        %v1519 = vpack.c.b16 %v1294, %v1285
        %v1520 = vpack.c.b16 %v1295, %v1286
        %v1521 = vpack.c.b16 %v1296, %v1287
        %v1522 = vpack.c.b16 %v1297, %v1288
        %v1523 = vpack.c.b16 %v1298, %v1289
        %v1524 = vpack.c.b16 %v1299, %v1290
        %v1525 = vpack.c.b16 %v1309, %v1300
        %v1526 = vpack.c.b16 %v1310, %v1301
        %v1527 = vpack.c.b16 %v1311, %v1302
        %v1528 = vpack.c.b16 %v1312, %v1303
        %v1529 = vpack.c.b16 %v1313, %v1304
        %v1530 = vpack.c.b16 %v1314, %v1305
        %v1531 = vpack.c.b16 %v1315, %v1306
        %v1532 = vpack.c.b16 %v1316, %v1307
        %v1533 = vpack.c.b16 %v1317, %v1308
        %1750 = vmatprep.subr.bf16.mxu0 %v1319
        %1751 = vmatpush1.bf16.msra.mxu0 %v1318
        %1752 = vmatprep.subr.bf16.mxu0 %v1328
        %1753 = vmatpush1.bf16.msra.mxu0 %v1327
        %1754 = vmatprep.subr.bf16.mxu0 %v1337
        %1755 = vmatpush1.bf16.msra.mxu0 %v1336
        %1756 = vmatprep.subr.bf16.mxu0 %v1346
        %1757 = vmatpush1.bf16.msra.mxu0 %v1345
        %1758 = vmatprep.subr.bf16.mxu0 %v1355
        %1759 = vmatpush1.bf16.msra.mxu0 %v1354
        %1760 = vmatprep.subr.bf16.mxu0 %v1364
        %1761 = vmatpush1.bf16.msra.mxu0 %v1363
        %1762 = vmatprep.subr.bf16.mxu0 %v1373
        %1763 = vmatpush1.bf16.msra.mxu0 %v1372
        %1764 = vmatprep.subr.bf16.mxu0 %v1382
        %1765 = vmatpush1.bf16.msra.mxu0 %v1381
        %1766 = vmatprep.subr.bf16.mxu0 %v1391
        %1767 = vmatpush1.bf16.msra.mxu0 %v1390
        %1768 = vmatprep.subr.bf16.mxu0 %v1400
        %1769 = vmatpush1.bf16.msra.mxu0 %v1399
        %1770 = vmatprep.subr.bf16.mxu0 %v1409
        %1771 = vmatpush1.bf16.msra.mxu0 %v1408
        %1772 = vmatprep.subr.bf16.mxu0 %v1418
        %1773 = vmatpush1.bf16.msra.mxu0 %v1417
        %1774 = vmatprep.subr.bf16.mxu0 %v1427
        %1775 = vmatpush1.bf16.msra.mxu0 %v1426
        %1776 = vmatprep.subr.bf16.mxu0 %v1436
        %1777 = vmatpush1.bf16.msra.mxu0 %v1435
        %1778 = vmatprep.subr.bf16.mxu0 %v1445
        %1779 = vmatpush1.bf16.msra.mxu0 %v1444
        %1780 = vmatprep.subr.bf16.mxu0 %v1454
        %1781 = vmatpush1.bf16.msra.mxu0 %v1453
        %1782 = vmatprep.mubr.bf16.mxu0 %v599
        %1783 = vmatmul.mubr.bf16.gmra.mrb[0].mxu0 %v598
        %v1784 = vpop.f32.mrb[0].mxu0
        %v1785 = vadd.f32 0.0, %v1784
        %v1786 = vpop.f32.mrb[0].mxu0
        %v1787 = vadd.f32 0.0, %v1786
        %v1788 = vpop.f32.mrb[0].mxu0
        %v1789 = vadd.f32 0.0, %v1788
        %v1790 = vpop.f32.mrb[0].mxu0
        %v1791 = vadd.f32 0.0, %v1790
        %1792 = vmatprep.mubr.bf16.mxu0 %v602
        %1793 = vmatmul.mubr.bf16.gmra.mrb[0].mxu0 %v601
        %v1794 = vpop.f32.mrb[0].mxu0
        %v1795 = vadd.f32 0.0, %v1794
        %v1796 = vpop.f32.mrb[0].mxu0
        %v1797 = vadd.f32 0.0, %v1796
        %v1798 = vpop.f32.mrb[0].mxu0
        %v1799 = vadd.f32 0.0, %v1798
        %v1800 = vpop.f32.mrb[0].mxu0
        %v1801 = vadd.f32 0.0, %v1800
        %1802 = vmatprep.mubr.bf16.mxu0 %v605
        %1803 = vmatmul.mubr.bf16.gmra.mrb[0].mxu0 %v604
        %v1804 = vpop.f32.mrb[0].mxu0
        %v1805 = vadd.f32 0.0, %v1804
        %v1806 = vpop.f32.mrb[0].mxu0
        %v1807 = vadd.f32 0.0, %v1806
        %v1808 = vpop.f32.mrb[0].mxu0
        %v1809 = vadd.f32 0.0, %v1808
        %v1810 = vpop.f32.mrb[0].mxu0
        %v1811 = vadd.f32 0.0, %v1810
        %1812 = vmatprep.mubr.bf16.mxu0 %v608
        %1813 = vmatmul.mubr.bf16.gmra.mrb[0].mxu0 %v607
        %v1814 = vpop.f32.mrb[0].mxu0
        %v1815 = vadd.f32 0.0, %v1814
        %v1816 = vpop.f32.mrb[0].mxu0
        %v1817 = vadd.f32 0.0, %v1816
        %v1818 = vpop.f32.mrb[0].mxu0
        %v1819 = vadd.f32 0.0, %v1818
        %v1820 = vpop.f32.mrb[0].mxu0
        %v1821 = vadd.f32 0.0, %v1820
        %1822 = vmatprep.mubr.bf16.mxu0 %v611
        %1823 = vmatmul.mubr.bf16.gmra.mrb[0].mxu0 %v610
        %v1824 = vpop.f32.mrb[0].mxu0
        %v1825 = vadd.f32 0.0, %v1824
        %v1826 = vpop.f32.mrb[0].mxu0
        %v1827 = vadd.f32 0.0, %v1826
        %v1828 = vpop.f32.mrb[0].mxu0
        %v1829 = vadd.f32 0.0, %v1828
        %v1830 = vpop.f32.mrb[0].mxu0
        %v1831 = vadd.f32 0.0, %v1830
        %1832 = vmatprep.mubr.bf16.mxu0 %v614
        %1833 = vmatmul.mubr.bf16.gmra.mrb[0].mxu0 %v613
        %v1834 = vpop.f32.mrb[0].mxu0
        %v1835 = vadd.f32 0.0, %v1834
        %v1836 = vpop.f32.mrb[0].mxu0
        %v1837 = vadd.f32 0.0, %v1836
        %v1838 = vpop.f32.mrb[0].mxu0
        %v1839 = vadd.f32 0.0, %v1838
        %v1840 = vpop.f32.mrb[0].mxu0
        %v1841 = vadd.f32 0.0, %v1840
        %1842 = vmatprep.mubr.bf16.mxu0 %v617
        %1843 = vmatmul.mubr.bf16.gmra.mrb[0].mxu0 %v616
        %v1844 = vpop.f32.mrb[0].mxu0
        %v1845 = vadd.f32 0.0, %v1844
        %v1846 = vpop.f32.mrb[0].mxu0
        %v1847 = vadd.f32 0.0, %v1846
        %v1848 = vpop.f32.mrb[0].mxu0
        %v1849 = vadd.f32 0.0, %v1848
        %v1850 = vpop.f32.mrb[0].mxu0
        %v1851 = vadd.f32 0.0, %v1850
        %1852 = vmatprep.mubr.bf16.mxu0 %v620
        %1853 = vmatmul.mubr.bf16.gmra.mrb[0].mxu0 %v619
        %v1854 = vpop.f32.mrb[0].mxu0
        %v1855 = vadd.f32 0.0, %v1854
        %v1856 = vpop.f32.mrb[0].mxu0
        %v1857 = vadd.f32 0.0, %v1856
        %v1858 = vpop.f32.mrb[0].mxu0
        %v1859 = vadd.f32 0.0, %v1858
        %v1860 = vpop.f32.mrb[0].mxu0
        %v1861 = vadd.f32 0.0, %v1860
        %1862 = vdwg.mxu0
        %1863 = vmatprep.subr.bf16.mxu0 %v1463
        %1864 = vmatpush1.bf16.msra.mxu0 %v1462
        %1865 = vmatprep.subr.bf16.mxu0 %v1472
        %1866 = vmatpush1.bf16.msra.mxu0 %v1471
        %1867 = vmatprep.subr.bf16.mxu0 %v1481
        %1868 = vmatpush1.bf16.msra.mxu0 %v1480
        %1869 = vmatprep.subr.bf16.mxu0 %v1490
        %1870 = vmatpush1.bf16.msra.mxu0 %v1489
        %1871 = vmatprep.subr.bf16.mxu0 %v1499
        %1872 = vmatpush1.bf16.msra.mxu0 %v1498
        %1873 = vmatprep.subr.bf16.mxu0 %v1508
        %1874 = vmatpush1.bf16.msra.mxu0 %v1507
        %1875 = vmatprep.subr.bf16.mxu0 %v1517
        %1876 = vmatpush1.bf16.msra.mxu0 %v1516
        %1877 = vmatprep.subr.bf16.mxu0 %v1526
        %1878 = vmatpush1.bf16.msra.mxu0 %v1525
        %1879 = vmatprep.subr.bf16.mxu0 0
        %1880 = vmatpush1.bf16.msra.mxu0 0
        %1881 = vmatprep.subr.bf16.mxu0 0
        %1882 = vmatpush1.bf16.msra.mxu0 0
        %1883 = vmatprep.subr.bf16.mxu0 0
        %1884 = vmatpush1.bf16.msra.mxu0 0
        %1885 = vmatprep.subr.bf16.mxu0 0
        %1886 = vmatpush1.bf16.msra.mxu0 0
        %1887 = vmatprep.subr.bf16.mxu0 0
        %1888 = vmatpush1.bf16.msra.mxu0 0
        %1889 = vmatprep.subr.bf16.mxu0 0
        %1890 = vmatpush1.bf16.msra.mxu0 0
        %1891 = vmatprep.subr.bf16.mxu0 0
        %1892 = vmatpush1.bf16.msra.mxu0 0
        %1893 = vmatprep.subr.bf16.mxu0 0
        %1894 = vmatpush1.bf16.msra.mxu0 0
        %1895 = vmatprep.mubr.bf16.mxu0 0
        %1896 = vmatmul.mubr.bf16.gmra.mrb[0].mxu0 %v600
        %v1897 = vpop.f32.mrb[0].mxu0
        %v1898 = vadd.f32 %v1785, %v1897
        %v1899 = vpop.f32.mrb[0].mxu0
        %v1900 = vadd.f32 %v1787, %v1899
        %v1901 = vpop.f32.mrb[0].mxu0
        %v1902 = vadd.f32 %v1789, %v1901
        %v1903 = vpop.f32.mrb[0].mxu0
        %v1904 = vadd.f32 %v1791, %v1903
        %1905 = vmatprep.mubr.bf16.mxu0 0
        %1906 = vmatmul.mubr.bf16.gmra.mrb[0].mxu0 %v603
        %v1907 = vpop.f32.mrb[0].mxu0
        %v1908 = vadd.f32 %v1795, %v1907
        %v1909 = vpop.f32.mrb[0].mxu0
        %v1910 = vadd.f32 %v1797, %v1909
        %v1911 = vpop.f32.mrb[0].mxu0
        %v1912 = vadd.f32 %v1799, %v1911
        %v1913 = vpop.f32.mrb[0].mxu0
        %v1914 = vadd.f32 %v1801, %v1913
        %1915 = vmatprep.mubr.bf16.mxu0 0
        %1916 = vmatmul.mubr.bf16.gmra.mrb[0].mxu0 %v606
        %v1917 = vpop.f32.mrb[0].mxu0
        %v1918 = vadd.f32 %v1805, %v1917
        %v1919 = vpop.f32.mrb[0].mxu0
        %v1920 = vadd.f32 %v1807, %v1919
        %v1921 = vpop.f32.mrb[0].mxu0
        %v1922 = vadd.f32 %v1809, %v1921
        %v1923 = vpop.f32.mrb[0].mxu0
        %v1924 = vadd.f32 %v1811, %v1923
        %1925 = vmatprep.mubr.bf16.mxu0 0
        %1926 = vmatmul.mubr.bf16.gmra.mrb[0].mxu0 %v609
        %v1927 = vpop.f32.mrb[0].mxu0
        %v1928 = vadd.f32 %v1815, %v1927
        %v1929 = vpop.f32.mrb[0].mxu0
        %v1930 = vadd.f32 %v1817, %v1929
        %v1931 = vpop.f32.mrb[0].mxu0
        %v1932 = vadd.f32 %v1819, %v1931
        %v1933 = vpop.f32.mrb[0].mxu0
        %v1934 = vadd.f32 %v1821, %v1933
        %1935 = vmatprep.mubr.bf16.mxu0 0
        %1936 = vmatmul.mubr.bf16.gmra.mrb[0].mxu0 %v612
        %v1937 = vpop.f32.mrb[0].mxu0
        %v1938 = vadd.f32 %v1825, %v1937
        %v1939 = vpop.f32.mrb[0].mxu0
        %v1940 = vadd.f32 %v1827, %v1939
        %v1941 = vpop.f32.mrb[0].mxu0
        %v1942 = vadd.f32 %v1829, %v1941
        %v1943 = vpop.f32.mrb[0].mxu0
        %v1944 = vadd.f32 %v1831, %v1943
        %1945 = vmatprep.mubr.bf16.mxu0 0
        %1946 = vmatmul.mubr.bf16.gmra.mrb[0].mxu0 %v615
        %v1947 = vpop.f32.mrb[0].mxu0
        %v1948 = vadd.f32 %v1835, %v1947
        %v1949 = vpop.f32.mrb[0].mxu0
        %v1950 = vadd.f32 %v1837, %v1949
        %v1951 = vpop.f32.mrb[0].mxu0
        %v1952 = vadd.f32 %v1839, %v1951
        %v1953 = vpop.f32.mrb[0].mxu0
        %v1954 = vadd.f32 %v1841, %v1953
        %1955 = vmatprep.mubr.bf16.mxu0 0
        %1956 = vmatmul.mubr.bf16.gmra.mrb[0].mxu0 %v618
        %v1957 = vpop.f32.mrb[0].mxu0
        %v1958 = vadd.f32 %v1845, %v1957
        %v1959 = vpop.f32.mrb[0].mxu0
        %v1960 = vadd.f32 %v1847, %v1959
        %v1961 = vpop.f32.mrb[0].mxu0
        %v1962 = vadd.f32 %v1849, %v1961
        %v1963 = vpop.f32.mrb[0].mxu0
        %v1964 = vadd.f32 %v1851, %v1963
        %1965 = vmatprep.mubr.bf16.mxu0 0
        %1966 = vmatmul.mubr.bf16.gmra.mrb[0].mxu0 %v621
        %v1967 = vpop.f32.mrb[0].mxu0
        %v1968 = vadd.f32 %v1855, %v1967
        %v1969 = vpop.f32.mrb[0].mxu0
        %v1970 = vadd.f32 %v1857, %v1969
        %v1971 = vpop.f32.mrb[0].mxu0
        %v1972 = vadd.f32 %v1859, %v1971
        %v1973 = vpop.f32.mrb[0].mxu0
        %v1974 = vadd.f32 %v1861, %v1973
        %1975 = vdwg.mxu0
        %1976 = vmatprep.subr.bf16.mxu0 %v1321
        %1977 = vmatpush1.bf16.msra.mxu0 %v1320
        %1978 = vmatprep.subr.bf16.mxu0 %v1330
        %1979 = vmatpush1.bf16.msra.mxu0 %v1329
        %1980 = vmatprep.subr.bf16.mxu0 %v1339
        %1981 = vmatpush1.bf16.msra.mxu0 %v1338
        %1982 = vmatprep.subr.bf16.mxu0 %v1348
        %1983 = vmatpush1.bf16.msra.mxu0 %v1347
        %1984 = vmatprep.subr.bf16.mxu0 %v1357
        %1985 = vmatpush1.bf16.msra.mxu0 %v1356
        %1986 = vmatprep.subr.bf16.mxu0 %v1366
        %1987 = vmatpush1.bf16.msra.mxu0 %v1365
        %1988 = vmatprep.subr.bf16.mxu0 %v1375
        %1989 = vmatpush1.bf16.msra.mxu0 %v1374
        %1990 = vmatprep.subr.bf16.mxu0 %v1384
        %1991 = vmatpush1.bf16.msra.mxu0 %v1383
        %1992 = vmatprep.subr.bf16.mxu0 %v1393
        %1993 = vmatpush1.bf16.msra.mxu0 %v1392
        %1994 = vmatprep.subr.bf16.mxu0 %v1402
        %1995 = vmatpush1.bf16.msra.mxu0 %v1401
        %1996 = vmatprep.subr.bf16.mxu0 %v1411
        %1997 = vmatpush1.bf16.msra.mxu0 %v1410
        %1998 = vmatprep.subr.bf16.mxu0 %v1420
        %1999 = vmatpush1.bf16.msra.mxu0 %v1419
        %2000 = vmatprep.subr.bf16.mxu0 %v1429
        %2001 = vmatpush1.bf16.msra.mxu0 %v1428
        %2002 = vmatprep.subr.bf16.mxu0 %v1438
        %2003 = vmatpush1.bf16.msra.mxu0 %v1437
        %2004 = vmatprep.subr.bf16.mxu0 %v1447
        %2005 = vmatpush1.bf16.msra.mxu0 %v1446
        %2006 = vmatprep.subr.bf16.mxu0 %v1456
        %2007 = vmatpush1.bf16.msra.mxu0 %v1455
        %2008 = vmatprep.mubr.bf16.mxu0 %v599
        %2009 = vmatmul.mubr.bf16.gmra.mrb[0].mxu0 %v598
        %v2010 = vpop.f32.mrb[0].mxu0
        %v2011 = vadd.f32 0.0, %v2010
        %v2012 = vpop.f32.mrb[0].mxu0
        %v2013 = vadd.f32 0.0, %v2012
        %v2014 = vpop.f32.mrb[0].mxu0
        %v2015 = vadd.f32 0.0, %v2014
        %v2016 = vpop.f32.mrb[0].mxu0
        %v2017 = vadd.f32 0.0, %v2016
        %2018 = vmatprep.mubr.bf16.mxu0 %v602
        %2019 = vmatmul.mubr.bf16.gmra.mrb[0].mxu0 %v601
        %v2020 = vpop.f32.mrb[0].mxu0
        %v2021 = vadd.f32 0.0, %v2020
        %v2022 = vpop.f32.mrb[0].mxu0
        %v2023 = vadd.f32 0.0, %v2022
        %v2024 = vpop.f32.mrb[0].mxu0
        %v2025 = vadd.f32 0.0, %v2024
        %v2026 = vpop.f32.mrb[0].mxu0
        %v2027 = vadd.f32 0.0, %v2026
        %2028 = vmatprep.mubr.bf16.mxu0 %v605
        %2029 = vmatmul.mubr.bf16.gmra.mrb[0].mxu0 %v604
        %v2030 = vpop.f32.mrb[0].mxu0
        %v2031 = vadd.f32 0.0, %v2030
        %v2032 = vpop.f32.mrb[0].mxu0
        %v2033 = vadd.f32 0.0, %v2032
        %v2034 = vpop.f32.mrb[0].mxu0
        %v2035 = vadd.f32 0.0, %v2034
        %v2036 = vpop.f32.mrb[0].mxu0
        %v2037 = vadd.f32 0.0, %v2036
        %2038 = vmatprep.mubr.bf16.mxu0 %v608
        %2039 = vmatmul.mubr.bf16.gmra.mrb[0].mxu0 %v607
        %v2040 = vpop.f32.mrb[0].mxu0
        %v2041 = vadd.f32 0.0, %v2040
        %v2042 = vpop.f32.mrb[0].mxu0
        %v2043 = vadd.f32 0.0, %v2042
        %v2044 = vpop.f32.mrb[0].mxu0
        %v2045 = vadd.f32 0.0, %v2044
        %v2046 = vpop.f32.mrb[0].mxu0
        %v2047 = vadd.f32 0.0, %v2046
        %2048 = vmatprep.mubr.bf16.mxu0 %v611
        %2049 = vmatmul.mubr.bf16.gmra.mrb[0].mxu0 %v610
        %v2050 = vpop.f32.mrb[0].mxu0
        %v2051 = vadd.f32 0.0, %v2050
        %v2052 = vpop.f32.mrb[0].mxu0
        %v2053 = vadd.f32 0.0, %v2052
        %v2054 = vpop.f32.mrb[0].mxu0
        %v2055 = vadd.f32 0.0, %v2054
        %v2056 = vpop.f32.mrb[0].mxu0
        %v2057 = vadd.f32 0.0, %v2056
        %2058 = vmatprep.mubr.bf16.mxu0 %v614
        %2059 = vmatmul.mubr.bf16.gmra.mrb[0].mxu0 %v613
        %v2060 = vpop.f32.mrb[0].mxu0
        %v2061 = vadd.f32 0.0, %v2060
        %v2062 = vpop.f32.mrb[0].mxu0
        %v2063 = vadd.f32 0.0, %v2062
        %v2064 = vpop.f32.mrb[0].mxu0
        %v2065 = vadd.f32 0.0, %v2064
        %v2066 = vpop.f32.mrb[0].mxu0
        %v2067 = vadd.f32 0.0, %v2066
        %2068 = vmatprep.mubr.bf16.mxu0 %v617
        %2069 = vmatmul.mubr.bf16.gmra.mrb[0].mxu0 %v616
        %v2070 = vpop.f32.mrb[0].mxu0
        %v2071 = vadd.f32 0.0, %v2070
        %v2072 = vpop.f32.mrb[0].mxu0
        %v2073 = vadd.f32 0.0, %v2072
        %v2074 = vpop.f32.mrb[0].mxu0
        %v2075 = vadd.f32 0.0, %v2074
        %v2076 = vpop.f32.mrb[0].mxu0
        %v2077 = vadd.f32 0.0, %v2076
        %2078 = vmatprep.mubr.bf16.mxu0 %v620
        %2079 = vmatmul.mubr.bf16.gmra.mrb[0].mxu0 %v619
        %v2080 = vpop.f32.mrb[0].mxu0
        %v2081 = vadd.f32 0.0, %v2080
        %v2082 = vpop.f32.mrb[0].mxu0
        %v2083 = vadd.f32 0.0, %v2082
        %v2084 = vpop.f32.mrb[0].mxu0
        %v2085 = vadd.f32 0.0, %v2084
        %v2086 = vpop.f32.mrb[0].mxu0
        %v2087 = vadd.f32 0.0, %v2086
        %2088 = vdwg.mxu0
        %2089 = vmatprep.subr.bf16.mxu0 %v1465
        %2090 = vmatpush1.bf16.msra.mxu0 %v1464
        %2091 = vmatprep.subr.bf16.mxu0 %v1474
        %2092 = vmatpush1.bf16.msra.mxu0 %v1473
        %2093 = vmatprep.subr.bf16.mxu0 %v1483
        %2094 = vmatpush1.bf16.msra.mxu0 %v1482
        %2095 = vmatprep.subr.bf16.mxu0 %v1492
        %2096 = vmatpush1.bf16.msra.mxu0 %v1491
        %2097 = vmatprep.subr.bf16.mxu0 %v1501
        %2098 = vmatpush1.bf16.msra.mxu0 %v1500
        %2099 = vmatprep.subr.bf16.mxu0 %v1510
        %2100 = vmatpush1.bf16.msra.mxu0 %v1509
        %2101 = vmatprep.subr.bf16.mxu0 %v1519
        %2102 = vmatpush1.bf16.msra.mxu0 %v1518
        %2103 = vmatprep.subr.bf16.mxu0 %v1528
        %2104 = vmatpush1.bf16.msra.mxu0 %v1527
        %2105 = vmatprep.subr.bf16.mxu0 0
        %2106 = vmatpush1.bf16.msra.mxu0 0
        %2107 = vmatprep.subr.bf16.mxu0 0
        %2108 = vmatpush1.bf16.msra.mxu0 0
        %2109 = vmatprep.subr.bf16.mxu0 0
        %2110 = vmatpush1.bf16.msra.mxu0 0
        %2111 = vmatprep.subr.bf16.mxu0 0
        %2112 = vmatpush1.bf16.msra.mxu0 0
        %2113 = vmatprep.subr.bf16.mxu0 0
        %2114 = vmatpush1.bf16.msra.mxu0 0
        %2115 = vmatprep.subr.bf16.mxu0 0
        %2116 = vmatpush1.bf16.msra.mxu0 0
        %2117 = vmatprep.subr.bf16.mxu0 0
        %2118 = vmatpush1.bf16.msra.mxu0 0
        %2119 = vmatprep.subr.bf16.mxu0 0
        %2120 = vmatpush1.bf16.msra.mxu0 0
        %2121 = vmatprep.mubr.bf16.mxu0 0
        %2122 = vmatmul.mubr.bf16.gmra.mrb[0].mxu0 %v600
        %v2123 = vpop.f32.mrb[0].mxu0
        %v2124 = vadd.f32 %v2011, %v2123
        %v2125 = vpop.f32.mrb[0].mxu0
        %v2126 = vadd.f32 %v2013, %v2125
        %v2127 = vpop.f32.mrb[0].mxu0
        %v2128 = vadd.f32 %v2015, %v2127
        %v2129 = vpop.f32.mrb[0].mxu0
        %v2130 = vadd.f32 %v2017, %v2129
        %2131 = vmatprep.mubr.bf16.mxu0 0
        %2132 = vmatmul.mubr.bf16.gmra.mrb[0].mxu0 %v603
        %v2133 = vpop.f32.mrb[0].mxu0
        %v2134 = vadd.f32 %v2021, %v2133
        %v2135 = vpop.f32.mrb[0].mxu0
        %v2136 = vadd.f32 %v2023, %v2135
        %v2137 = vpop.f32.mrb[0].mxu0
        %v2138 = vadd.f32 %v2025, %v2137
        %v2139 = vpop.f32.mrb[0].mxu0
        %v2140 = vadd.f32 %v2027, %v2139
        %2141 = vmatprep.mubr.bf16.mxu0 0
        %2142 = vmatmul.mubr.bf16.gmra.mrb[0].mxu0 %v606
        %v2143 = vpop.f32.mrb[0].mxu0
        %v2144 = vadd.f32 %v2031, %v2143
        %v2145 = vpop.f32.mrb[0].mxu0
        %v2146 = vadd.f32 %v2033, %v2145
        %v2147 = vpop.f32.mrb[0].mxu0
        %v2148 = vadd.f32 %v2035, %v2147
        %v2149 = vpop.f32.mrb[0].mxu0
        %v2150 = vadd.f32 %v2037, %v2149
        %2151 = vmatprep.mubr.bf16.mxu0 0
        %2152 = vmatmul.mubr.bf16.gmra.mrb[0].mxu0 %v609
        %v2153 = vpop.f32.mrb[0].mxu0
        %v2154 = vadd.f32 %v2041, %v2153
        %v2155 = vpop.f32.mrb[0].mxu0
        %v2156 = vadd.f32 %v2043, %v2155
        %v2157 = vpop.f32.mrb[0].mxu0
        %v2158 = vadd.f32 %v2045, %v2157
        %v2159 = vpop.f32.mrb[0].mxu0
        %v2160 = vadd.f32 %v2047, %v2159
        %2161 = vmatprep.mubr.bf16.mxu0 0
        %2162 = vmatmul.mubr.bf16.gmra.mrb[0].mxu0 %v612
        %v2163 = vpop.f32.mrb[0].mxu0
        %v2164 = vadd.f32 %v2051, %v2163
        %v2165 = vpop.f32.mrb[0].mxu0
        %v2166 = vadd.f32 %v2053, %v2165
        %v2167 = vpop.f32.mrb[0].mxu0
        %v2168 = vadd.f32 %v2055, %v2167
        %v2169 = vpop.f32.mrb[0].mxu0
        %v2170 = vadd.f32 %v2057, %v2169
        %2171 = vmatprep.mubr.bf16.mxu0 0
        %2172 = vmatmul.mubr.bf16.gmra.mrb[0].mxu0 %v615
        %v2173 = vpop.f32.mrb[0].mxu0
        %v2174 = vadd.f32 %v2061, %v2173
        %v2175 = vpop.f32.mrb[0].mxu0
        %v2176 = vadd.f32 %v2063, %v2175
        %v2177 = vpop.f32.mrb[0].mxu0
        %v2178 = vadd.f32 %v2065, %v2177
        %v2179 = vpop.f32.mrb[0].mxu0
        %v2180 = vadd.f32 %v2067, %v2179
        %2181 = vmatprep.mubr.bf16.mxu0 0
        %2182 = vmatmul.mubr.bf16.gmra.mrb[0].mxu0 %v618
        %v2183 = vpop.f32.mrb[0].mxu0
        %v2184 = vadd.f32 %v2071, %v2183
        %v2185 = vpop.f32.mrb[0].mxu0
        %v2186 = vadd.f32 %v2073, %v2185
        %v2187 = vpop.f32.mrb[0].mxu0
        %v2188 = vadd.f32 %v2075, %v2187
        %v2189 = vpop.f32.mrb[0].mxu0
        %v2190 = vadd.f32 %v2077, %v2189
        %2191 = vmatprep.mubr.bf16.mxu0 0
        %2192 = vmatmul.mubr.bf16.gmra.mrb[0].mxu0 %v621
        %v2193 = vpop.f32.mrb[0].mxu0
        %v2194 = vadd.f32 %v2081, %v2193
        %v2195 = vpop.f32.mrb[0].mxu0
        %v2196 = vadd.f32 %v2083, %v2195
        %v2197 = vpop.f32.mrb[0].mxu0
        %v2198 = vadd.f32 %v2085, %v2197
        %v2199 = vpop.f32.mrb[0].mxu0
        %v2200 = vadd.f32 %v2087, %v2199
        %2201 = vdwg.mxu0
        %2202 = vmatprep.subr.bf16.mxu0 %v1323
        %2203 = vmatpush1.bf16.msra.mxu0 %v1322
        %2204 = vmatprep.subr.bf16.mxu0 %v1332
        %2205 = vmatpush1.bf16.msra.mxu0 %v1331
        %2206 = vmatprep.subr.bf16.mxu0 %v1341
        %2207 = vmatpush1.bf16.msra.mxu0 %v1340
        %2208 = vmatprep.subr.bf16.mxu0 %v1350
        %2209 = vmatpush1.bf16.msra.mxu0 %v1349
        %2210 = vmatprep.subr.bf16.mxu0 %v1359
        %2211 = vmatpush1.bf16.msra.mxu0 %v1358
        %2212 = vmatprep.subr.bf16.mxu0 %v1368
        %2213 = vmatpush1.bf16.msra.mxu0 %v1367
        %2214 = vmatprep.subr.bf16.mxu0 %v1377
        %2215 = vmatpush1.bf16.msra.mxu0 %v1376
        %2216 = vmatprep.subr.bf16.mxu0 %v1386
        %2217 = vmatpush1.bf16.msra.mxu0 %v1385
        %2218 = vmatprep.subr.bf16.mxu0 %v1395
        %2219 = vmatpush1.bf16.msra.mxu0 %v1394
        %2220 = vmatprep.subr.bf16.mxu0 %v1404
        %2221 = vmatpush1.bf16.msra.mxu0 %v1403
        %2222 = vmatprep.subr.bf16.mxu0 %v1413
        %2223 = vmatpush1.bf16.msra.mxu0 %v1412
        %2224 = vmatprep.subr.bf16.mxu0 %v1422
        %2225 = vmatpush1.bf16.msra.mxu0 %v1421
        %2226 = vmatprep.subr.bf16.mxu0 %v1431
        %2227 = vmatpush1.bf16.msra.mxu0 %v1430
        %2228 = vmatprep.subr.bf16.mxu0 %v1440
        %2229 = vmatpush1.bf16.msra.mxu0 %v1439
        %2230 = vmatprep.subr.bf16.mxu0 %v1449
        %2231 = vmatpush1.bf16.msra.mxu0 %v1448
        %2232 = vmatprep.subr.bf16.mxu0 %v1458
        %2233 = vmatpush1.bf16.msra.mxu0 %v1457
        %2234 = vmatprep.mubr.bf16.mxu0 %v599
        %2235 = vmatmul.mubr.bf16.gmra.mrb[0].mxu0 %v598
        %v2236 = vpop.f32.mrb[0].mxu0
        %v2237 = vadd.f32 0.0, %v2236
        %v2238 = vpop.f32.mrb[0].mxu0
        %v2239 = vadd.f32 0.0, %v2238
        %v2240 = vpop.f32.mrb[0].mxu0
        %v2241 = vadd.f32 0.0, %v2240
        %v2242 = vpop.f32.mrb[0].mxu0
        %v2243 = vadd.f32 0.0, %v2242
        %2244 = vmatprep.mubr.bf16.mxu0 %v602
        %2245 = vmatmul.mubr.bf16.gmra.mrb[0].mxu0 %v601
        %v2246 = vpop.f32.mrb[0].mxu0
        %v2247 = vadd.f32 0.0, %v2246
        %v2248 = vpop.f32.mrb[0].mxu0
        %v2249 = vadd.f32 0.0, %v2248
        %v2250 = vpop.f32.mrb[0].mxu0
        %v2251 = vadd.f32 0.0, %v2250
        %v2252 = vpop.f32.mrb[0].mxu0
        %v2253 = vadd.f32 0.0, %v2252
        %2254 = vmatprep.mubr.bf16.mxu0 %v605
        %2255 = vmatmul.mubr.bf16.gmra.mrb[0].mxu0 %v604
        %v2256 = vpop.f32.mrb[0].mxu0
        %v2257 = vadd.f32 0.0, %v2256
        %v2258 = vpop.f32.mrb[0].mxu0
        %v2259 = vadd.f32 0.0, %v2258
        %v2260 = vpop.f32.mrb[0].mxu0
        %v2261 = vadd.f32 0.0, %v2260
        %v2262 = vpop.f32.mrb[0].mxu0
        %v2263 = vadd.f32 0.0, %v2262
        %2264 = vmatprep.mubr.bf16.mxu0 %v608
        %2265 = vmatmul.mubr.bf16.gmra.mrb[0].mxu0 %v607
        %v2266 = vpop.f32.mrb[0].mxu0
        %v2267 = vadd.f32 0.0, %v2266
        %v2268 = vpop.f32.mrb[0].mxu0
        %v2269 = vadd.f32 0.0, %v2268
        %v2270 = vpop.f32.mrb[0].mxu0
        %v2271 = vadd.f32 0.0, %v2270
        %v2272 = vpop.f32.mrb[0].mxu0
        %v2273 = vadd.f32 0.0, %v2272
        %2274 = vmatprep.mubr.bf16.mxu0 %v611
        %2275 = vmatmul.mubr.bf16.gmra.mrb[0].mxu0 %v610
        %v2276 = vpop.f32.mrb[0].mxu0
        %v2277 = vadd.f32 0.0, %v2276
        %v2278 = vpop.f32.mrb[0].mxu0
        %v2279 = vadd.f32 0.0, %v2278
        %v2280 = vpop.f32.mrb[0].mxu0
        %v2281 = vadd.f32 0.0, %v2280
        %v2282 = vpop.f32.mrb[0].mxu0
        %v2283 = vadd.f32 0.0, %v2282
        %2284 = vmatprep.mubr.bf16.mxu0 %v614
        %2285 = vmatmul.mubr.bf16.gmra.mrb[0].mxu0 %v613
        %v2286 = vpop.f32.mrb[0].mxu0
        %v2287 = vadd.f32 0.0, %v2286
        %v2288 = vpop.f32.mrb[0].mxu0
        %v2289 = vadd.f32 0.0, %v2288
        %v2290 = vpop.f32.mrb[0].mxu0
        %v2291 = vadd.f32 0.0, %v2290
        %v2292 = vpop.f32.mrb[0].mxu0
        %v2293 = vadd.f32 0.0, %v2292
        %2294 = vmatprep.mubr.bf16.mxu0 %v617
        %2295 = vmatmul.mubr.bf16.gmra.mrb[0].mxu0 %v616
        %v2296 = vpop.f32.mrb[0].mxu0
        %v2297 = vadd.f32 0.0, %v2296
        %v2298 = vpop.f32.mrb[0].mxu0
        %v2299 = vadd.f32 0.0, %v2298
        %v2300 = vpop.f32.mrb[0].mxu0
        %v2301 = vadd.f32 0.0, %v2300
        %v2302 = vpop.f32.mrb[0].mxu0
        %v2303 = vadd.f32 0.0, %v2302
        %2304 = vmatprep.mubr.bf16.mxu0 %v620
        %2305 = vmatmul.mubr.bf16.gmra.mrb[0].mxu0 %v619
        %v2306 = vpop.f32.mrb[0].mxu0
        %v2307 = vadd.f32 0.0, %v2306
        %v2308 = vpop.f32.mrb[0].mxu0
        %v2309 = vadd.f32 0.0, %v2308
        %v2310 = vpop.f32.mrb[0].mxu0
        %v2311 = vadd.f32 0.0, %v2310
        %v2312 = vpop.f32.mrb[0].mxu0
        %v2313 = vadd.f32 0.0, %v2312
        %2314 = vdwg.mxu0
        %2315 = vmatprep.subr.bf16.mxu0 %v1467
        %2316 = vmatpush1.bf16.msra.mxu0 %v1466
        %2317 = vmatprep.subr.bf16.mxu0 %v1476
        %2318 = vmatpush1.bf16.msra.mxu0 %v1475
        %2319 = vmatprep.subr.bf16.mxu0 %v1485
        %2320 = vmatpush1.bf16.msra.mxu0 %v1484
        %2321 = vmatprep.subr.bf16.mxu0 %v1494
        %2322 = vmatpush1.bf16.msra.mxu0 %v1493
        %2323 = vmatprep.subr.bf16.mxu0 %v1503
        %2324 = vmatpush1.bf16.msra.mxu0 %v1502
        %2325 = vmatprep.subr.bf16.mxu0 %v1512
        %2326 = vmatpush1.bf16.msra.mxu0 %v1511
        %2327 = vmatprep.subr.bf16.mxu0 %v1521
        %2328 = vmatpush1.bf16.msra.mxu0 %v1520
        %2329 = vmatprep.subr.bf16.mxu0 %v1530
        %2330 = vmatpush1.bf16.msra.mxu0 %v1529
        %2331 = vmatprep.subr.bf16.mxu0 0
        %2332 = vmatpush1.bf16.msra.mxu0 0
        %2333 = vmatprep.subr.bf16.mxu0 0
        %2334 = vmatpush1.bf16.msra.mxu0 0
        %2335 = vmatprep.subr.bf16.mxu0 0
        %2336 = vmatpush1.bf16.msra.mxu0 0
        %2337 = vmatprep.subr.bf16.mxu0 0
        %2338 = vmatpush1.bf16.msra.mxu0 0
        %2339 = vmatprep.subr.bf16.mxu0 0
        %2340 = vmatpush1.bf16.msra.mxu0 0
        %2341 = vmatprep.subr.bf16.mxu0 0
        %2342 = vmatpush1.bf16.msra.mxu0 0
        %2343 = vmatprep.subr.bf16.mxu0 0
        %2344 = vmatpush1.bf16.msra.mxu0 0
        %2345 = vmatprep.subr.bf16.mxu0 0
        %2346 = vmatpush1.bf16.msra.mxu0 0
        %2347 = vmatprep.mubr.bf16.mxu0 0
        %2348 = vmatmul.mubr.bf16.gmra.mrb[0].mxu0 %v600
        %v2349 = vpop.f32.mrb[0].mxu0
        %v2350 = vadd.f32 %v2237, %v2349
        %v2351 = vpop.f32.mrb[0].mxu0
        %v2352 = vadd.f32 %v2239, %v2351
        %v2353 = vpop.f32.mrb[0].mxu0
        %v2354 = vadd.f32 %v2241, %v2353
        %v2355 = vpop.f32.mrb[0].mxu0
        %v2356 = vadd.f32 %v2243, %v2355
        %2357 = vmatprep.mubr.bf16.mxu0 0
        %2358 = vmatmul.mubr.bf16.gmra.mrb[0].mxu0 %v603
        %v2359 = vpop.f32.mrb[0].mxu0
        %v2360 = vadd.f32 %v2247, %v2359
        %v2361 = vpop.f32.mrb[0].mxu0
        %v2362 = vadd.f32 %v2249, %v2361
        %v2363 = vpop.f32.mrb[0].mxu0
        %v2364 = vadd.f32 %v2251, %v2363
        %v2365 = vpop.f32.mrb[0].mxu0
        %v2366 = vadd.f32 %v2253, %v2365
        %2367 = vmatprep.mubr.bf16.mxu0 0
        %2368 = vmatmul.mubr.bf16.gmra.mrb[0].mxu0 %v606
        %v2369 = vpop.f32.mrb[0].mxu0
        %v2370 = vadd.f32 %v2257, %v2369
        %v2371 = vpop.f32.mrb[0].mxu0
        %v2372 = vadd.f32 %v2259, %v2371
        %v2373 = vpop.f32.mrb[0].mxu0
        %v2374 = vadd.f32 %v2261, %v2373
        %v2375 = vpop.f32.mrb[0].mxu0
        %v2376 = vadd.f32 %v2263, %v2375
        %2377 = vmatprep.mubr.bf16.mxu0 0
        %2378 = vmatmul.mubr.bf16.gmra.mrb[0].mxu0 %v609
        %v2379 = vpop.f32.mrb[0].mxu0
        %v2380 = vadd.f32 %v2267, %v2379
        %v2381 = vpop.f32.mrb[0].mxu0
        %v2382 = vadd.f32 %v2269, %v2381
        %v2383 = vpop.f32.mrb[0].mxu0
        %v2384 = vadd.f32 %v2271, %v2383
        %v2385 = vpop.f32.mrb[0].mxu0
        %v2386 = vadd.f32 %v2273, %v2385
        %2387 = vmatprep.mubr.bf16.mxu0 0
        %2388 = vmatmul.mubr.bf16.gmra.mrb[0].mxu0 %v612
        %v2389 = vpop.f32.mrb[0].mxu0
        %v2390 = vadd.f32 %v2277, %v2389
        %v2391 = vpop.f32.mrb[0].mxu0
        %v2392 = vadd.f32 %v2279, %v2391
        %v2393 = vpop.f32.mrb[0].mxu0
        %v2394 = vadd.f32 %v2281, %v2393
        %v2395 = vpop.f32.mrb[0].mxu0
        %v2396 = vadd.f32 %v2283, %v2395
        %2397 = vmatprep.mubr.bf16.mxu0 0
        %2398 = vmatmul.mubr.bf16.gmra.mrb[0].mxu0 %v615
        %v2399 = vpop.f32.mrb[0].mxu0
        %v2400 = vadd.f32 %v2287, %v2399
        %v2401 = vpop.f32.mrb[0].mxu0
        %v2402 = vadd.f32 %v2289, %v2401
        %v2403 = vpop.f32.mrb[0].mxu0
        %v2404 = vadd.f32 %v2291, %v2403
        %v2405 = vpop.f32.mrb[0].mxu0
        %v2406 = vadd.f32 %v2293, %v2405
        %2407 = vmatprep.mubr.bf16.mxu0 0
        %2408 = vmatmul.mubr.bf16.gmra.mrb[0].mxu0 %v618
        %v2409 = vpop.f32.mrb[0].mxu0
        %v2410 = vadd.f32 %v2297, %v2409
        %v2411 = vpop.f32.mrb[0].mxu0
        %v2412 = vadd.f32 %v2299, %v2411
        %v2413 = vpop.f32.mrb[0].mxu0
        %v2414 = vadd.f32 %v2301, %v2413
        %v2415 = vpop.f32.mrb[0].mxu0
        %v2416 = vadd.f32 %v2303, %v2415
        %2417 = vmatprep.mubr.bf16.mxu0 0
        %2418 = vmatmul.mubr.bf16.gmra.mrb[0].mxu0 %v621
        %v2419 = vpop.f32.mrb[0].mxu0
        %v2420 = vadd.f32 %v2307, %v2419
        %v2421 = vpop.f32.mrb[0].mxu0
        %v2422 = vadd.f32 %v2309, %v2421
        %v2423 = vpop.f32.mrb[0].mxu0
        %v2424 = vadd.f32 %v2311, %v2423
        %v2425 = vpop.f32.mrb[0].mxu0
        %v2426 = vadd.f32 %v2313, %v2425
        %2427 = vdwg.mxu0
        %2428 = vmatprep.subr.bf16.mxu0 %v1325
        %2429 = vmatpush1.bf16.msra.mxu0 %v1324
        %2430 = vmatprep.subr.bf16.mxu0 %v1334
        %2431 = vmatpush1.bf16.msra.mxu0 %v1333
        %2432 = vmatprep.subr.bf16.mxu0 %v1343
        %2433 = vmatpush1.bf16.msra.mxu0 %v1342
        %2434 = vmatprep.subr.bf16.mxu0 %v1352
        %2435 = vmatpush1.bf16.msra.mxu0 %v1351
        %2436 = vmatprep.subr.bf16.mxu0 %v1361
        %2437 = vmatpush1.bf16.msra.mxu0 %v1360
        %2438 = vmatprep.subr.bf16.mxu0 %v1370
        %2439 = vmatpush1.bf16.msra.mxu0 %v1369
        %2440 = vmatprep.subr.bf16.mxu0 %v1379
        %2441 = vmatpush1.bf16.msra.mxu0 %v1378
        %2442 = vmatprep.subr.bf16.mxu0 %v1388
        %2443 = vmatpush1.bf16.msra.mxu0 %v1387
        %2444 = vmatprep.subr.bf16.mxu0 %v1397
        %2445 = vmatpush1.bf16.msra.mxu0 %v1396
        %2446 = vmatprep.subr.bf16.mxu0 %v1406
        %2447 = vmatpush1.bf16.msra.mxu0 %v1405
        %2448 = vmatprep.subr.bf16.mxu0 %v1415
        %2449 = vmatpush1.bf16.msra.mxu0 %v1414
        %2450 = vmatprep.subr.bf16.mxu0 %v1424
        %2451 = vmatpush1.bf16.msra.mxu0 %v1423
        %2452 = vmatprep.subr.bf16.mxu0 %v1433
        %2453 = vmatpush1.bf16.msra.mxu0 %v1432
        %2454 = vmatprep.subr.bf16.mxu0 %v1442
        %2455 = vmatpush1.bf16.msra.mxu0 %v1441
        %2456 = vmatprep.subr.bf16.mxu0 %v1451
        %2457 = vmatpush1.bf16.msra.mxu0 %v1450
        %2458 = vmatprep.subr.bf16.mxu0 %v1460
        %2459 = vmatpush1.bf16.msra.mxu0 %v1459
        %2460 = vmatprep.mubr.bf16.mxu0 %v599
        %2461 = vmatmul.mubr.bf16.gmra.mrb[0].mxu0 %v598
        %v2462 = vpop.f32.mrb[0].mxu0
        %v2463 = vadd.f32 0.0, %v2462
        %v2464 = vpop.f32.mrb[0].mxu0
        %v2465 = vadd.f32 0.0, %v2464
        %v2466 = vpop.f32.mrb[0].mxu0
        %v2467 = vadd.f32 0.0, %v2466
        %v2468 = vpop.f32.mrb[0].mxu0
        %v2469 = vadd.f32 0.0, %v2468
        %2470 = vmatprep.mubr.bf16.mxu0 %v602
        %2471 = vmatmul.mubr.bf16.gmra.mrb[0].mxu0 %v601
        %v2472 = vpop.f32.mrb[0].mxu0
        %v2473 = vadd.f32 0.0, %v2472
        %v2474 = vpop.f32.mrb[0].mxu0
        %v2475 = vadd.f32 0.0, %v2474
        %v2476 = vpop.f32.mrb[0].mxu0
        %v2477 = vadd.f32 0.0, %v2476
        %v2478 = vpop.f32.mrb[0].mxu0
        %v2479 = vadd.f32 0.0, %v2478
        %2480 = vmatprep.mubr.bf16.mxu0 %v605
        %2481 = vmatmul.mubr.bf16.gmra.mrb[0].mxu0 %v604
        %v2482 = vpop.f32.mrb[0].mxu0
        %v2483 = vadd.f32 0.0, %v2482
        %v2484 = vpop.f32.mrb[0].mxu0
        %v2485 = vadd.f32 0.0, %v2484
        %v2486 = vpop.f32.mrb[0].mxu0
        %v2487 = vadd.f32 0.0, %v2486
        %v2488 = vpop.f32.mrb[0].mxu0
        %v2489 = vadd.f32 0.0, %v2488
        %2490 = vmatprep.mubr.bf16.mxu0 %v608
        %2491 = vmatmul.mubr.bf16.gmra.mrb[0].mxu0 %v607
        %v2492 = vpop.f32.mrb[0].mxu0
        %v2493 = vadd.f32 0.0, %v2492
        %v2494 = vpop.f32.mrb[0].mxu0
        %v2495 = vadd.f32 0.0, %v2494
        %v2496 = vpop.f32.mrb[0].mxu0
        %v2497 = vadd.f32 0.0, %v2496
        %v2498 = vpop.f32.mrb[0].mxu0
        %v2499 = vadd.f32 0.0, %v2498
        %2500 = vmatprep.mubr.bf16.mxu0 %v611
        %2501 = vmatmul.mubr.bf16.gmra.mrb[0].mxu0 %v610
        %v2502 = vpop.f32.mrb[0].mxu0
        %v2503 = vadd.f32 0.0, %v2502
        %v2504 = vpop.f32.mrb[0].mxu0
        %v2505 = vadd.f32 0.0, %v2504
        %v2506 = vpop.f32.mrb[0].mxu0
        %v2507 = vadd.f32 0.0, %v2506
        %v2508 = vpop.f32.mrb[0].mxu0
        %v2509 = vadd.f32 0.0, %v2508
        %2510 = vmatprep.mubr.bf16.mxu0 %v614
        %2511 = vmatmul.mubr.bf16.gmra.mrb[0].mxu0 %v613
        %v2512 = vpop.f32.mrb[0].mxu0
        %v2513 = vadd.f32 0.0, %v2512
        %v2514 = vpop.f32.mrb[0].mxu0
        %v2515 = vadd.f32 0.0, %v2514
        %v2516 = vpop.f32.mrb[0].mxu0
        %v2517 = vadd.f32 0.0, %v2516
        %v2518 = vpop.f32.mrb[0].mxu0
        %v2519 = vadd.f32 0.0, %v2518
        %2520 = vmatprep.mubr.bf16.mxu0 %v617
        %2521 = vmatmul.mubr.bf16.gmra.mrb[0].mxu0 %v616
        %v2522 = vpop.f32.mrb[0].mxu0
        %v2523 = vadd.f32 0.0, %v2522
        %v2524 = vpop.f32.mrb[0].mxu0
        %v2525 = vadd.f32 0.0, %v2524
        %v2526 = vpop.f32.mrb[0].mxu0
        %v2527 = vadd.f32 0.0, %v2526
        %v2528 = vpop.f32.mrb[0].mxu0
        %v2529 = vadd.f32 0.0, %v2528
        %2530 = vmatprep.mubr.bf16.mxu0 %v620
        %2531 = vmatmul.mubr.bf16.gmra.mrb[0].mxu0 %v619
        %v2532 = vpop.f32.mrb[0].mxu0
        %v2533 = vadd.f32 0.0, %v2532
        %v2534 = vpop.f32.mrb[0].mxu0
        %v2535 = vadd.f32 0.0, %v2534
        %v2536 = vpop.f32.mrb[0].mxu0
        %v2537 = vadd.f32 0.0, %v2536
        %v2538 = vpop.f32.mrb[0].mxu0
        %v2539 = vadd.f32 0.0, %v2538
        %2540 = vdwg.mxu0
        %2541 = vmatprep.subr.bf16.mxu0 %v1469
        %2542 = vmatpush1.bf16.msra.mxu0 %v1468
        %2543 = vmatprep.subr.bf16.mxu0 %v1478
        %2544 = vmatpush1.bf16.msra.mxu0 %v1477
        %2545 = vmatprep.subr.bf16.mxu0 %v1487
        %2546 = vmatpush1.bf16.msra.mxu0 %v1486
        %2547 = vmatprep.subr.bf16.mxu0 %v1496
        %2548 = vmatpush1.bf16.msra.mxu0 %v1495
        %2549 = vmatprep.subr.bf16.mxu0 %v1505
        %2550 = vmatpush1.bf16.msra.mxu0 %v1504
        %2551 = vmatprep.subr.bf16.mxu0 %v1514
        %2552 = vmatpush1.bf16.msra.mxu0 %v1513
        %2553 = vmatprep.subr.bf16.mxu0 %v1523
        %2554 = vmatpush1.bf16.msra.mxu0 %v1522
        %2555 = vmatprep.subr.bf16.mxu0 %v1532
        %2556 = vmatpush1.bf16.msra.mxu0 %v1531
        %2557 = vmatprep.subr.bf16.mxu0 0
        %2558 = vmatpush1.bf16.msra.mxu0 0
        %2559 = vmatprep.subr.bf16.mxu0 0
        %2560 = vmatpush1.bf16.msra.mxu0 0
        %2561 = vmatprep.subr.bf16.mxu0 0
        %2562 = vmatpush1.bf16.msra.mxu0 0
        %2563 = vmatprep.subr.bf16.mxu0 0
        %2564 = vmatpush1.bf16.msra.mxu0 0
        %2565 = vmatprep.subr.bf16.mxu0 0
        %2566 = vmatpush1.bf16.msra.mxu0 0
        %2567 = vmatprep.subr.bf16.mxu0 0
        %2568 = vmatpush1.bf16.msra.mxu0 0
        %2569 = vmatprep.subr.bf16.mxu0 0
        %2570 = vmatpush1.bf16.msra.mxu0 0
        %2571 = vmatprep.subr.bf16.mxu0 0
        %2572 = vmatpush1.bf16.msra.mxu0 0
        %2573 = vmatprep.mubr.bf16.mxu0 0
        %2574 = vmatmul.mubr.bf16.gmra.mrb[0].mxu0 %v600
        %v2575 = vpop.f32.mrb[0].mxu0
        %v2576 = vadd.f32 %v2463, %v2575
        %v2577 = vpop.f32.mrb[0].mxu0
        %v2578 = vadd.f32 %v2465, %v2577
        %v2579 = vpop.f32.mrb[0].mxu0
        %v2580 = vadd.f32 %v2467, %v2579
        %v2581 = vpop.f32.mrb[0].mxu0
        %v2582 = vadd.f32 %v2469, %v2581
        %2583 = vmatprep.mubr.bf16.mxu0 0
        %2584 = vmatmul.mubr.bf16.gmra.mrb[0].mxu0 %v603
        %v2585 = vpop.f32.mrb[0].mxu0
        %v2586 = vadd.f32 %v2473, %v2585
        %v2587 = vpop.f32.mrb[0].mxu0
        %v2588 = vadd.f32 %v2475, %v2587
        %v2589 = vpop.f32.mrb[0].mxu0
        %v2590 = vadd.f32 %v2477, %v2589
        %v2591 = vpop.f32.mrb[0].mxu0
        %v2592 = vadd.f32 %v2479, %v2591
        %2593 = vmatprep.mubr.bf16.mxu0 0
        %2594 = vmatmul.mubr.bf16.gmra.mrb[0].mxu0 %v606
        %v2595 = vpop.f32.mrb[0].mxu0
        %v2596 = vadd.f32 %v2483, %v2595
        %v2597 = vpop.f32.mrb[0].mxu0
        %v2598 = vadd.f32 %v2485, %v2597
        %v2599 = vpop.f32.mrb[0].mxu0
        %v2600 = vadd.f32 %v2487, %v2599
        %v2601 = vpop.f32.mrb[0].mxu0
        %v2602 = vadd.f32 %v2489, %v2601
        %2603 = vmatprep.mubr.bf16.mxu0 0
        %2604 = vmatmul.mubr.bf16.gmra.mrb[0].mxu0 %v609
        %v2605 = vpop.f32.mrb[0].mxu0
        %v2606 = vadd.f32 %v2493, %v2605
        %v2607 = vpop.f32.mrb[0].mxu0
        %v2608 = vadd.f32 %v2495, %v2607
        %v2609 = vpop.f32.mrb[0].mxu0
        %v2610 = vadd.f32 %v2497, %v2609
        %v2611 = vpop.f32.mrb[0].mxu0
        %v2612 = vadd.f32 %v2499, %v2611
        %2613 = vmatprep.mubr.bf16.mxu0 0
        %2614 = vmatmul.mubr.bf16.gmra.mrb[0].mxu0 %v612
        %v2615 = vpop.f32.mrb[0].mxu0
        %v2616 = vadd.f32 %v2503, %v2615
        %v2617 = vpop.f32.mrb[0].mxu0
        %v2618 = vadd.f32 %v2505, %v2617
        %v2619 = vpop.f32.mrb[0].mxu0
        %v2620 = vadd.f32 %v2507, %v2619
        %v2621 = vpop.f32.mrb[0].mxu0
        %v2622 = vadd.f32 %v2509, %v2621
        %2623 = vmatprep.mubr.bf16.mxu0 0
        %2624 = vmatmul.mubr.bf16.gmra.mrb[0].mxu0 %v615
        %v2625 = vpop.f32.mrb[0].mxu0
        %v2626 = vadd.f32 %v2513, %v2625
        %v2627 = vpop.f32.mrb[0].mxu0
        %v2628 = vadd.f32 %v2515, %v2627
        %v2629 = vpop.f32.mrb[0].mxu0
        %v2630 = vadd.f32 %v2517, %v2629
        %v2631 = vpop.f32.mrb[0].mxu0
        %v2632 = vadd.f32 %v2519, %v2631
        %2633 = vmatprep.mubr.bf16.mxu0 0
        %2634 = vmatmul.mubr.bf16.gmra.mrb[0].mxu0 %v618
        %v2635 = vpop.f32.mrb[0].mxu0
        %v2636 = vadd.f32 %v2523, %v2635
        %v2637 = vpop.f32.mrb[0].mxu0
        %v2638 = vadd.f32 %v2525, %v2637
        %v2639 = vpop.f32.mrb[0].mxu0
        %v2640 = vadd.f32 %v2527, %v2639
        %v2641 = vpop.f32.mrb[0].mxu0
        %v2642 = vadd.f32 %v2529, %v2641
        %2643 = vmatprep.mubr.bf16.mxu0 0
        %2644 = vmatmul.mubr.bf16.gmra.mrb[0].mxu0 %v621
        %v2645 = vpop.f32.mrb[0].mxu0
        %v2646 = vadd.f32 %v2533, %v2645
        %v2647 = vpop.f32.mrb[0].mxu0
        %v2648 = vadd.f32 %v2535, %v2647
        %v2649 = vpop.f32.mrb[0].mxu0
        %v2650 = vadd.f32 %v2537, %v2649
        %v2651 = vpop.f32.mrb[0].mxu0
        %v2652 = vadd.f32 %v2539, %v2651
        %2653 = vdwg.mxu0
        %2654 = vmatprep.subr.bf16.mxu0 0
        %2655 = vmatpush1.bf16.msra.mxu0 %v1326
        %2656 = vmatprep.subr.bf16.mxu0 0
        %2657 = vmatpush1.bf16.msra.mxu0 %v1335
        %2658 = vmatprep.subr.bf16.mxu0 0
        %2659 = vmatpush1.bf16.msra.mxu0 %v1344
        %2660 = vmatprep.subr.bf16.mxu0 0
        %2661 = vmatpush1.bf16.msra.mxu0 %v1353
        %2662 = vmatprep.subr.bf16.mxu0 0
        %2663 = vmatpush1.bf16.msra.mxu0 %v1362
        %2664 = vmatprep.subr.bf16.mxu0 0
        %2665 = vmatpush1.bf16.msra.mxu0 %v1371
        %2666 = vmatprep.subr.bf16.mxu0 0
        %2667 = vmatpush1.bf16.msra.mxu0 %v1380
        %2668 = vmatprep.subr.bf16.mxu0 0
        %2669 = vmatpush1.bf16.msra.mxu0 %v1389
        %2670 = vmatprep.subr.bf16.mxu0 0
        %2671 = vmatpush1.bf16.msra.mxu0 %v1398
        %2672 = vmatprep.subr.bf16.mxu0 0
        %2673 = vmatpush1.bf16.msra.mxu0 %v1407
        %2674 = vmatprep.subr.bf16.mxu0 0
        %2675 = vmatpush1.bf16.msra.mxu0 %v1416
        %2676 = vmatprep.subr.bf16.mxu0 0
        %2677 = vmatpush1.bf16.msra.mxu0 %v1425
        %2678 = vmatprep.subr.bf16.mxu0 0
        %2679 = vmatpush1.bf16.msra.mxu0 %v1434
        %2680 = vmatprep.subr.bf16.mxu0 0
        %2681 = vmatpush1.bf16.msra.mxu0 %v1443
        %2682 = vmatprep.subr.bf16.mxu0 0
        %2683 = vmatpush1.bf16.msra.mxu0 %v1452
        %2684 = vmatprep.subr.bf16.mxu0 0
        %2685 = vmatpush1.bf16.msra.mxu0 %v1461
        %2686 = vmatprep.mubr.bf16.mxu0 %v599
        %2687 = vmatmul.mubr.bf16.gmra.mrb[0].mxu0 %v598
        %v2688 = vpop.f32.mrb[0].mxu0
        %v2689 = vadd.f32 0.0, %v2688
        %v2690 = vpop.f32.mrb[0].mxu0
        %v2691 = vpop.f32.mrb[0].mxu0
        %v2692 = vadd.f32 0.0, %v2691
        %v2693 = vpop.f32.mrb[0].mxu0
        %2694 = vmatprep.mubr.bf16.mxu0 %v602
        %2695 = vmatmul.mubr.bf16.gmra.mrb[0].mxu0 %v601
        %v2696 = vpop.f32.mrb[0].mxu0
        %v2697 = vadd.f32 0.0, %v2696
        %v2698 = vpop.f32.mrb[0].mxu0
        %v2699 = vpop.f32.mrb[0].mxu0
        %v2700 = vadd.f32 0.0, %v2699
        %v2701 = vpop.f32.mrb[0].mxu0
        %2702 = vmatprep.mubr.bf16.mxu0 %v605
        %2703 = vmatmul.mubr.bf16.gmra.mrb[0].mxu0 %v604
        %v2704 = vpop.f32.mrb[0].mxu0
        %v2705 = vadd.f32 0.0, %v2704
        %v2706 = vpop.f32.mrb[0].mxu0
        %v2707 = vpop.f32.mrb[0].mxu0
        %v2708 = vadd.f32 0.0, %v2707
        %v2709 = vpop.f32.mrb[0].mxu0
        %2710 = vmatprep.mubr.bf16.mxu0 %v608
        %2711 = vmatmul.mubr.bf16.gmra.mrb[0].mxu0 %v607
        %v2712 = vpop.f32.mrb[0].mxu0
        %v2713 = vadd.f32 0.0, %v2712
        %v2714 = vpop.f32.mrb[0].mxu0
        %v2715 = vpop.f32.mrb[0].mxu0
        %v2716 = vadd.f32 0.0, %v2715
        %v2717 = vpop.f32.mrb[0].mxu0
        %2718 = vmatprep.mubr.bf16.mxu0 %v611
        %2719 = vmatmul.mubr.bf16.gmra.mrb[0].mxu0 %v610
        %v2720 = vpop.f32.mrb[0].mxu0
        %v2721 = vadd.f32 0.0, %v2720
        %v2722 = vpop.f32.mrb[0].mxu0
        %v2723 = vpop.f32.mrb[0].mxu0
        %v2724 = vadd.f32 0.0, %v2723
        %v2725 = vpop.f32.mrb[0].mxu0
        %2726 = vmatprep.mubr.bf16.mxu0 %v614
        %2727 = vmatmul.mubr.bf16.gmra.mrb[0].mxu0 %v613
        %v2728 = vpop.f32.mrb[0].mxu0
        %v2729 = vadd.f32 0.0, %v2728
        %v2730 = vpop.f32.mrb[0].mxu0
        %v2731 = vpop.f32.mrb[0].mxu0
        %v2732 = vadd.f32 0.0, %v2731
        %v2733 = vpop.f32.mrb[0].mxu0
        %2734 = vmatprep.mubr.bf16.mxu0 %v617
        %2735 = vmatmul.mubr.bf16.gmra.mrb[0].mxu0 %v616
        %v2736 = vpop.f32.mrb[0].mxu0
        %v2737 = vadd.f32 0.0, %v2736
        %v2738 = vpop.f32.mrb[0].mxu0
        %v2739 = vpop.f32.mrb[0].mxu0
        %v2740 = vadd.f32 0.0, %v2739
        %v2741 = vpop.f32.mrb[0].mxu0
        %2742 = vmatprep.mubr.bf16.mxu0 %v620
        %2743 = vmatmul.mubr.bf16.gmra.mrb[0].mxu0 %v619
        %v2744 = vpop.f32.mrb[0].mxu0
        %v2745 = vadd.f32 0.0, %v2744
        %v2746 = vpop.f32.mrb[0].mxu0
        %v2747 = vpop.f32.mrb[0].mxu0
        %v2748 = vadd.f32 0.0, %v2747
        %v2749 = vpop.f32.mrb[0].mxu0
        %2750 = vdwg.mxu0
        %2751 = vmatprep.subr.bf16.mxu0 0
        %2752 = vmatpush1.bf16.msra.mxu0 %v1470
        %2753 = vmatprep.subr.bf16.mxu0 0
        %2754 = vmatpush1.bf16.msra.mxu0 %v1479
        %2755 = vmatprep.subr.bf16.mxu0 0
        %2756 = vmatpush1.bf16.msra.mxu0 %v1488
        %2757 = vmatprep.subr.bf16.mxu0 0
        %2758 = vmatpush1.bf16.msra.mxu0 %v1497
        %2759 = vmatprep.subr.bf16.mxu0 0
        %2760 = vmatpush1.bf16.msra.mxu0 %v1506
        %2761 = vmatprep.subr.bf16.mxu0 0
        %2762 = vmatpush1.bf16.msra.mxu0 %v1515
        %2763 = vmatprep.subr.bf16.mxu0 0
        %2764 = vmatpush1.bf16.msra.mxu0 %v1524
        %2765 = vmatprep.subr.bf16.mxu0 0
        %2766 = vmatpush1.bf16.msra.mxu0 %v1533
        %2767 = vmatprep.subr.bf16.mxu0 0
        %2768 = vmatpush1.bf16.msra.mxu0 0
        %2769 = vmatprep.subr.bf16.mxu0 0
        %2770 = vmatpush1.bf16.msra.mxu0 0
        %2771 = vmatprep.subr.bf16.mxu0 0
        %2772 = vmatpush1.bf16.msra.mxu0 0
        %2773 = vmatprep.subr.bf16.mxu0 0
        %2774 = vmatpush1.bf16.msra.mxu0 0
        %2775 = vmatprep.subr.bf16.mxu0 0
        %2776 = vmatpush1.bf16.msra.mxu0 0
        %2777 = vmatprep.subr.bf16.mxu0 0
        %2778 = vmatpush1.bf16.msra.mxu0 0
        %2779 = vmatprep.subr.bf16.mxu0 0
        %2780 = vmatpush1.bf16.msra.mxu0 0
        %2781 = vmatprep.subr.bf16.mxu0 0
        %2782 = vmatpush1.bf16.msra.mxu0 0
        %2783 = vmatprep.mubr.bf16.mxu0 0
        %2784 = vmatmul.mubr.bf16.gmra.mrb[0].mxu0 %v600
        %v2785 = vpop.f32.mrb[0].mxu0
        %v2786 = vadd.f32 %v2689, %v2785
        %v2787 = vpop.f32.mrb[0].mxu0
        %v2788 = vpop.f32.mrb[0].mxu0
        %v2789 = vadd.f32 %v2692, %v2788
        %v2790 = vpop.f32.mrb[0].mxu0
        %2791 = vmatprep.mubr.bf16.mxu0 0
        %2792 = vmatmul.mubr.bf16.gmra.mrb[0].mxu0 %v603
        %v2793 = vpop.f32.mrb[0].mxu0
        %v2794 = vadd.f32 %v2697, %v2793
        %v2795 = vpop.f32.mrb[0].mxu0
        %v2796 = vpop.f32.mrb[0].mxu0
        %v2797 = vadd.f32 %v2700, %v2796
        %v2798 = vpop.f32.mrb[0].mxu0
        %2799 = vmatprep.mubr.bf16.mxu0 0
        %2800 = vmatmul.mubr.bf16.gmra.mrb[0].mxu0 %v606
        %v2801 = vpop.f32.mrb[0].mxu0
        %v2802 = vadd.f32 %v2705, %v2801
        %v2803 = vpop.f32.mrb[0].mxu0
        %v2804 = vpop.f32.mrb[0].mxu0
        %v2805 = vadd.f32 %v2708, %v2804
        %v2806 = vpop.f32.mrb[0].mxu0
        %2807 = vmatprep.mubr.bf16.mxu0 0
        %2808 = vmatmul.mubr.bf16.gmra.mrb[0].mxu0 %v609
        %v2809 = vpop.f32.mrb[0].mxu0
        %v2810 = vadd.f32 %v2713, %v2809
        %v2811 = vpop.f32.mrb[0].mxu0
        %v2812 = vpop.f32.mrb[0].mxu0
        %v2813 = vadd.f32 %v2716, %v2812
        %v2814 = vpop.f32.mrb[0].mxu0
        %2815 = vmatprep.mubr.bf16.mxu0 0
        %2816 = vmatmul.mubr.bf16.gmra.mrb[0].mxu0 %v612
        %v2817 = vpop.f32.mrb[0].mxu0
        %v2818 = vadd.f32 %v2721, %v2817
        %v2819 = vpop.f32.mrb[0].mxu0
        %v2820 = vpop.f32.mrb[0].mxu0
        %v2821 = vadd.f32 %v2724, %v2820
        %v2822 = vpop.f32.mrb[0].mxu0
        %2823 = vmatprep.mubr.bf16.mxu0 0
        %2824 = vmatmul.mubr.bf16.gmra.mrb[0].mxu0 %v615
        %v2825 = vpop.f32.mrb[0].mxu0
        %v2826 = vadd.f32 %v2729, %v2825
        %v2827 = vpop.f32.mrb[0].mxu0
        %v2828 = vpop.f32.mrb[0].mxu0
        %v2829 = vadd.f32 %v2732, %v2828
        %v2830 = vpop.f32.mrb[0].mxu0
        %2831 = vmatprep.mubr.bf16.mxu0 0
        %2832 = vmatmul.mubr.bf16.gmra.mrb[0].mxu0 %v618
        %v2833 = vpop.f32.mrb[0].mxu0
        %v2834 = vadd.f32 %v2737, %v2833
        %v2835 = vpop.f32.mrb[0].mxu0
        %v2836 = vpop.f32.mrb[0].mxu0
        %v2837 = vadd.f32 %v2740, %v2836
        %v2838 = vpop.f32.mrb[0].mxu0
        %2839 = vmatprep.mubr.bf16.mxu0 0
        %2840 = vmatmul.mubr.bf16.gmra.mrb[0].mxu0 %v621
        %v2841 = vpop.f32.mrb[0].mxu0
        %v2842 = vadd.f32 %v2745, %v2841
        %v2843 = vpop.f32.mrb[0].mxu0
        %v2844 = vpop.f32.mrb[0].mxu0
        %v2845 = vadd.f32 %v2748, %v2844
        %v2846 = vpop.f32.mrb[0].mxu0
        %2847 = vdwg.mxu0
        %v2848 = vlaneseq
        %v2849 = vshrl.u32 %v2848, 7
        %v2850 = vadd.s32 %v2849, 8
        %v2851 = vadd.s32 %v2849, 16
        %v2852 = vadd.s32 %v2849, 24
        %v2853 = vadd.s32 %v2849, 32
        %v2854 = vadd.s32 %v2849, 40
        %v2855 = vadd.s32 %v2849, 48
        %v2856 = vadd.s32 %v2849, 56
        %v2857 = vadd.s32 %v2849, 64
        %v2858 = vadd.s32 %v2849, 72
        %v2859 = vadd.s32 %v2849, 80
        %v2860 = vadd.s32 %v2849, 88
        %v2861 = vadd.s32 %v2849, 96
        %v2862 = vadd.s32 %v2849, 104
        %v2863 = vadd.s32 %v2849, 112
        %v2864 = vadd.s32 %v2849, 120
        %v2865 = vlaneseq
        %v2866 = vand.u32 %v2865, 127
        %vm2867 = vcmp.le.s32.totalorder %v2866, %v2849
        %vm2868 = vcmp.le.s32.totalorder %v2866, %v2850
        %vm2869 = vcmp.le.s32.totalorder %v2866, %v2851
        %vm2870 = vcmp.le.s32.totalorder %v2866, %v2852
        %vm2871 = vcmp.le.s32.totalorder %v2866, %v2853
        %vm2872 = vcmp.le.s32.totalorder %v2866, %v2854
        %vm2873 = vcmp.le.s32.totalorder %v2866, %v2855
        %vm2874 = vcmp.le.s32.totalorder %v2866, %v2856
        %vm2875 = vcmp.le.s32.totalorder %v2866, %v2857
        %vm2876 = vcmp.le.s32.totalorder %v2866, %v2858
        %vm2877 = vcmp.le.s32.totalorder %v2866, %v2859
        %vm2878 = vcmp.le.s32.totalorder %v2866, %v2860
        %vm2879 = vcmp.le.s32.totalorder %v2866, %v2861
        %vm2880 = vcmp.le.s32.totalorder %v2866, %v2862
        %vm2881 = vcmp.le.s32.totalorder %v2866, %v2863
        %vm2882 = vcmp.le.s32.totalorder %v2866, %v2864
        %v2883 = vpack.c.bf16 %v1902, %v1898
        %v2884 = vpack.c.bf16 %v1912, %v1908
        %v2885 = vpack.c.bf16 %v1922, %v1918
        %v2886 = vpack.c.bf16 %v1932, %v1928
        %v2887 = vpack.c.bf16 %v1942, %v1938
        %v2888 = vpack.c.bf16 %v1952, %v1948
        %v2889 = vpack.c.bf16 %v1962, %v1958
        %v2890 = vpack.c.bf16 %v1972, %v1968
        %v2891 = vpack.c.bf16 %v2130, %v2126
        %v2892 = vpack.c.bf16 %v2140, %v2136
        %v2893 = vpack.c.bf16 %v2150, %v2146
        %v2894 = vpack.c.bf16 %v2160, %v2156
        %v2895 = vpack.c.bf16 %v2170, %v2166
        %v2896 = vpack.c.bf16 %v2180, %v2176
        %v2897 = vpack.c.bf16 %v2190, %v2186
        %v2898 = vpack.c.bf16 %v2200, %v2196
        %v2899 = vpack.c.bf16 %v2580, %v2576
        %v2900 = vpack.c.bf16 %v2590, %v2586
        %v2901 = vpack.c.bf16 %v2600, %v2596
        %v2902 = vpack.c.bf16 %v2610, %v2606
        %v2903 = vpack.c.bf16 %v2620, %v2616
        %v2904 = vpack.c.bf16 %v2630, %v2626
        %v2905 = vpack.c.bf16 %v2640, %v2636
        %v2906 = vpack.c.bf16 %v2650, %v2646
        %vm2907 = vcmask 785408
        %v2909 = vsel %vm2907, %v2883, 0
        %v2912 = vsel %vm2907, %v2884, 0
        %v2915 = vsel %vm2907, %v2885, 0
        %v2918 = vsel %vm2907, %v2886, 0
        %v2921 = vsel %vm2907, %v2887, 0
        %v2924 = vsel %vm2907, %v2888, 0
        %v2927 = vsel %vm2907, %v2889, 0
        %v2930 = vsel %vm2907, %v2890, 0
        %v2933 = vsel %vm2907, %v2891, 0
        %v2936 = vsel %vm2907, %v2892, 0
        %v2939 = vsel %vm2907, %v2893, 0
        %v2942 = vsel %vm2907, %v2894, 0
        %v2945 = vsel %vm2907, %v2895, 0
        %v2948 = vsel %vm2907, %v2896, 0
        %v2951 = vsel %vm2907, %v2897, 0
        %v2954 = vsel %vm2907, %v2898, 0
        %2956 = vmatprep.subr.bf16.mxu0 0
        %2957 = vmatpush1.bf16.xpose.msra.mxu0 %v2933
        %2958 = vmatprep.subr.bf16.mxu0 0
        %2959 = vmatpush1.bf16.xpose.msra.mxu0 %v2936
        %2960 = vmatprep.subr.bf16.mxu0 0
        %2961 = vmatpush1.bf16.xpose.msra.mxu0 %v2939
        %2962 = vmatprep.subr.bf16.mxu0 0
        %2963 = vmatpush1.bf16.xpose.msra.mxu0 %v2942
        %2964 = vmatprep.subr.bf16.mxu0 0
        %2965 = vmatpush1.bf16.xpose.msra.mxu0 %v2945
        %2966 = vmatprep.subr.bf16.mxu0 0
        %2967 = vmatpush1.bf16.xpose.msra.mxu0 %v2948
        %2968 = vmatprep.subr.bf16.mxu0 0
        %2969 = vmatpush1.bf16.xpose.msra.mxu0 %v2951
        %2970 = vmatprep.subr.bf16.mxu0 0
        %2971 = vmatpush1.bf16.xpose.msra.mxu0 %v2954
        %2972 = vmatprep.subr.bf16.mxu0 0
        %2973 = vmatpush1.bf16.xpose.msra.mxu0 0
        %2974 = vmatprep.subr.bf16.mxu0 0
        %2975 = vmatpush1.bf16.xpose.msra.mxu0 0
        %2976 = vmatprep.subr.bf16.mxu0 0
        %2977 = vmatpush1.bf16.xpose.msra.mxu0 0
        %2978 = vmatprep.subr.bf16.mxu0 0
        %2979 = vmatpush1.bf16.xpose.msra.mxu0 0
        %2980 = vmatprep.subr.bf16.mxu0 0
        %2981 = vmatpush1.bf16.xpose.msra.mxu0 0
        %2982 = vmatprep.subr.bf16.mxu0 0
        %2983 = vmatpush1.bf16.xpose.msra.mxu0 0
        %2984 = vmatprep.subr.bf16.mxu0 0
        %2985 = vmatpush1.bf16.xpose.msra.mxu0 0
        %2986 = vmatprep.subr.bf16.mxu0 0
        %2987 = vmatpush1.bf16.xpose.msra.mxu0 0
        %2988 = vmatprep.mubr.bf16.mxu0 0
        %2989 = vmatmul.mubr.bf16.gmra.mrb[0].mxu0 %v2909
        %v2990 = vpop.f32.mrb[0].mxu0
        %v2991 = vadd.f32 0.0, %v2990
        %v2992 = vpop.f32.mrb[0].mxu0
        %v2993 = vpop.f32.mrb[0].mxu0
        %v2994 = vadd.f32 0.0, %v2993
        %v2995 = vpop.f32.mrb[0].mxu0
        %2996 = vmatprep.mubr.bf16.mxu0 0
        %2997 = vmatmul.mubr.bf16.gmra.mrb[0].mxu0 %v2912
        %v2998 = vpop.f32.mrb[0].mxu0
        %v2999 = vadd.f32 0.0, %v2998
        %v3000 = vpop.f32.mrb[0].mxu0
        %v3001 = vpop.f32.mrb[0].mxu0
        %v3002 = vadd.f32 0.0, %v3001
        %v3003 = vpop.f32.mrb[0].mxu0
        %3004 = vmatprep.mubr.bf16.mxu0 0
        %3005 = vmatmul.mubr.bf16.gmra.mrb[0].mxu0 %v2915
        %v3006 = vpop.f32.mrb[0].mxu0
        %v3007 = vadd.f32 0.0, %v3006
        %v3008 = vpop.f32.mrb[0].mxu0
        %v3009 = vpop.f32.mrb[0].mxu0
        %v3010 = vadd.f32 0.0, %v3009
        %v3011 = vpop.f32.mrb[0].mxu0
        %3012 = vmatprep.mubr.bf16.mxu0 0
        %3013 = vmatmul.mubr.bf16.gmra.mrb[0].mxu0 %v2918
        %v3014 = vpop.f32.mrb[0].mxu0
        %v3015 = vadd.f32 0.0, %v3014
        %v3016 = vpop.f32.mrb[0].mxu0
        %v3017 = vpop.f32.mrb[0].mxu0
        %v3018 = vadd.f32 0.0, %v3017
        %v3019 = vpop.f32.mrb[0].mxu0
        %3020 = vmatprep.mubr.bf16.mxu0 0
        %3021 = vmatmul.mubr.bf16.gmra.mrb[0].mxu0 %v2921
        %v3022 = vpop.f32.mrb[0].mxu0
        %v3023 = vadd.f32 0.0, %v3022
        %v3024 = vpop.f32.mrb[0].mxu0
        %v3025 = vpop.f32.mrb[0].mxu0
        %v3026 = vadd.f32 0.0, %v3025
        %v3027 = vpop.f32.mrb[0].mxu0
        %3028 = vmatprep.mubr.bf16.mxu0 0
        %3029 = vmatmul.mubr.bf16.gmra.mrb[0].mxu0 %v2924
        %v3030 = vpop.f32.mrb[0].mxu0
        %v3031 = vadd.f32 0.0, %v3030
        %v3032 = vpop.f32.mrb[0].mxu0
        %v3033 = vpop.f32.mrb[0].mxu0
        %v3034 = vadd.f32 0.0, %v3033
        %v3035 = vpop.f32.mrb[0].mxu0
        %3036 = vmatprep.mubr.bf16.mxu0 0
        %3037 = vmatmul.mubr.bf16.gmra.mrb[0].mxu0 %v2927
        %v3038 = vpop.f32.mrb[0].mxu0
        %v3039 = vadd.f32 0.0, %v3038
        %v3040 = vpop.f32.mrb[0].mxu0
        %v3041 = vpop.f32.mrb[0].mxu0
        %v3042 = vadd.f32 0.0, %v3041
        %v3043 = vpop.f32.mrb[0].mxu0
        %3044 = vmatprep.mubr.bf16.mxu0 0
        %3045 = vmatmul.mubr.bf16.gmra.mrb[0].mxu0 %v2930
        %v3046 = vpop.f32.mrb[0].mxu0
        %v3047 = vadd.f32 0.0, %v3046
        %v3048 = vpop.f32.mrb[0].mxu0
        %v3049 = vpop.f32.mrb[0].mxu0
        %v3050 = vadd.f32 0.0, %v3049
        %v3051 = vpop.f32.mrb[0].mxu0
        %3052 = vdwg.mxu0
        %v3053 = vsel %vm2867, %v2991, -1e+30
        %v3054 = vsel %vm2868, %v2994, -1e+30
        %v3055 = vsel %vm2869, %v2999, -1e+30
        %v3056 = vsel %vm2870, %v3002, -1e+30
        %v3057 = vsel %vm2871, %v3007, -1e+30
        %v3058 = vsel %vm2872, %v3010, -1e+30
        %v3059 = vsel %vm2873, %v3015, -1e+30
        %v3060 = vsel %vm2874, %v3018, -1e+30
        %v3061 = vsel %vm2875, %v3023, -1e+30
        %v3062 = vsel %vm2876, %v3026, -1e+30
        %v3063 = vsel %vm2877, %v3031, -1e+30
        %v3064 = vsel %vm2878, %v3034, -1e+30
        %v3065 = vsel %vm2879, %v3039, -1e+30
        %v3066 = vsel %vm2880, %v3042, -1e+30
        %v3067 = vsel %vm2881, %v3047, -1e+30
        %v3068 = vsel %vm2882, %v3050, -1e+30
        %3069 = vmax.xlane.f32.xlu0 %v3053
        %v3070 = vpop.xlane.xlu0 %3069
        %3071 = vmax.xlane.f32.xlu0 %v3054
        %v3072 = vpop.xlane.xlu0 %3071
        %3073 = vmax.xlane.f32.xlu0 %v3055
        %v3074 = vpop.xlane.xlu0 %3073
        %3075 = vmax.xlane.f32.xlu0 %v3056
        %v3076 = vpop.xlane.xlu0 %3075
        %3077 = vmax.xlane.f32.xlu0 %v3057
        %v3078 = vpop.xlane.xlu0 %3077
        %3079 = vmax.xlane.f32.xlu0 %v3058
        %v3080 = vpop.xlane.xlu0 %3079
        %3081 = vmax.xlane.f32.xlu0 %v3059
        %v3082 = vpop.xlane.xlu0 %3081
        %3083 = vmax.xlane.f32.xlu0 %v3060
        %v3084 = vpop.xlane.xlu0 %3083
        %3085 = vmax.xlane.f32.xlu0 %v3061
        %v3086 = vpop.xlane.xlu0 %3085
        %3087 = vmax.xlane.f32.xlu0 %v3062
        %v3088 = vpop.xlane.xlu0 %3087
        %3089 = vmax.xlane.f32.xlu0 %v3063
        %v3090 = vpop.xlane.xlu0 %3089
        %3091 = vmax.xlane.f32.xlu0 %v3064
        %v3092 = vpop.xlane.xlu0 %3091
        %3093 = vmax.xlane.f32.xlu0 %v3065
        %v3094 = vpop.xlane.xlu0 %3093
        %3095 = vmax.xlane.f32.xlu0 %v3066
        %v3096 = vpop.xlane.xlu0 %3095
        %3097 = vmax.xlane.f32.xlu0 %v3067
        %v3098 = vpop.xlane.xlu0 %3097
        %3099 = vmax.xlane.f32.xlu0 %v3068
        %v3100 = vpop.xlane.xlu0 %3099
        %v3101 = vsub.f32 %v3053, %v3070
        %v3102 = vsub.f32 %v3054, %v3072
        %v3103 = vsub.f32 %v3055, %v3074
        %v3104 = vsub.f32 %v3056, %v3076
        %v3105 = vsub.f32 %v3057, %v3078
        %v3106 = vsub.f32 %v3058, %v3080
        %v3107 = vsub.f32 %v3059, %v3082
        %v3108 = vsub.f32 %v3060, %v3084
        %v3109 = vsub.f32 %v3061, %v3086
        %v3110 = vsub.f32 %v3062, %v3088
        %v3111 = vsub.f32 %v3063, %v3090
        %v3112 = vsub.f32 %v3064, %v3092
        %v3113 = vsub.f32 %v3065, %v3094
        %v3114 = vsub.f32 %v3066, %v3096
        %v3115 = vsub.f32 %v3067, %v3098
        %v3116 = vsub.f32 %v3068, %v3100
        %v3117 = vmul.f32 %v3101, 1.442695
        %v3118 = vpow.pop %v3117
        %v3119 = vmul.f32 %v3102, 1.442695
        %v3120 = vpow.pop %v3119
        %v3121 = vmul.f32 %v3103, 1.442695
        %v3122 = vpow.pop %v3121
        %v3123 = vmul.f32 %v3104, 1.442695
        %v3124 = vpow.pop %v3123
        %v3125 = vmul.f32 %v3105, 1.442695
        %v3126 = vpow.pop %v3125
        %v3127 = vmul.f32 %v3106, 1.442695
        %v3128 = vpow.pop %v3127
        %v3129 = vmul.f32 %v3107, 1.442695
        %v3130 = vpow.pop %v3129
        %v3131 = vmul.f32 %v3108, 1.442695
        %v3132 = vpow.pop %v3131
        %v3133 = vmul.f32 %v3109, 1.442695
        %v3134 = vpow.pop %v3133
        %v3135 = vmul.f32 %v3110, 1.442695
        %v3136 = vpow.pop %v3135
        %v3137 = vmul.f32 %v3111, 1.442695
        %v3138 = vpow.pop %v3137
        %v3139 = vmul.f32 %v3112, 1.442695
        %v3140 = vpow.pop %v3139
        %v3141 = vmul.f32 %v3113, 1.442695
        %v3142 = vpow.pop %v3141
        %v3143 = vmul.f32 %v3114, 1.442695
        %v3144 = vpow.pop %v3143
        %v3145 = vmul.f32 %v3115, 1.442695
        %v3146 = vpow.pop %v3145
        %v3147 = vmul.f32 %v3116, 1.442695
        %v3148 = vpow.pop %v3147
        %3149 = vadd.xlane.f32.xlu0 %v3118
        %v3150 = vpop.xlane.xlu0 %3149
        %3151 = vadd.xlane.f32.xlu0 %v3120
        %v3152 = vpop.xlane.xlu0 %3151
        %3153 = vadd.xlane.f32.xlu0 %v3122
        %v3154 = vpop.xlane.xlu0 %3153
        %3155 = vadd.xlane.f32.xlu0 %v3124
        %v3156 = vpop.xlane.xlu0 %3155
        %3157 = vadd.xlane.f32.xlu0 %v3126
        %v3158 = vpop.xlane.xlu0 %3157
        %3159 = vadd.xlane.f32.xlu0 %v3128
        %v3160 = vpop.xlane.xlu0 %3159
        %3161 = vadd.xlane.f32.xlu0 %v3130
        %v3162 = vpop.xlane.xlu0 %3161
        %3163 = vadd.xlane.f32.xlu0 %v3132
        %v3164 = vpop.xlane.xlu0 %3163
        %3165 = vadd.xlane.f32.xlu0 %v3134
        %v3166 = vpop.xlane.xlu0 %3165
        %3167 = vadd.xlane.f32.xlu0 %v3136
        %v3168 = vpop.xlane.xlu0 %3167
        %3169 = vadd.xlane.f32.xlu0 %v3138
        %v3170 = vpop.xlane.xlu0 %3169
        %3171 = vadd.xlane.f32.xlu0 %v3140
        %v3172 = vpop.xlane.xlu0 %3171
        %3173 = vadd.xlane.f32.xlu0 %v3142
        %v3174 = vpop.xlane.xlu0 %3173
        %3175 = vadd.xlane.f32.xlu0 %v3144
        %v3176 = vpop.xlane.xlu0 %3175
        %3177 = vadd.xlane.f32.xlu0 %v3146
        %v3178 = vpop.xlane.xlu0 %3177
        %3179 = vadd.xlane.f32.xlu0 %v3148
        %v3180 = vpop.xlane.xlu0 %3179
        %v3181 = vrcp.pop %v3150
        %v3182 = vrcp.pop %v3152
        %v3183 = vrcp.pop %v3154
        %v3184 = vrcp.pop %v3156
        %v3185 = vrcp.pop %v3158
        %v3186 = vrcp.pop %v3160
        %v3187 = vrcp.pop %v3162
        %v3188 = vrcp.pop %v3164
        %v3189 = vrcp.pop %v3166
        %v3190 = vrcp.pop %v3168
        %v3191 = vrcp.pop %v3170
        %v3192 = vrcp.pop %v3172
        %v3193 = vrcp.pop %v3174
        %v3194 = vrcp.pop %v3176
        %v3195 = vrcp.pop %v3178
        %v3196 = vrcp.pop %v3180
        %v3197 = vpack.c.bf16 %v3120, %v3118
        %v3198 = vpack.c.bf16 %v3124, %v3122
        %v3199 = vpack.c.bf16 %v3128, %v3126
        %v3200 = vpack.c.bf16 %v3132, %v3130
        %v3201 = vpack.c.bf16 %v3136, %v3134
        %v3202 = vpack.c.bf16 %v3140, %v3138
        %v3203 = vpack.c.bf16 %v3144, %v3142
        %v3204 = vpack.c.bf16 %v3148, %v3146
        %3205 = vmatprep.subr.bf16.mxu0 0
        %3206 = vmatpush1.bf16.msra.mxu0 %v2899
        %3207 = vmatprep.subr.bf16.mxu0 0
        %3208 = vmatpush1.bf16.msra.mxu0 %v2900
        %3209 = vmatprep.subr.bf16.mxu0 0
        %3210 = vmatpush1.bf16.msra.mxu0 %v2901
        %3211 = vmatprep.subr.bf16.mxu0 0
        %3212 = vmatpush1.bf16.msra.mxu0 %v2902
        %3213 = vmatprep.subr.bf16.mxu0 0
        %3214 = vmatpush1.bf16.msra.mxu0 %v2903
        %3215 = vmatprep.subr.bf16.mxu0 0
        %3216 = vmatpush1.bf16.msra.mxu0 %v2904
        %3217 = vmatprep.subr.bf16.mxu0 0
        %3218 = vmatpush1.bf16.msra.mxu0 %v2905
        %3219 = vmatprep.subr.bf16.mxu0 0
        %3220 = vmatpush1.bf16.msra.mxu0 %v2906
        %3221 = vmatprep.subr.bf16.mxu0 0
        %3222 = vmatpush1.bf16.msra.mxu0 0
        %3223 = vmatprep.subr.bf16.mxu0 0
        %3224 = vmatpush1.bf16.msra.mxu0 0
        %3225 = vmatprep.subr.bf16.mxu0 0
        %3226 = vmatpush1.bf16.msra.mxu0 0
        %3227 = vmatprep.subr.bf16.mxu0 0
        %3228 = vmatpush1.bf16.msra.mxu0 0
        %3229 = vmatprep.subr.bf16.mxu0 0
        %3230 = vmatpush1.bf16.msra.mxu0 0
        %3231 = vmatprep.subr.bf16.mxu0 0
        %3232 = vmatpush1.bf16.msra.mxu0 0
        %3233 = vmatprep.subr.bf16.mxu0 0
        %3234 = vmatpush1.bf16.msra.mxu0 0
        %3235 = vmatprep.subr.bf16.mxu0 0
        %3236 = vmatpush1.bf16.msra.mxu0 0
        %3237 = vmatprep.mubr.bf16.mxu0 0
        %3238 = vmatmul.mubr.bf16.gmra.mrb[0].mxu0 %v3197
        %v3239 = vpop.f32.mrb[0].mxu0
        %v3240 = vadd.f32 0.0, %v3239
        %v3241 = vpop.f32.mrb[0].mxu0
        %v3242 = vpop.f32.mrb[0].mxu0
        %v3243 = vadd.f32 0.0, %v3242
        %v3244 = vpop.f32.mrb[0].mxu0
        %3245 = vmatprep.mubr.bf16.mxu0 0
        %3246 = vmatmul.mubr.bf16.gmra.mrb[0].mxu0 %v3198
        %v3247 = vpop.f32.mrb[0].mxu0
        %v3248 = vadd.f32 0.0, %v3247
        %v3249 = vpop.f32.mrb[0].mxu0
        %v3250 = vpop.f32.mrb[0].mxu0
        %v3251 = vadd.f32 0.0, %v3250
        %v3252 = vpop.f32.mrb[0].mxu0
        %3253 = vmatprep.mubr.bf16.mxu0 0
        %3254 = vmatmul.mubr.bf16.gmra.mrb[0].mxu0 %v3199
        %v3255 = vpop.f32.mrb[0].mxu0
        %v3256 = vadd.f32 0.0, %v3255
        %v3257 = vpop.f32.mrb[0].mxu0
        %v3258 = vpop.f32.mrb[0].mxu0
        %v3259 = vadd.f32 0.0, %v3258
        %v3260 = vpop.f32.mrb[0].mxu0
        %3261 = vmatprep.mubr.bf16.mxu0 0
        %3262 = vmatmul.mubr.bf16.gmra.mrb[0].mxu0 %v3200
        %v3263 = vpop.f32.mrb[0].mxu0
        %v3264 = vadd.f32 0.0, %v3263
        %v3265 = vpop.f32.mrb[0].mxu0
        %v3266 = vpop.f32.mrb[0].mxu0
        %v3267 = vadd.f32 0.0, %v3266
        %v3268 = vpop.f32.mrb[0].mxu0
        %3269 = vmatprep.mubr.bf16.mxu0 0
        %3270 = vmatmul.mubr.bf16.gmra.mrb[0].mxu0 %v3201
        %v3271 = vpop.f32.mrb[0].mxu0
        %v3272 = vadd.f32 0.0, %v3271
        %v3273 = vpop.f32.mrb[0].mxu0
        %v3274 = vpop.f32.mrb[0].mxu0
        %v3275 = vadd.f32 0.0, %v3274
        %v3276 = vpop.f32.mrb[0].mxu0
        %3277 = vmatprep.mubr.bf16.mxu0 0
        %3278 = vmatmul.mubr.bf16.gmra.mrb[0].mxu0 %v3202
        %v3279 = vpop.f32.mrb[0].mxu0
        %v3280 = vadd.f32 0.0, %v3279
        %v3281 = vpop.f32.mrb[0].mxu0
        %v3282 = vpop.f32.mrb[0].mxu0
        %v3283 = vadd.f32 0.0, %v3282
        %v3284 = vpop.f32.mrb[0].mxu0
        %3285 = vmatprep.mubr.bf16.mxu0 0
        %3286 = vmatmul.mubr.bf16.gmra.mrb[0].mxu0 %v3203
        %v3287 = vpop.f32.mrb[0].mxu0
        %v3288 = vadd.f32 0.0, %v3287
        %v3289 = vpop.f32.mrb[0].mxu0
        %v3290 = vpop.f32.mrb[0].mxu0
        %v3291 = vadd.f32 0.0, %v3290
        %v3292 = vpop.f32.mrb[0].mxu0
        %3293 = vmatprep.mubr.bf16.mxu0 0
        %3294 = vmatmul.mubr.bf16.gmra.mrb[0].mxu0 %v3204
        %v3295 = vpop.f32.mrb[0].mxu0
        %v3296 = vadd.f32 0.0, %v3295
        %v3297 = vpop.f32.mrb[0].mxu0
        %v3298 = vpop.f32.mrb[0].mxu0
        %v3299 = vadd.f32 0.0, %v3298
        %v3300 = vpop.f32.mrb[0].mxu0
        %3301 = vdwg.mxu0
        %v3302 = vmul.f32 %v3240, %v3181
        %v3303 = vmul.f32 %v3243, %v3182
        %v3304 = vmul.f32 %v3248, %v3183
        %v3305 = vmul.f32 %v3251, %v3184
        %v3306 = vmul.f32 %v3256, %v3185
        %v3307 = vmul.f32 %v3259, %v3186
        %v3308 = vmul.f32 %v3264, %v3187
        %v3309 = vmul.f32 %v3267, %v3188
        %v3310 = vmul.f32 %v3272, %v3189
        %v3311 = vmul.f32 %v3275, %v3190
        %v3312 = vmul.f32 %v3280, %v3191
        %v3313 = vmul.f32 %v3283, %v3192
        %v3314 = vmul.f32 %v3288, %v3193
        %v3315 = vmul.f32 %v3291, %v3194
        %v3316 = vmul.f32 %v3296, %v3195
        %v3317 = vmul.f32 %v3299, %v3196
        %v3318 = vpack.c.bf16 %v3303, %v3302
        %v3319 = vpack.c.bf16 %v3305, %v3304
        %v3320 = vpack.c.bf16 %v3307, %v3306
        %v3321 = vpack.c.bf16 %v3309, %v3308
        %v3322 = vpack.c.bf16 %v3311, %v3310
        %v3323 = vpack.c.bf16 %v3313, %v3312
        %v3324 = vpack.c.bf16 %v3315, %v3314
        %v3325 = vpack.c.bf16 %v3317, %v3316
        %v3326 = vld [vmem:[#allocation7] sm:$0xff]
        %v3327 = vld [vmem:[#allocation7 + $0x8] sm:$0xf]
        %v3328 = vld [vmem:[#allocation7 + $0xc] sm:$0xff]
        %v3329 = vld [vmem:[#allocation7 + $0x14] sm:$0xf]
        %v3330 = vld [vmem:[#allocation7 + $0x18] sm:$0xff]
        %v3331 = vld [vmem:[#allocation7 + $0x20] sm:$0xf]
        %v3332 = vld [vmem:[#allocation7 + $0x24] sm:$0xff]
        %v3333 = vld [vmem:[#allocation7 + $0x2c] sm:$0xf]
        %v3334 = vld [vmem:[#allocation7 + $0x30] sm:$0xff]
        %v3335 = vld [vmem:[#allocation7 + $0x38] sm:$0xf]
        %v3336 = vld [vmem:[#allocation7 + $0x3c] sm:$0xff]
        %v3337 = vld [vmem:[#allocation7 + $0x44] sm:$0xf]
        %v3338 = vld [vmem:[#allocation7 + $0x48] sm:$0xff]
        %v3339 = vld [vmem:[#allocation7 + $0x50] sm:$0xf]
        %v3340 = vld [vmem:[#allocation7 + $0x54] sm:$0xff]
        %v3341 = vld [vmem:[#allocation7 + $0x5c] sm:$0xf]
        %v3342 = vld [vmem:[#allocation7 + $0x60] sm:$0xff]
        %v3343 = vld [vmem:[#allocation7 + $0x68] sm:$0xf]
        %v3344 = vld [vmem:[#allocation7 + $0x6c] sm:$0xff]
        %v3345 = vld [vmem:[#allocation7 + $0x74] sm:$0xf]
        %v3346 = vld [vmem:[#allocation7 + $0x78] sm:$0xff]
        %v3347 = vld [vmem:[#allocation7 + $0x80] sm:$0xf]
        %v3348 = vld [vmem:[#allocation7 + $0x84] sm:$0xff]
        %v3349 = vld [vmem:[#allocation7 + $0x8c] sm:$0xf]
        %v3350 = vpack.c.bf16 %v1904, %v1900
        %v3351 = vpack.c.bf16 %v1914, %v1910
        %v3352 = vpack.c.bf16 %v1924, %v1920
        %v3353 = vpack.c.bf16 %v1934, %v1930
        %v3354 = vpack.c.bf16 %v1944, %v1940
        %v3355 = vpack.c.bf16 %v1954, %v1950
        %v3356 = vpack.c.bf16 %v1964, %v1960
        %v3357 = vpack.c.bf16 %v1974, %v1970
        %v3358 = vpack.c.bf16 %v2354, %v2350
        %v3359 = vpack.c.bf16 %v2364, %v2360
        %v3360 = vpack.c.bf16 %v2374, %v2370
        %v3361 = vpack.c.bf16 %v2384, %v2380
        %v3362 = vpack.c.bf16 %v2394, %v2390
        %v3363 = vpack.c.bf16 %v2404, %v2400
        %v3364 = vpack.c.bf16 %v2414, %v2410
        %v3365 = vpack.c.bf16 %v2424, %v2420
        %v3366 = vpack.c.bf16 %v2582, %v2578
        %v3367 = vpack.c.bf16 %v2592, %v2588
        %v3368 = vpack.c.bf16 %v2602, %v2598
        %v3369 = vpack.c.bf16 %v2612, %v2608
        %v3370 = vpack.c.bf16 %v2622, %v2618
        %v3371 = vpack.c.bf16 %v2632, %v2628
        %v3372 = vpack.c.bf16 %v2642, %v2638
        %v3373 = vpack.c.bf16 %v2652, %v2648
        %3390 = vrot.lane.b32.xlu0 %v2883, 32
        %v3391 = vpop.permute.xlu0 %3390
        %3392 = vrot.lane.b32.xlu0 %v3350, 32
        %v3393 = vpop.permute.xlu0 %3392
        %3394 = vrot.lane.b32.xlu0 %v2884, 32
        %v3395 = vpop.permute.xlu0 %3394
        %3396 = vrot.lane.b32.xlu0 %v3351, 32
        %v3397 = vpop.permute.xlu0 %3396
        %3398 = vrot.lane.b32.xlu0 %v2885, 32
        %v3399 = vpop.permute.xlu0 %3398
        %3400 = vrot.lane.b32.xlu0 %v3352, 32
        %v3401 = vpop.permute.xlu0 %3400
        %3402 = vrot.lane.b32.xlu0 %v2886, 32
        %v3403 = vpop.permute.xlu0 %3402
        %3404 = vrot.lane.b32.xlu0 %v3353, 32
        %v3405 = vpop.permute.xlu0 %3404
        %3406 = vrot.lane.b32.xlu0 %v2887, 32
        %v3407 = vpop.permute.xlu0 %3406
        %3408 = vrot.lane.b32.xlu0 %v3354, 32
        %v3409 = vpop.permute.xlu0 %3408
        %3410 = vrot.lane.b32.xlu0 %v2888, 32
        %v3411 = vpop.permute.xlu0 %3410
        %3412 = vrot.lane.b32.xlu0 %v3355, 32
        %v3413 = vpop.permute.xlu0 %3412
        %3414 = vrot.lane.b32.xlu0 %v2889, 32
        %v3415 = vpop.permute.xlu0 %3414
        %3416 = vrot.lane.b32.xlu0 %v3356, 32
        %v3417 = vpop.permute.xlu0 %3416
        %3418 = vrot.lane.b32.xlu0 %v2890, 32
        %v3419 = vpop.permute.xlu0 %3418
        %3420 = vrot.lane.b32.xlu0 %v3357, 32
        %v3421 = vpop.permute.xlu0 %3420
        %vm3422 = vcmask 261120
        %v3423 = vsel %vm3422, %v3391, %v3393
        %v3424 = vsel %vm3422, %v3395, %v3397
        %v3425 = vsel %vm3422, %v3399, %v3401
        %v3426 = vsel %vm3422, %v3403, %v3405
        %v3427 = vsel %vm3422, %v3407, %v3409
        %v3428 = vsel %vm3422, %v3411, %v3413
        %v3429 = vsel %vm3422, %v3415, %v3417
        %v3430 = vsel %vm3422, %v3419, %v3421
        %3447 = vrot.lane.b32.xlu0 %v2891, 32
        %v3448 = vpop.permute.xlu0 %3447
        %3449 = vrot.lane.b32.xlu0 %v3358, 32
        %v3450 = vpop.permute.xlu0 %3449
        %3451 = vrot.lane.b32.xlu0 %v2892, 32
        %v3452 = vpop.permute.xlu0 %3451
        %3453 = vrot.lane.b32.xlu0 %v3359, 32
        %v3454 = vpop.permute.xlu0 %3453
        %3455 = vrot.lane.b32.xlu0 %v2893, 32
        %v3456 = vpop.permute.xlu0 %3455
        %3457 = vrot.lane.b32.xlu0 %v3360, 32
        %v3458 = vpop.permute.xlu0 %3457
        %3459 = vrot.lane.b32.xlu0 %v2894, 32
        %v3460 = vpop.permute.xlu0 %3459
        %3461 = vrot.lane.b32.xlu0 %v3361, 32
        %v3462 = vpop.permute.xlu0 %3461
        %3463 = vrot.lane.b32.xlu0 %v2895, 32
        %v3464 = vpop.permute.xlu0 %3463
        %3465 = vrot.lane.b32.xlu0 %v3362, 32
        %v3466 = vpop.permute.xlu0 %3465
        %3467 = vrot.lane.b32.xlu0 %v2896, 32
        %v3468 = vpop.permute.xlu0 %3467
        %3469 = vrot.lane.b32.xlu0 %v3363, 32
        %v3470 = vpop.permute.xlu0 %3469
        %3471 = vrot.lane.b32.xlu0 %v2897, 32
        %v3472 = vpop.permute.xlu0 %3471
        %3473 = vrot.lane.b32.xlu0 %v3364, 32
        %v3474 = vpop.permute.xlu0 %3473
        %3475 = vrot.lane.b32.xlu0 %v2898, 32
        %v3476 = vpop.permute.xlu0 %3475
        %3477 = vrot.lane.b32.xlu0 %v3365, 32
        %v3478 = vpop.permute.xlu0 %3477
        %v3479 = vsel %vm3422, %v3448, %v3450
        %v3480 = vsel %vm3422, %v3452, %v3454
        %v3481 = vsel %vm3422, %v3456, %v3458
        %v3482 = vsel %vm3422, %v3460, %v3462
        %v3483 = vsel %vm3422, %v3464, %v3466
        %v3484 = vsel %vm3422, %v3468, %v3470
        %v3485 = vsel %vm3422, %v3472, %v3474
        %v3486 = vsel %vm3422, %v3476, %v3478
        %v3488 = vsel %vm2907, %v3423, 0
        %v3491 = vsel %vm2907, %v3424, 0
        %v3494 = vsel %vm2907, %v3425, 0
        %v3497 = vsel %vm2907, %v3426, 0
        %v3500 = vsel %vm2907, %v3427, 0
        %v3503 = vsel %vm2907, %v3428, 0
        %v3506 = vsel %vm2907, %v3429, 0
        %v3509 = vsel %vm2907, %v3430, 0
        %v3512 = vsel %vm2907, %v3479, 0
        %v3515 = vsel %vm2907, %v3480, 0
        %v3518 = vsel %vm2907, %v3481, 0
        %v3521 = vsel %vm2907, %v3482, 0
        %v3524 = vsel %vm2907, %v3483, 0
        %v3527 = vsel %vm2907, %v3484, 0
        %v3530 = vsel %vm2907, %v3485, 0
        %v3533 = vsel %vm2907, %v3486, 0
        %3535 = vmatprep.subr.bf16.mxu0 0
        %3536 = vmatpush1.bf16.xpose.msra.mxu0 %v3512
        %3537 = vmatprep.subr.bf16.mxu0 0
        %3538 = vmatpush1.bf16.xpose.msra.mxu0 %v3515
        %3539 = vmatprep.subr.bf16.mxu0 0
        %3540 = vmatpush1.bf16.xpose.msra.mxu0 %v3518
        %3541 = vmatprep.subr.bf16.mxu0 0
        %3542 = vmatpush1.bf16.xpose.msra.mxu0 %v3521
        %3543 = vmatprep.subr.bf16.mxu0 0
        %3544 = vmatpush1.bf16.xpose.msra.mxu0 %v3524
        %3545 = vmatprep.subr.bf16.mxu0 0
        %3546 = vmatpush1.bf16.xpose.msra.mxu0 %v3527
        %3547 = vmatprep.subr.bf16.mxu0 0
        %3548 = vmatpush1.bf16.xpose.msra.mxu0 %v3530
        %3549 = vmatprep.subr.bf16.mxu0 0
        %3550 = vmatpush1.bf16.xpose.msra.mxu0 %v3533
        %3551 = vmatprep.subr.bf16.mxu0 0
        %3552 = vmatpush1.bf16.xpose.msra.mxu0 0
        %3553 = vmatprep.subr.bf16.mxu0 0
        %3554 = vmatpush1.bf16.xpose.msra.mxu0 0
        %3555 = vmatprep.subr.bf16.mxu0 0
        %3556 = vmatpush1.bf16.xpose.msra.mxu0 0
        %3557 = vmatprep.subr.bf16.mxu0 0
        %3558 = vmatpush1.bf16.xpose.msra.mxu0 0
        %3559 = vmatprep.subr.bf16.mxu0 0
        %3560 = vmatpush1.bf16.xpose.msra.mxu0 0
        %3561 = vmatprep.subr.bf16.mxu0 0
        %3562 = vmatpush1.bf16.xpose.msra.mxu0 0
        %3563 = vmatprep.subr.bf16.mxu0 0
        %3564 = vmatpush1.bf16.xpose.msra.mxu0 0
        %3565 = vmatprep.subr.bf16.mxu0 0
        %3566 = vmatpush1.bf16.xpose.msra.mxu0 0
        %3567 = vmatprep.mubr.bf16.mxu0 0
        %3568 = vmatmul.mubr.bf16.gmra.mrb[0].mxu0 %v3488
        %v3569 = vpop.f32.mrb[0].mxu0
        %v3570 = vadd.f32 0.0, %v3569
        %v3571 = vpop.f32.mrb[0].mxu0
        %v3572 = vpop.f32.mrb[0].mxu0
        %v3573 = vadd.f32 0.0, %v3572
        %v3574 = vpop.f32.mrb[0].mxu0
        %3575 = vmatprep.mubr.bf16.mxu0 0
        %3576 = vmatmul.mubr.bf16.gmra.mrb[0].mxu0 %v3491
        %v3577 = vpop.f32.mrb[0].mxu0
        %v3578 = vadd.f32 0.0, %v3577
        %v3579 = vpop.f32.mrb[0].mxu0
        %v3580 = vpop.f32.mrb[0].mxu0
        %v3581 = vadd.f32 0.0, %v3580
        %v3582 = vpop.f32.mrb[0].mxu0
        %3583 = vmatprep.mubr.bf16.mxu0 0
        %3584 = vmatmul.mubr.bf16.gmra.mrb[0].mxu0 %v3494
        %v3585 = vpop.f32.mrb[0].mxu0
        %v3586 = vadd.f32 0.0, %v3585
        %v3587 = vpop.f32.mrb[0].mxu0
        %v3588 = vpop.f32.mrb[0].mxu0
        %v3589 = vadd.f32 0.0, %v3588
        %v3590 = vpop.f32.mrb[0].mxu0
        %3591 = vmatprep.mubr.bf16.mxu0 0
        %3592 = vmatmul.mubr.bf16.gmra.mrb[0].mxu0 %v3497
        %v3593 = vpop.f32.mrb[0].mxu0
        %v3594 = vadd.f32 0.0, %v3593
        %v3595 = vpop.f32.mrb[0].mxu0
        %v3596 = vpop.f32.mrb[0].mxu0
        %v3597 = vadd.f32 0.0, %v3596
        %v3598 = vpop.f32.mrb[0].mxu0
        %3599 = vmatprep.mubr.bf16.mxu0 0
        %3600 = vmatmul.mubr.bf16.gmra.mrb[0].mxu0 %v3500
        %v3601 = vpop.f32.mrb[0].mxu0
        %v3602 = vadd.f32 0.0, %v3601
        %v3603 = vpop.f32.mrb[0].mxu0
        %v3604 = vpop.f32.mrb[0].mxu0
        %v3605 = vadd.f32 0.0, %v3604
        %v3606 = vpop.f32.mrb[0].mxu0
        %3607 = vmatprep.mubr.bf16.mxu0 0
        %3608 = vmatmul.mubr.bf16.gmra.mrb[0].mxu0 %v3503
        %v3609 = vpop.f32.mrb[0].mxu0
        %v3610 = vadd.f32 0.0, %v3609
        %v3611 = vpop.f32.mrb[0].mxu0
        %v3612 = vpop.f32.mrb[0].mxu0
        %v3613 = vadd.f32 0.0, %v3612
        %v3614 = vpop.f32.mrb[0].mxu0
        %3615 = vmatprep.mubr.bf16.mxu0 0
        %3616 = vmatmul.mubr.bf16.gmra.mrb[0].mxu0 %v3506
        %v3617 = vpop.f32.mrb[0].mxu0
        %v3618 = vadd.f32 0.0, %v3617
        %v3619 = vpop.f32.mrb[0].mxu0
        %v3620 = vpop.f32.mrb[0].mxu0
        %v3621 = vadd.f32 0.0, %v3620
        %v3622 = vpop.f32.mrb[0].mxu0
        %3623 = vmatprep.mubr.bf16.mxu0 0
        %3624 = vmatmul.mubr.bf16.gmra.mrb[0].mxu0 %v3509
        %v3625 = vpop.f32.mrb[0].mxu0
        %v3626 = vadd.f32 0.0, %v3625
        %v3627 = vpop.f32.mrb[0].mxu0
        %v3628 = vpop.f32.mrb[0].mxu0
        %v3629 = vadd.f32 0.0, %v3628
        %v3630 = vpop.f32.mrb[0].mxu0
        %3631 = vdwg.mxu0
        %v3632 = vsel %vm2867, %v3570, -1e+30
        %v3633 = vsel %vm2868, %v3573, -1e+30
        %v3634 = vsel %vm2869, %v3578, -1e+30
        %v3635 = vsel %vm2870, %v3581, -1e+30
        %v3636 = vsel %vm2871, %v3586, -1e+30
        %v3637 = vsel %vm2872, %v3589, -1e+30
        %v3638 = vsel %vm2873, %v3594, -1e+30
        %v3639 = vsel %vm2874, %v3597, -1e+30
        %v3640 = vsel %vm2875, %v3602, -1e+30
        %v3641 = vsel %vm2876, %v3605, -1e+30
        %v3642 = vsel %vm2877, %v3610, -1e+30
        %v3643 = vsel %vm2878, %v3613, -1e+30
        %v3644 = vsel %vm2879, %v3618, -1e+30
        %v3645 = vsel %vm2880, %v3621, -1e+30
        %v3646 = vsel %vm2881, %v3626, -1e+30
        %v3647 = vsel %vm2882, %v3629, -1e+30
        %3648 = vmax.xlane.f32.xlu0 %v3632
        %v3649 = vpop.xlane.xlu0 %3648
        %3650 = vmax.xlane.f32.xlu0 %v3633
        %v3651 = vpop.xlane.xlu0 %3650
        %3652 = vmax.xlane.f32.xlu0 %v3634
        %v3653 = vpop.xlane.xlu0 %3652
        %3654 = vmax.xlane.f32.xlu0 %v3635
        %v3655 = vpop.xlane.xlu0 %3654
        %3656 = vmax.xlane.f32.xlu0 %v3636
        %v3657 = vpop.xlane.xlu0 %3656
        %3658 = vmax.xlane.f32.xlu0 %v3637
        %v3659 = vpop.xlane.xlu0 %3658
        %3660 = vmax.xlane.f32.xlu0 %v3638
        %v3661 = vpop.xlane.xlu0 %3660
        %3662 = vmax.xlane.f32.xlu0 %v3639
        %v3663 = vpop.xlane.xlu0 %3662
        %3664 = vmax.xlane.f32.xlu0 %v3640
        %v3665 = vpop.xlane.xlu0 %3664
        %3666 = vmax.xlane.f32.xlu0 %v3641
        %v3667 = vpop.xlane.xlu0 %3666
        %3668 = vmax.xlane.f32.xlu0 %v3642
        %v3669 = vpop.xlane.xlu0 %3668
        %3670 = vmax.xlane.f32.xlu0 %v3643
        %v3671 = vpop.xlane.xlu0 %3670
        %3672 = vmax.xlane.f32.xlu0 %v3644
        %v3673 = vpop.xlane.xlu0 %3672
        %3674 = vmax.xlane.f32.xlu0 %v3645
        %v3675 = vpop.xlane.xlu0 %3674
        %3676 = vmax.xlane.f32.xlu0 %v3646
        %v3677 = vpop.xlane.xlu0 %3676
        %3678 = vmax.xlane.f32.xlu0 %v3647
        %v3679 = vpop.xlane.xlu0 %3678
        %v3680 = vsub.f32 %v3632, %v3649
        %v3681 = vsub.f32 %v3633, %v3651
        %v3682 = vsub.f32 %v3634, %v3653
        %v3683 = vsub.f32 %v3635, %v3655
        %v3684 = vsub.f32 %v3636, %v3657
        %v3685 = vsub.f32 %v3637, %v3659
        %v3686 = vsub.f32 %v3638, %v3661
        %v3687 = vsub.f32 %v3639, %v3663
        %v3688 = vsub.f32 %v3640, %v3665
        %v3689 = vsub.f32 %v3641, %v3667
        %v3690 = vsub.f32 %v3642, %v3669
        %v3691 = vsub.f32 %v3643, %v3671
        %v3692 = vsub.f32 %v3644, %v3673
        %v3693 = vsub.f32 %v3645, %v3675
        %v3694 = vsub.f32 %v3646, %v3677
        %v3695 = vsub.f32 %v3647, %v3679
        %v3696 = vmul.f32 %v3680, 1.442695
        %v3697 = vpow.pop %v3696
        %v3698 = vmul.f32 %v3681, 1.442695
        %v3699 = vpow.pop %v3698
        %v3700 = vmul.f32 %v3682, 1.442695
        %v3701 = vpow.pop %v3700
        %v3702 = vmul.f32 %v3683, 1.442695
        %v3703 = vpow.pop %v3702
        %v3704 = vmul.f32 %v3684, 1.442695
        %v3705 = vpow.pop %v3704
        %v3706 = vmul.f32 %v3685, 1.442695
        %v3707 = vpow.pop %v3706
        %v3708 = vmul.f32 %v3686, 1.442695
        %v3709 = vpow.pop %v3708
        %v3710 = vmul.f32 %v3687, 1.442695
        %v3711 = vpow.pop %v3710
        %v3712 = vmul.f32 %v3688, 1.442695
        %v3713 = vpow.pop %v3712
        %v3714 = vmul.f32 %v3689, 1.442695
        %v3715 = vpow.pop %v3714
        %v3716 = vmul.f32 %v3690, 1.442695
        %v3717 = vpow.pop %v3716
        %v3718 = vmul.f32 %v3691, 1.442695
        %v3719 = vpow.pop %v3718
        %v3720 = vmul.f32 %v3692, 1.442695
        %v3721 = vpow.pop %v3720
        %v3722 = vmul.f32 %v3693, 1.442695
        %v3723 = vpow.pop %v3722
        %v3724 = vmul.f32 %v3694, 1.442695
        %v3725 = vpow.pop %v3724
        %v3726 = vmul.f32 %v3695, 1.442695
        %v3727 = vpow.pop %v3726
        %3728 = vadd.xlane.f32.xlu0 %v3697
        %v3729 = vpop.xlane.xlu0 %3728
        %3730 = vadd.xlane.f32.xlu0 %v3699
        %v3731 = vpop.xlane.xlu0 %3730
        %3732 = vadd.xlane.f32.xlu0 %v3701
        %v3733 = vpop.xlane.xlu0 %3732
        %3734 = vadd.xlane.f32.xlu0 %v3703
        %v3735 = vpop.xlane.xlu0 %3734
        %3736 = vadd.xlane.f32.xlu0 %v3705
        %v3737 = vpop.xlane.xlu0 %3736
        %3738 = vadd.xlane.f32.xlu0 %v3707
        %v3739 = vpop.xlane.xlu0 %3738
        %3740 = vadd.xlane.f32.xlu0 %v3709
        %v3741 = vpop.xlane.xlu0 %3740
        %3742 = vadd.xlane.f32.xlu0 %v3711
        %v3743 = vpop.xlane.xlu0 %3742
        %3744 = vadd.xlane.f32.xlu0 %v3713
        %v3745 = vpop.xlane.xlu0 %3744
        %3746 = vadd.xlane.f32.xlu0 %v3715
        %v3747 = vpop.xlane.xlu0 %3746
        %3748 = vadd.xlane.f32.xlu0 %v3717
        %v3749 = vpop.xlane.xlu0 %3748
        %3750 = vadd.xlane.f32.xlu0 %v3719
        %v3751 = vpop.xlane.xlu0 %3750
        %3752 = vadd.xlane.f32.xlu0 %v3721
        %v3753 = vpop.xlane.xlu0 %3752
        %3754 = vadd.xlane.f32.xlu0 %v3723
        %v3755 = vpop.xlane.xlu0 %3754
        %3756 = vadd.xlane.f32.xlu0 %v3725
        %v3757 = vpop.xlane.xlu0 %3756
        %3758 = vadd.xlane.f32.xlu0 %v3727
        %v3759 = vpop.xlane.xlu0 %3758
        %v3760 = vrcp.pop %v3729
        %v3761 = vrcp.pop %v3731
        %v3762 = vrcp.pop %v3733
        %v3763 = vrcp.pop %v3735
        %v3764 = vrcp.pop %v3737
        %v3765 = vrcp.pop %v3739
        %v3766 = vrcp.pop %v3741
        %v3767 = vrcp.pop %v3743
        %v3768 = vrcp.pop %v3745
        %v3769 = vrcp.pop %v3747
        %v3770 = vrcp.pop %v3749
        %v3771 = vrcp.pop %v3751
        %v3772 = vrcp.pop %v3753
        %v3773 = vrcp.pop %v3755
        %v3774 = vrcp.pop %v3757
        %v3775 = vrcp.pop %v3759
        %v3776 = vpack.c.bf16 %v3699, %v3697
        %v3777 = vpack.c.bf16 %v3703, %v3701
        %v3778 = vpack.c.bf16 %v3707, %v3705
        %v3779 = vpack.c.bf16 %v3711, %v3709
        %v3780 = vpack.c.bf16 %v3715, %v3713
        %v3781 = vpack.c.bf16 %v3719, %v3717
        %v3782 = vpack.c.bf16 %v3723, %v3721
        %v3783 = vpack.c.bf16 %v3727, %v3725
        %3800 = vrot.lane.b32.xlu0 %v2899, 32
        %v3801 = vpop.permute.xlu0 %3800
        %3802 = vrot.lane.b32.xlu0 %v3366, 32
        %v3803 = vpop.permute.xlu0 %3802
        %3804 = vrot.lane.b32.xlu0 %v2900, 32
        %v3805 = vpop.permute.xlu0 %3804
        %3806 = vrot.lane.b32.xlu0 %v3367, 32
        %v3807 = vpop.permute.xlu0 %3806
        %3808 = vrot.lane.b32.xlu0 %v2901, 32
        %v3809 = vpop.permute.xlu0 %3808
        %3810 = vrot.lane.b32.xlu0 %v3368, 32
        %v3811 = vpop.permute.xlu0 %3810
        %3812 = vrot.lane.b32.xlu0 %v2902, 32
        %v3813 = vpop.permute.xlu0 %3812
        %3814 = vrot.lane.b32.xlu0 %v3369, 32
        %v3815 = vpop.permute.xlu0 %3814
        %3816 = vrot.lane.b32.xlu0 %v2903, 32
        %v3817 = vpop.permute.xlu0 %3816
        %3818 = vrot.lane.b32.xlu0 %v3370, 32
        %v3819 = vpop.permute.xlu0 %3818
        %3820 = vrot.lane.b32.xlu0 %v2904, 32
        %v3821 = vpop.permute.xlu0 %3820
        %3822 = vrot.lane.b32.xlu0 %v3371, 32
        %v3823 = vpop.permute.xlu0 %3822
        %3824 = vrot.lane.b32.xlu0 %v2905, 32
        %v3825 = vpop.permute.xlu0 %3824
        %3826 = vrot.lane.b32.xlu0 %v3372, 32
        %v3827 = vpop.permute.xlu0 %3826
        %3828 = vrot.lane.b32.xlu0 %v2906, 32
        %v3829 = vpop.permute.xlu0 %3828
        %3830 = vrot.lane.b32.xlu0 %v3373, 32
        %v3831 = vpop.permute.xlu0 %3830
        %v3832 = vsel %vm3422, %v3801, %v3803
        %v3833 = vsel %vm3422, %v3805, %v3807
        %v3834 = vsel %vm3422, %v3809, %v3811
        %v3835 = vsel %vm3422, %v3813, %v3815
        %v3836 = vsel %vm3422, %v3817, %v3819
        %v3837 = vsel %vm3422, %v3821, %v3823
        %v3838 = vsel %vm3422, %v3825, %v3827
        %v3839 = vsel %vm3422, %v3829, %v3831
        %3848 = vmatprep.subr.bf16.mxu0 0
        %3849 = vmatpush1.bf16.msra.mxu0 %v3832
        %3850 = vmatprep.subr.bf16.mxu0 0
        %3851 = vmatpush1.bf16.msra.mxu0 %v3833
        %3852 = vmatprep.subr.bf16.mxu0 0
        %3853 = vmatpush1.bf16.msra.mxu0 %v3834
        %3854 = vmatprep.subr.bf16.mxu0 0
        %3855 = vmatpush1.bf16.msra.mxu0 %v3835
        %3856 = vmatprep.subr.bf16.mxu0 0
        %3857 = vmatpush1.bf16.msra.mxu0 %v3836
        %3858 = vmatprep.subr.bf16.mxu0 0
        %3859 = vmatpush1.bf16.msra.mxu0 %v3837
        %3860 = vmatprep.subr.bf16.mxu0 0
        %3861 = vmatpush1.bf16.msra.mxu0 %v3838
        %3862 = vmatprep.subr.bf16.mxu0 0
        %3863 = vmatpush1.bf16.msra.mxu0 %v3839
        %3864 = vmatprep.subr.bf16.mxu0 0
        %3865 = vmatpush1.bf16.msra.mxu0 0
        %3866 = vmatprep.subr.bf16.mxu0 0
        %3867 = vmatpush1.bf16.msra.mxu0 0
        %3868 = vmatprep.subr.bf16.mxu0 0
        %3869 = vmatpush1.bf16.msra.mxu0 0
        %3870 = vmatprep.subr.bf16.mxu0 0
        %3871 = vmatpush1.bf16.msra.mxu0 0
        %3872 = vmatprep.subr.bf16.mxu0 0
        %3873 = vmatpush1.bf16.msra.mxu0 0
        %3874 = vmatprep.subr.bf16.mxu0 0
        %3875 = vmatpush1.bf16.msra.mxu0 0
        %3876 = vmatprep.subr.bf16.mxu0 0
        %3877 = vmatpush1.bf16.msra.mxu0 0
        %3878 = vmatprep.subr.bf16.mxu0 0
        %3879 = vmatpush1.bf16.msra.mxu0 0
        %3880 = vmatprep.mubr.bf16.mxu0 0
        %3881 = vmatmul.mubr.bf16.gmra.mrb[0].mxu0 %v3776
        %v3882 = vpop.f32.mrb[0].mxu0
        %v3883 = vadd.f32 0.0, %v3882
        %v3884 = vpop.f32.mrb[0].mxu0
        %v3885 = vpop.f32.mrb[0].mxu0
        %v3886 = vadd.f32 0.0, %v3885
        %v3887 = vpop.f32.mrb[0].mxu0
        %3888 = vmatprep.mubr.bf16.mxu0 0
        %3889 = vmatmul.mubr.bf16.gmra.mrb[0].mxu0 %v3777
        %v3890 = vpop.f32.mrb[0].mxu0
        %v3891 = vadd.f32 0.0, %v3890
        %v3892 = vpop.f32.mrb[0].mxu0
        %v3893 = vpop.f32.mrb[0].mxu0
        %v3894 = vadd.f32 0.0, %v3893
        %v3895 = vpop.f32.mrb[0].mxu0
        %3896 = vmatprep.mubr.bf16.mxu0 0
        %3897 = vmatmul.mubr.bf16.gmra.mrb[0].mxu0 %v3778
        %v3898 = vpop.f32.mrb[0].mxu0
        %v3899 = vadd.f32 0.0, %v3898
        %v3900 = vpop.f32.mrb[0].mxu0
        %v3901 = vpop.f32.mrb[0].mxu0
        %v3902 = vadd.f32 0.0, %v3901
        %v3903 = vpop.f32.mrb[0].mxu0
        %3904 = vmatprep.mubr.bf16.mxu0 0
        %3905 = vmatmul.mubr.bf16.gmra.mrb[0].mxu0 %v3779
        %v3906 = vpop.f32.mrb[0].mxu0
        %v3907 = vadd.f32 0.0, %v3906
        %v3908 = vpop.f32.mrb[0].mxu0
        %v3909 = vpop.f32.mrb[0].mxu0
        %v3910 = vadd.f32 0.0, %v3909
        %v3911 = vpop.f32.mrb[0].mxu0
        %3912 = vmatprep.mubr.bf16.mxu0 0
        %3913 = vmatmul.mubr.bf16.gmra.mrb[0].mxu0 %v3780
        %v3914 = vpop.f32.mrb[0].mxu0
        %v3915 = vadd.f32 0.0, %v3914
        %v3916 = vpop.f32.mrb[0].mxu0
        %v3917 = vpop.f32.mrb[0].mxu0
        %v3918 = vadd.f32 0.0, %v3917
        %v3919 = vpop.f32.mrb[0].mxu0
        %3920 = vmatprep.mubr.bf16.mxu0 0
        %3921 = vmatmul.mubr.bf16.gmra.mrb[0].mxu0 %v3781
        %v3922 = vpop.f32.mrb[0].mxu0
        %v3923 = vadd.f32 0.0, %v3922
        %v3924 = vpop.f32.mrb[0].mxu0
        %v3925 = vpop.f32.mrb[0].mxu0
        %v3926 = vadd.f32 0.0, %v3925
        %v3927 = vpop.f32.mrb[0].mxu0
        %3928 = vmatprep.mubr.bf16.mxu0 0
        %3929 = vmatmul.mubr.bf16.gmra.mrb[0].mxu0 %v3782
        %v3930 = vpop.f32.mrb[0].mxu0
        %v3931 = vadd.f32 0.0, %v3930
        %v3932 = vpop.f32.mrb[0].mxu0
        %v3933 = vpop.f32.mrb[0].mxu0
        %v3934 = vadd.f32 0.0, %v3933
        %v3935 = vpop.f32.mrb[0].mxu0
        %3936 = vmatprep.mubr.bf16.mxu0 0
        %3937 = vmatmul.mubr.bf16.gmra.mrb[0].mxu0 %v3783
        %v3938 = vpop.f32.mrb[0].mxu0
        %v3939 = vadd.f32 0.0, %v3938
        %v3940 = vpop.f32.mrb[0].mxu0
        %v3941 = vpop.f32.mrb[0].mxu0
        %v3942 = vadd.f32 0.0, %v3941
        %v3943 = vpop.f32.mrb[0].mxu0
        %3944 = vdwg.mxu0
        %v3945 = vmul.f32 %v3883, %v3760
        %v3946 = vmul.f32 %v3886, %v3761
        %v3947 = vmul.f32 %v3891, %v3762
        %v3948 = vmul.f32 %v3894, %v3763
        %v3949 = vmul.f32 %v3899, %v3764
        %v3950 = vmul.f32 %v3902, %v3765
        %v3951 = vmul.f32 %v3907, %v3766
        %v3952 = vmul.f32 %v3910, %v3767
        %v3953 = vmul.f32 %v3915, %v3768
        %v3954 = vmul.f32 %v3918, %v3769
        %v3955 = vmul.f32 %v3923, %v3770
        %v3956 = vmul.f32 %v3926, %v3771
        %v3957 = vmul.f32 %v3931, %v3772
        %v3958 = vmul.f32 %v3934, %v3773
        %v3959 = vmul.f32 %v3939, %v3774
        %v3960 = vmul.f32 %v3942, %v3775
        %v3961 = vpack.c.bf16 %v3946, %v3945
        %v3962 = vpack.c.bf16 %v3948, %v3947
        %v3963 = vpack.c.bf16 %v3950, %v3949
        %v3964 = vpack.c.bf16 %v3952, %v3951
        %v3965 = vpack.c.bf16 %v3954, %v3953
        %v3966 = vpack.c.bf16 %v3956, %v3955
        %v3967 = vpack.c.bf16 %v3958, %v3957
        %v3968 = vpack.c.bf16 %v3960, %v3959
        %v3969 = vld [vmem:[#allocation7 + $0x90] sm:$0xff]
        %v3970 = vld [vmem:[#allocation7 + $0x98] sm:$0xf]
        %v3971 = vld [vmem:[#allocation7 + $0x9c] sm:$0xff]
        %v3972 = vld [vmem:[#allocation7 + $0xa4] sm:$0xf]
        %v3973 = vld [vmem:[#allocation7 + $0xa8] sm:$0xff]
        %v3974 = vld [vmem:[#allocation7 + $0xb0] sm:$0xf]
        %v3975 = vld [vmem:[#allocation7 + $0xb4] sm:$0xff]
        %v3976 = vld [vmem:[#allocation7 + $0xbc] sm:$0xf]
        %v3977 = vld [vmem:[#allocation7 + $0xc0] sm:$0xff]
        %v3978 = vld [vmem:[#allocation7 + $0xc8] sm:$0xf]
        %v3979 = vld [vmem:[#allocation7 + $0xcc] sm:$0xff]
        %v3980 = vld [vmem:[#allocation7 + $0xd4] sm:$0xf]
        %v3981 = vld [vmem:[#allocation7 + $0xd8] sm:$0xff]
        %v3982 = vld [vmem:[#allocation7 + $0xe0] sm:$0xf]
        %v3983 = vld [vmem:[#allocation7 + $0xe4] sm:$0xff]
        %v3984 = vld [vmem:[#allocation7 + $0xec] sm:$0xf]
        %v3985 = vld [vmem:[#allocation7 + $0xf0] sm:$0xff]
        %v3986 = vld [vmem:[#allocation7 + $0xf8] sm:$0xf]
        %v3987 = vld [vmem:[#allocation7 + $0xfc] sm:$0xff]
        %v3988 = vld [vmem:[#allocation7 + $0x104] sm:$0xf]
        %v3989 = vld [vmem:[#allocation7 + $0x108] sm:$0xff]
        %v3990 = vld [vmem:[#allocation7 + $0x110] sm:$0xf]
        %v3991 = vld [vmem:[#allocation7 + $0x114] sm:$0xff]
        %v3992 = vld [vmem:[#allocation7 + $0x11c] sm:$0xf]
        %v4017 = vunpack.c.l.b16 %v3969
        %v4018 = vunpack.c.h.b16 %v3969
        %v4019 = vunpack.c.l.b16 %v3970
        %v4020 = vunpack.c.l.b16 %v3971
        %v4021 = vunpack.c.h.b16 %v3971
        %v4022 = vunpack.c.l.b16 %v3972
        %v4023 = vunpack.c.l.b16 %v3973
        %v4024 = vunpack.c.h.b16 %v3973
        %v4025 = vunpack.c.l.b16 %v3974
        %v4026 = vunpack.c.l.b16 %v3975
        %v4027 = vunpack.c.h.b16 %v3975
        %v4028 = vunpack.c.l.b16 %v3976
        %v4029 = vunpack.c.l.b16 %v3977
        %v4030 = vunpack.c.h.b16 %v3977
        %v4031 = vunpack.c.l.b16 %v3978
        %v4032 = vunpack.c.l.b16 %v3979
        %v4033 = vunpack.c.h.b16 %v3979
        %v4034 = vunpack.c.l.b16 %v3980
        %v4035 = vunpack.c.l.b16 %v3981
        %v4036 = vunpack.c.h.b16 %v3981
        %v4037 = vunpack.c.l.b16 %v3982
        %v4038 = vunpack.c.l.b16 %v3983
        %v4039 = vunpack.c.h.b16 %v3983
        %v4040 = vunpack.c.l.b16 %v3984
        %v4041 = vunpack.c.l.b16 %v3985
        %v4042 = vunpack.c.h.b16 %v3985
        %v4043 = vunpack.c.l.b16 %v3986
        %v4044 = vunpack.c.l.b16 %v3987
        %v4045 = vunpack.c.h.b16 %v3987
        %v4046 = vunpack.c.l.b16 %v3988
        %v4047 = vunpack.c.l.b16 %v3989
        %v4048 = vunpack.c.h.b16 %v3989
        %v4049 = vunpack.c.l.b16 %v3990
        %v4050 = vunpack.c.l.b16 %v3991
        %v4051 = vunpack.c.h.b16 %v3991
        %v4052 = vunpack.c.l.b16 %v3992
        %v4053 = vpack.c.b16 %v4020, %v4017
        %v4054 = vpack.c.b16 %v4021, %v4018
        %v4055 = vpack.c.b16 %v4022, %v4019
        %v4056 = vpack.c.b16 %v4026, %v4023
        %v4057 = vpack.c.b16 %v4027, %v4024
        %v4058 = vpack.c.b16 %v4028, %v4025
        %v4059 = vpack.c.b16 %v4032, %v4029
        %v4060 = vpack.c.b16 %v4033, %v4030
        %v4061 = vpack.c.b16 %v4034, %v4031
        %v4062 = vpack.c.b16 %v4038, %v4035
        %v4063 = vpack.c.b16 %v4039, %v4036
        %v4064 = vpack.c.b16 %v4040, %v4037
        %v4065 = vpack.c.b16 %v4044, %v4041
        %v4066 = vpack.c.b16 %v4045, %v4042
        %v4067 = vpack.c.b16 %v4046, %v4043
        %v4068 = vpack.c.b16 %v4050, %v4047
        %v4069 = vpack.c.b16 %v4051, %v4048
        %v4070 = vpack.c.b16 %v4052, %v4049
        %v4090 = vsel %vm2907, %v3961, 0
        %v4093 = vsel %vm2907, %v3962, 0
        %v4096 = vsel %vm2907, %v3963, 0
        %v4099 = vsel %vm2907, %v3964, 0
        %v4102 = vsel %vm2907, %v3965, 0
        %v4105 = vsel %vm2907, %v3966, 0
        %v4108 = vsel %vm2907, %v3967, 0
        %v4111 = vsel %vm2907, %v3968, 0
        %4113 = vmatprep.subr.bf16.mxu0 %v4054
        %4114 = vmatpush1.bf16.msra.mxu0 %v4053
        %4115 = vmatprep.subr.bf16.mxu0 %v4057
        %4116 = vmatpush1.bf16.msra.mxu0 %v4056
        %4117 = vmatprep.subr.bf16.mxu0 %v4060
        %4118 = vmatpush1.bf16.msra.mxu0 %v4059
        %4119 = vmatprep.subr.bf16.mxu0 %v4063
        %4120 = vmatpush1.bf16.msra.mxu0 %v4062
        %4121 = vmatprep.subr.bf16.mxu0 %v4066
        %4122 = vmatpush1.bf16.msra.mxu0 %v4065
        %4123 = vmatprep.subr.bf16.mxu0 %v4069
        %4124 = vmatpush1.bf16.msra.mxu0 %v4068
        %4125 = vmatprep.subr.bf16.mxu0 0
        %4126 = vmatpush1.bf16.msra.mxu0 0
        %4127 = vmatprep.subr.bf16.mxu0 0
        %4128 = vmatpush1.bf16.msra.mxu0 0
        %4129 = vmatprep.subr.bf16.mxu0 0
        %4130 = vmatpush1.bf16.msra.mxu0 0
        %4131 = vmatprep.subr.bf16.mxu0 0
        %4132 = vmatpush1.bf16.msra.mxu0 0
        %4133 = vmatprep.subr.bf16.mxu0 0
        %4134 = vmatpush1.bf16.msra.mxu0 0
        %4135 = vmatprep.subr.bf16.mxu0 0
        %4136 = vmatpush1.bf16.msra.mxu0 0
        %4137 = vmatprep.subr.bf16.mxu0 0
        %4138 = vmatpush1.bf16.msra.mxu0 0
        %4139 = vmatprep.subr.bf16.mxu0 0
        %4140 = vmatpush1.bf16.msra.mxu0 0
        %4141 = vmatprep.subr.bf16.mxu0 0
        %4142 = vmatpush1.bf16.msra.mxu0 0
        %4143 = vmatprep.subr.bf16.mxu0 0
        %4144 = vmatpush1.bf16.msra.mxu0 0
        %4145 = vmatprep.mubr.bf16.mxu0 0
        %4146 = vmatmul.mubr.bf16.gmra.mrb[0].mxu0 %v4090
        %v4147 = vpop.f32.mrb[0].mxu0
        %v4148 = vadd.f32 0.0, %v4147
        %v4149 = vpop.f32.mrb[0].mxu0
        %v4150 = vadd.f32 0.0, %v4149
        %v4151 = vpop.f32.mrb[0].mxu0
        %v4152 = vadd.f32 0.0, %v4151
        %v4153 = vpop.f32.mrb[0].mxu0
        %v4154 = vadd.f32 0.0, %v4153
        %4155 = vmatprep.mubr.bf16.mxu0 0
        %4156 = vmatmul.mubr.bf16.gmra.mrb[0].mxu0 %v4093
        %v4157 = vpop.f32.mrb[0].mxu0
        %v4158 = vadd.f32 0.0, %v4157
        %v4159 = vpop.f32.mrb[0].mxu0
        %v4160 = vadd.f32 0.0, %v4159
        %v4161 = vpop.f32.mrb[0].mxu0
        %v4162 = vadd.f32 0.0, %v4161
        %v4163 = vpop.f32.mrb[0].mxu0
        %v4164 = vadd.f32 0.0, %v4163
        %4165 = vmatprep.mubr.bf16.mxu0 0
        %4166 = vmatmul.mubr.bf16.gmra.mrb[0].mxu0 %v4096
        %v4167 = vpop.f32.mrb[0].mxu0
        %v4168 = vadd.f32 0.0, %v4167
        %v4169 = vpop.f32.mrb[0].mxu0
        %v4170 = vadd.f32 0.0, %v4169
        %v4171 = vpop.f32.mrb[0].mxu0
        %v4172 = vadd.f32 0.0, %v4171
        %v4173 = vpop.f32.mrb[0].mxu0
        %v4174 = vadd.f32 0.0, %v4173
        %4175 = vmatprep.mubr.bf16.mxu0 0
        %4176 = vmatmul.mubr.bf16.gmra.mrb[0].mxu0 %v4099
        %v4177 = vpop.f32.mrb[0].mxu0
        %v4178 = vadd.f32 0.0, %v4177
        %v4179 = vpop.f32.mrb[0].mxu0
        %v4180 = vadd.f32 0.0, %v4179
        %v4181 = vpop.f32.mrb[0].mxu0
        %v4182 = vadd.f32 0.0, %v4181
        %v4183 = vpop.f32.mrb[0].mxu0
        %v4184 = vadd.f32 0.0, %v4183
        %4185 = vmatprep.mubr.bf16.mxu0 0
        %4186 = vmatmul.mubr.bf16.gmra.mrb[0].mxu0 %v4102
        %v4187 = vpop.f32.mrb[0].mxu0
        %v4188 = vadd.f32 0.0, %v4187
        %v4189 = vpop.f32.mrb[0].mxu0
        %v4190 = vadd.f32 0.0, %v4189
        %v4191 = vpop.f32.mrb[0].mxu0
        %v4192 = vadd.f32 0.0, %v4191
        %v4193 = vpop.f32.mrb[0].mxu0
        %v4194 = vadd.f32 0.0, %v4193
        %4195 = vmatprep.mubr.bf16.mxu0 0
        %4196 = vmatmul.mubr.bf16.gmra.mrb[0].mxu0 %v4105
        %v4197 = vpop.f32.mrb[0].mxu0
        %v4198 = vadd.f32 0.0, %v4197
        %v4199 = vpop.f32.mrb[0].mxu0
        %v4200 = vadd.f32 0.0, %v4199
        %v4201 = vpop.f32.mrb[0].mxu0
        %v4202 = vadd.f32 0.0, %v4201
        %v4203 = vpop.f32.mrb[0].mxu0
        %v4204 = vadd.f32 0.0, %v4203
        %4205 = vmatprep.mubr.bf16.mxu0 0
        %4206 = vmatmul.mubr.bf16.gmra.mrb[0].mxu0 %v4108
        %v4207 = vpop.f32.mrb[0].mxu0
        %v4208 = vadd.f32 0.0, %v4207
        %v4209 = vpop.f32.mrb[0].mxu0
        %v4210 = vadd.f32 0.0, %v4209
        %v4211 = vpop.f32.mrb[0].mxu0
        %v4212 = vadd.f32 0.0, %v4211
        %v4213 = vpop.f32.mrb[0].mxu0
        %v4214 = vadd.f32 0.0, %v4213
        %4215 = vmatprep.mubr.bf16.mxu0 0
        %4216 = vmatmul.mubr.bf16.gmra.mrb[0].mxu0 %v4111
        %v4217 = vpop.f32.mrb[0].mxu0
        %v4218 = vadd.f32 0.0, %v4217
        %v4219 = vpop.f32.mrb[0].mxu0
        %v4220 = vadd.f32 0.0, %v4219
        %v4221 = vpop.f32.mrb[0].mxu0
        %v4222 = vadd.f32 0.0, %v4221
        %v4223 = vpop.f32.mrb[0].mxu0
        %v4224 = vadd.f32 0.0, %v4223
        %4225 = vdwg.mxu0
        %4226 = vmatprep.subr.bf16.mxu0 0
        %4227 = vmatpush1.bf16.msra.mxu0 %v4055
        %4228 = vmatprep.subr.bf16.mxu0 0
        %4229 = vmatpush1.bf16.msra.mxu0 %v4058
        %4230 = vmatprep.subr.bf16.mxu0 0
        %4231 = vmatpush1.bf16.msra.mxu0 %v4061
        %4232 = vmatprep.subr.bf16.mxu0 0
        %4233 = vmatpush1.bf16.msra.mxu0 %v4064
        %4234 = vmatprep.subr.bf16.mxu0 0
        %4235 = vmatpush1.bf16.msra.mxu0 %v4067
        %4236 = vmatprep.subr.bf16.mxu0 0
        %4237 = vmatpush1.bf16.msra.mxu0 %v4070
        %4238 = vmatprep.subr.bf16.mxu0 0
        %4239 = vmatpush1.bf16.msra.mxu0 0
        %4240 = vmatprep.subr.bf16.mxu0 0
        %4241 = vmatpush1.bf16.msra.mxu0 0
        %4242 = vmatprep.subr.bf16.mxu0 0
        %4243 = vmatpush1.bf16.msra.mxu0 0
        %4244 = vmatprep.subr.bf16.mxu0 0
        %4245 = vmatpush1.bf16.msra.mxu0 0
        %4246 = vmatprep.subr.bf16.mxu0 0
        %4247 = vmatpush1.bf16.msra.mxu0 0
        %4248 = vmatprep.subr.bf16.mxu0 0
        %4249 = vmatpush1.bf16.msra.mxu0 0
        %4250 = vmatprep.subr.bf16.mxu0 0
        %4251 = vmatpush1.bf16.msra.mxu0 0
        %4252 = vmatprep.subr.bf16.mxu0 0
        %4253 = vmatpush1.bf16.msra.mxu0 0
        %4254 = vmatprep.subr.bf16.mxu0 0
        %4255 = vmatpush1.bf16.msra.mxu0 0
        %4256 = vmatprep.subr.bf16.mxu0 0
        %4257 = vmatpush1.bf16.msra.mxu0 0
        %4258 = vmatprep.mubr.bf16.mxu0 0
        %4259 = vmatmul.mubr.bf16.gmra.mrb[0].mxu0 %v4090
        %v4260 = vpop.f32.mrb[0].mxu0
        %v4261 = vadd.f32 0.0, %v4260
        %v4262 = vpop.f32.mrb[0].mxu0
        %v4263 = vpop.f32.mrb[0].mxu0
        %v4264 = vadd.f32 0.0, %v4263
        %v4265 = vpop.f32.mrb[0].mxu0
        %4266 = vmatprep.mubr.bf16.mxu0 0
        %4267 = vmatmul.mubr.bf16.gmra.mrb[0].mxu0 %v4093
        %v4268 = vpop.f32.mrb[0].mxu0
        %v4269 = vadd.f32 0.0, %v4268
        %v4270 = vpop.f32.mrb[0].mxu0
        %v4271 = vpop.f32.mrb[0].mxu0
        %v4272 = vadd.f32 0.0, %v4271
        %v4273 = vpop.f32.mrb[0].mxu0
        %4274 = vmatprep.mubr.bf16.mxu0 0
        %4275 = vmatmul.mubr.bf16.gmra.mrb[0].mxu0 %v4096
        %v4276 = vpop.f32.mrb[0].mxu0
        %v4277 = vadd.f32 0.0, %v4276
        %v4278 = vpop.f32.mrb[0].mxu0
        %v4279 = vpop.f32.mrb[0].mxu0
        %v4280 = vadd.f32 0.0, %v4279
        %v4281 = vpop.f32.mrb[0].mxu0
        %4282 = vmatprep.mubr.bf16.mxu0 0
        %4283 = vmatmul.mubr.bf16.gmra.mrb[0].mxu0 %v4099
        %v4284 = vpop.f32.mrb[0].mxu0
        %v4285 = vadd.f32 0.0, %v4284
        %v4286 = vpop.f32.mrb[0].mxu0
        %v4287 = vpop.f32.mrb[0].mxu0
        %v4288 = vadd.f32 0.0, %v4287
        %v4289 = vpop.f32.mrb[0].mxu0
        %4290 = vmatprep.mubr.bf16.mxu0 0
        %4291 = vmatmul.mubr.bf16.gmra.mrb[0].mxu0 %v4102
        %v4292 = vpop.f32.mrb[0].mxu0
        %v4293 = vadd.f32 0.0, %v4292
        %v4294 = vpop.f32.mrb[0].mxu0
        %v4295 = vpop.f32.mrb[0].mxu0
        %v4296 = vadd.f32 0.0, %v4295
        %v4297 = vpop.f32.mrb[0].mxu0
        %4298 = vmatprep.mubr.bf16.mxu0 0
        %4299 = vmatmul.mubr.bf16.gmra.mrb[0].mxu0 %v4105
        %v4300 = vpop.f32.mrb[0].mxu0
        %v4301 = vadd.f32 0.0, %v4300
        %v4302 = vpop.f32.mrb[0].mxu0
        %v4303 = vpop.f32.mrb[0].mxu0
        %v4304 = vadd.f32 0.0, %v4303
        %v4305 = vpop.f32.mrb[0].mxu0
        %4306 = vmatprep.mubr.bf16.mxu0 0
        %4307 = vmatmul.mubr.bf16.gmra.mrb[0].mxu0 %v4108
        %v4308 = vpop.f32.mrb[0].mxu0
        %v4309 = vadd.f32 0.0, %v4308
        %v4310 = vpop.f32.mrb[0].mxu0
        %v4311 = vpop.f32.mrb[0].mxu0
        %v4312 = vadd.f32 0.0, %v4311
        %v4313 = vpop.f32.mrb[0].mxu0
        %4314 = vmatprep.mubr.bf16.mxu0 0
        %4315 = vmatmul.mubr.bf16.gmra.mrb[0].mxu0 %v4111
        %v4316 = vpop.f32.mrb[0].mxu0
        %v4317 = vadd.f32 0.0, %v4316
        %v4318 = vpop.f32.mrb[0].mxu0
        %v4319 = vpop.f32.mrb[0].mxu0
        %v4320 = vadd.f32 0.0, %v4319
        %v4321 = vpop.f32.mrb[0].mxu0
        %4322 = vdwg.mxu0
        %v4347 = vunpack.c.l.b16 %v3326
        %v4348 = vunpack.c.h.b16 %v3326
        %v4349 = vunpack.c.l.b16 %v3327
        %v4350 = vunpack.c.l.b16 %v3328
        %v4351 = vunpack.c.h.b16 %v3328
        %v4352 = vunpack.c.l.b16 %v3329
        %v4353 = vunpack.c.l.b16 %v3330
        %v4354 = vunpack.c.h.b16 %v3330
        %v4355 = vunpack.c.l.b16 %v3331
        %v4356 = vunpack.c.l.b16 %v3332
        %v4357 = vunpack.c.h.b16 %v3332
        %v4358 = vunpack.c.l.b16 %v3333
        %v4359 = vunpack.c.l.b16 %v3334
        %v4360 = vunpack.c.h.b16 %v3334
        %v4361 = vunpack.c.l.b16 %v3335
        %v4362 = vunpack.c.l.b16 %v3336
        %v4363 = vunpack.c.h.b16 %v3336
        %v4364 = vunpack.c.l.b16 %v3337
        %v4365 = vunpack.c.l.b16 %v3338
        %v4366 = vunpack.c.h.b16 %v3338
        %v4367 = vunpack.c.l.b16 %v3339
        %v4368 = vunpack.c.l.b16 %v3340
        %v4369 = vunpack.c.h.b16 %v3340
        %v4370 = vunpack.c.l.b16 %v3341
        %v4371 = vunpack.c.l.b16 %v3342
        %v4372 = vunpack.c.h.b16 %v3342
        %v4373 = vunpack.c.l.b16 %v3343
        %v4374 = vunpack.c.l.b16 %v3344
        %v4375 = vunpack.c.h.b16 %v3344
        %v4376 = vunpack.c.l.b16 %v3345
        %v4377 = vunpack.c.l.b16 %v3346
        %v4378 = vunpack.c.h.b16 %v3346
        %v4379 = vunpack.c.l.b16 %v3347
        %v4380 = vunpack.c.l.b16 %v3348
        %v4381 = vunpack.c.h.b16 %v3348
        %v4382 = vunpack.c.l.b16 %v3349
        %v4383 = vpack.c.b16 %v4350, %v4347
        %v4384 = vpack.c.b16 %v4351, %v4348
        %v4385 = vpack.c.b16 %v4352, %v4349
        %v4386 = vpack.c.b16 %v4356, %v4353
        %v4387 = vpack.c.b16 %v4357, %v4354
        %v4388 = vpack.c.b16 %v4358, %v4355
        %v4389 = vpack.c.b16 %v4362, %v4359
        %v4390 = vpack.c.b16 %v4363, %v4360
        %v4391 = vpack.c.b16 %v4364, %v4361
        %v4392 = vpack.c.b16 %v4368, %v4365
        %v4393 = vpack.c.b16 %v4369, %v4366
        %v4394 = vpack.c.b16 %v4370, %v4367
        %v4395 = vpack.c.b16 %v4374, %v4371
        %v4396 = vpack.c.b16 %v4375, %v4372
        %v4397 = vpack.c.b16 %v4376, %v4373
        %v4398 = vpack.c.b16 %v4380, %v4377
        %v4399 = vpack.c.b16 %v4381, %v4378
        %v4400 = vpack.c.b16 %v4382, %v4379
        %v4420 = vsel %vm2907, %v3318, 0
        %v4423 = vsel %vm2907, %v3319, 0
        %v4426 = vsel %vm2907, %v3320, 0
        %v4429 = vsel %vm2907, %v3321, 0
        %v4432 = vsel %vm2907, %v3322, 0
        %v4435 = vsel %vm2907, %v3323, 0
        %v4438 = vsel %vm2907, %v3324, 0
        %v4441 = vsel %vm2907, %v3325, 0
        %4443 = vmatprep.subr.bf16.mxu0 %v4384
        %4444 = vmatpush1.bf16.msra.mxu0 %v4383
        %4445 = vmatprep.subr.bf16.mxu0 %v4387
        %4446 = vmatpush1.bf16.msra.mxu0 %v4386
        %4447 = vmatprep.subr.bf16.mxu0 %v4390
        %4448 = vmatpush1.bf16.msra.mxu0 %v4389
        %4449 = vmatprep.subr.bf16.mxu0 %v4393
        %4450 = vmatpush1.bf16.msra.mxu0 %v4392
        %4451 = vmatprep.subr.bf16.mxu0 %v4396
        %4452 = vmatpush1.bf16.msra.mxu0 %v4395
        %4453 = vmatprep.subr.bf16.mxu0 %v4399
        %4454 = vmatpush1.bf16.msra.mxu0 %v4398
        %4455 = vmatprep.subr.bf16.mxu0 0
        %4456 = vmatpush1.bf16.msra.mxu0 0
        %4457 = vmatprep.subr.bf16.mxu0 0
        %4458 = vmatpush1.bf16.msra.mxu0 0
        %4459 = vmatprep.subr.bf16.mxu0 0
        %4460 = vmatpush1.bf16.msra.mxu0 0
        %4461 = vmatprep.subr.bf16.mxu0 0
        %4462 = vmatpush1.bf16.msra.mxu0 0
        %4463 = vmatprep.subr.bf16.mxu0 0
        %4464 = vmatpush1.bf16.msra.mxu0 0
        %4465 = vmatprep.subr.bf16.mxu0 0
        %4466 = vmatpush1.bf16.msra.mxu0 0
        %4467 = vmatprep.subr.bf16.mxu0 0
        %4468 = vmatpush1.bf16.msra.mxu0 0
        %4469 = vmatprep.subr.bf16.mxu0 0
        %4470 = vmatpush1.bf16.msra.mxu0 0
        %4471 = vmatprep.subr.bf16.mxu0 0
        %4472 = vmatpush1.bf16.msra.mxu0 0
        %4473 = vmatprep.subr.bf16.mxu0 0
        %4474 = vmatpush1.bf16.msra.mxu0 0
        %4475 = vmatprep.mubr.bf16.mxu0 0
        %4476 = vmatmul.mubr.bf16.gmra.mrb[0].mxu0 %v4420
        %v4477 = vpop.f32.mrb[0].mxu0
        %v4478 = vadd.f32 %v4148, %v4477
        %v4479 = vpop.f32.mrb[0].mxu0
        %v4480 = vadd.f32 %v4150, %v4479
        %v4481 = vpop.f32.mrb[0].mxu0
        %v4482 = vadd.f32 %v4152, %v4481
        %v4483 = vpop.f32.mrb[0].mxu0
        %v4484 = vadd.f32 %v4154, %v4483
        %4485 = vmatprep.mubr.bf16.mxu0 0
        %4486 = vmatmul.mubr.bf16.gmra.mrb[0].mxu0 %v4423
        %v4487 = vpop.f32.mrb[0].mxu0
        %v4488 = vadd.f32 %v4158, %v4487
        %v4489 = vpop.f32.mrb[0].mxu0
        %v4490 = vadd.f32 %v4160, %v4489
        %v4491 = vpop.f32.mrb[0].mxu0
        %v4492 = vadd.f32 %v4162, %v4491
        %v4493 = vpop.f32.mrb[0].mxu0
        %v4494 = vadd.f32 %v4164, %v4493
        %4495 = vmatprep.mubr.bf16.mxu0 0
        %4496 = vmatmul.mubr.bf16.gmra.mrb[0].mxu0 %v4426
        %v4497 = vpop.f32.mrb[0].mxu0
        %v4498 = vadd.f32 %v4168, %v4497
        %v4499 = vpop.f32.mrb[0].mxu0
        %v4500 = vadd.f32 %v4170, %v4499
        %v4501 = vpop.f32.mrb[0].mxu0
        %v4502 = vadd.f32 %v4172, %v4501
        %v4503 = vpop.f32.mrb[0].mxu0
        %v4504 = vadd.f32 %v4174, %v4503
        %4505 = vmatprep.mubr.bf16.mxu0 0
        %4506 = vmatmul.mubr.bf16.gmra.mrb[0].mxu0 %v4429
        %v4507 = vpop.f32.mrb[0].mxu0
        %v4508 = vadd.f32 %v4178, %v4507
        %v4509 = vpop.f32.mrb[0].mxu0
        %v4510 = vadd.f32 %v4180, %v4509
        %v4511 = vpop.f32.mrb[0].mxu0
        %v4512 = vadd.f32 %v4182, %v4511
        %v4513 = vpop.f32.mrb[0].mxu0
        %v4514 = vadd.f32 %v4184, %v4513
        %4515 = vmatprep.mubr.bf16.mxu0 0
        %4516 = vmatmul.mubr.bf16.gmra.mrb[0].mxu0 %v4432
        %v4517 = vpop.f32.mrb[0].mxu0
        %v4518 = vadd.f32 %v4188, %v4517
        %v4519 = vpop.f32.mrb[0].mxu0
        %v4520 = vadd.f32 %v4190, %v4519
        %v4521 = vpop.f32.mrb[0].mxu0
        %v4522 = vadd.f32 %v4192, %v4521
        %v4523 = vpop.f32.mrb[0].mxu0
        %v4524 = vadd.f32 %v4194, %v4523
        %4525 = vmatprep.mubr.bf16.mxu0 0
        %4526 = vmatmul.mubr.bf16.gmra.mrb[0].mxu0 %v4435
        %v4527 = vpop.f32.mrb[0].mxu0
        %v4528 = vadd.f32 %v4198, %v4527
        %v4529 = vpop.f32.mrb[0].mxu0
        %v4530 = vadd.f32 %v4200, %v4529
        %v4531 = vpop.f32.mrb[0].mxu0
        %v4532 = vadd.f32 %v4202, %v4531
        %v4533 = vpop.f32.mrb[0].mxu0
        %v4534 = vadd.f32 %v4204, %v4533
        %4535 = vmatprep.mubr.bf16.mxu0 0
        %4536 = vmatmul.mubr.bf16.gmra.mrb[0].mxu0 %v4438
        %v4537 = vpop.f32.mrb[0].mxu0
        %v4538 = vadd.f32 %v4208, %v4537
        %v4539 = vpop.f32.mrb[0].mxu0
        %v4540 = vadd.f32 %v4210, %v4539
        %v4541 = vpop.f32.mrb[0].mxu0
        %v4542 = vadd.f32 %v4212, %v4541
        %v4543 = vpop.f32.mrb[0].mxu0
        %v4544 = vadd.f32 %v4214, %v4543
        %4545 = vmatprep.mubr.bf16.mxu0 0
        %4546 = vmatmul.mubr.bf16.gmra.mrb[0].mxu0 %v4441
        %v4547 = vpop.f32.mrb[0].mxu0
        %v4548 = vadd.f32 %v4218, %v4547
        %v4549 = vpop.f32.mrb[0].mxu0
        %v4550 = vadd.f32 %v4220, %v4549
        %v4551 = vpop.f32.mrb[0].mxu0
        %v4552 = vadd.f32 %v4222, %v4551
        %v4553 = vpop.f32.mrb[0].mxu0
        %v4554 = vadd.f32 %v4224, %v4553
        %4555 = vdwg.mxu0
        %4556 = vmatprep.subr.bf16.mxu0 0
        %4557 = vmatpush1.bf16.msra.mxu0 %v4385
        %4558 = vmatprep.subr.bf16.mxu0 0
        %4559 = vmatpush1.bf16.msra.mxu0 %v4388
        %4560 = vmatprep.subr.bf16.mxu0 0
        %4561 = vmatpush1.bf16.msra.mxu0 %v4391
        %4562 = vmatprep.subr.bf16.mxu0 0
        %4563 = vmatpush1.bf16.msra.mxu0 %v4394
        %4564 = vmatprep.subr.bf16.mxu0 0
        %4565 = vmatpush1.bf16.msra.mxu0 %v4397
        %4566 = vmatprep.subr.bf16.mxu0 0
        %4567 = vmatpush1.bf16.msra.mxu0 %v4400
        %4568 = vmatprep.subr.bf16.mxu0 0
        %4569 = vmatpush1.bf16.msra.mxu0 0
        %4570 = vmatprep.subr.bf16.mxu0 0
        %4571 = vmatpush1.bf16.msra.mxu0 0
        %4572 = vmatprep.subr.bf16.mxu0 0
        %4573 = vmatpush1.bf16.msra.mxu0 0
        %4574 = vmatprep.subr.bf16.mxu0 0
        %4575 = vmatpush1.bf16.msra.mxu0 0
        %4576 = vmatprep.subr.bf16.mxu0 0
        %4577 = vmatpush1.bf16.msra.mxu0 0
        %4578 = vmatprep.subr.bf16.mxu0 0
        %4579 = vmatpush1.bf16.msra.mxu0 0
        %4580 = vmatprep.subr.bf16.mxu0 0
        %4581 = vmatpush1.bf16.msra.mxu0 0
        %4582 = vmatprep.subr.bf16.mxu0 0
        %4583 = vmatpush1.bf16.msra.mxu0 0
        %4584 = vmatprep.subr.bf16.mxu0 0
        %4585 = vmatpush1.bf16.msra.mxu0 0
        %4586 = vmatprep.subr.bf16.mxu0 0
        %4587 = vmatpush1.bf16.msra.mxu0 0
        %4588 = vmatprep.mubr.bf16.mxu0 0
        %4589 = vmatmul.mubr.bf16.gmra.mrb[0].mxu0 %v4420
        %v4590 = vpop.f32.mrb[0].mxu0
        %v4591 = vadd.f32 %v4261, %v4590
        %v4592 = vpop.f32.mrb[0].mxu0
        %v4593 = vpop.f32.mrb[0].mxu0
        %v4594 = vadd.f32 %v4264, %v4593
        %v4595 = vpop.f32.mrb[0].mxu0
        %4596 = vmatprep.mubr.bf16.mxu0 0
        %4597 = vmatmul.mubr.bf16.gmra.mrb[0].mxu0 %v4423
        %v4598 = vpop.f32.mrb[0].mxu0
        %v4599 = vadd.f32 %v4269, %v4598
        %v4600 = vpop.f32.mrb[0].mxu0
        %v4601 = vpop.f32.mrb[0].mxu0
        %v4602 = vadd.f32 %v4272, %v4601
        %v4603 = vpop.f32.mrb[0].mxu0
        %4604 = vmatprep.mubr.bf16.mxu0 0
        %4605 = vmatmul.mubr.bf16.gmra.mrb[0].mxu0 %v4426
        %v4606 = vpop.f32.mrb[0].mxu0
        %v4607 = vadd.f32 %v4277, %v4606
        %v4608 = vpop.f32.mrb[0].mxu0
        %v4609 = vpop.f32.mrb[0].mxu0
        %v4610 = vadd.f32 %v4280, %v4609
        %v4611 = vpop.f32.mrb[0].mxu0
        %4612 = vmatprep.mubr.bf16.mxu0 0
        %4613 = vmatmul.mubr.bf16.gmra.mrb[0].mxu0 %v4429
        %v4614 = vpop.f32.mrb[0].mxu0
        %v4615 = vadd.f32 %v4285, %v4614
        %v4616 = vpop.f32.mrb[0].mxu0
        %v4617 = vpop.f32.mrb[0].mxu0
        %v4618 = vadd.f32 %v4288, %v4617
        %v4619 = vpop.f32.mrb[0].mxu0
        %4620 = vmatprep.mubr.bf16.mxu0 0
        %4621 = vmatmul.mubr.bf16.gmra.mrb[0].mxu0 %v4432
        %v4622 = vpop.f32.mrb[0].mxu0
        %v4623 = vadd.f32 %v4293, %v4622
        %v4624 = vpop.f32.mrb[0].mxu0
        %v4625 = vpop.f32.mrb[0].mxu0
        %v4626 = vadd.f32 %v4296, %v4625
        %v4627 = vpop.f32.mrb[0].mxu0
        %4628 = vmatprep.mubr.bf16.mxu0 0
        %4629 = vmatmul.mubr.bf16.gmra.mrb[0].mxu0 %v4435
        %v4630 = vpop.f32.mrb[0].mxu0
        %v4631 = vadd.f32 %v4301, %v4630
        %v4632 = vpop.f32.mrb[0].mxu0
        %v4633 = vpop.f32.mrb[0].mxu0
        %v4634 = vadd.f32 %v4304, %v4633
        %v4635 = vpop.f32.mrb[0].mxu0
        %4636 = vmatprep.mubr.bf16.mxu0 0
        %4637 = vmatmul.mubr.bf16.gmra.mrb[0].mxu0 %v4438
        %v4638 = vpop.f32.mrb[0].mxu0
        %v4639 = vadd.f32 %v4309, %v4638
        %v4640 = vpop.f32.mrb[0].mxu0
        %v4641 = vpop.f32.mrb[0].mxu0
        %v4642 = vadd.f32 %v4312, %v4641
        %v4643 = vpop.f32.mrb[0].mxu0
        %4644 = vmatprep.mubr.bf16.mxu0 0
        %4645 = vmatmul.mubr.bf16.gmra.mrb[0].mxu0 %v4441
        %v4646 = vpop.f32.mrb[0].mxu0
        %v4647 = vadd.f32 %v4317, %v4646
        %v4648 = vpop.f32.mrb[0].mxu0
        %v4649 = vpop.f32.mrb[0].mxu0
        %v4650 = vadd.f32 %v4320, %v4649
        %v4651 = vpop.f32.mrb[0].mxu0
        %4652 = vdwg.mxu0
        %v4653 = vpack.c.bf16 %v2128, %v2124
        %v4654 = vpack.c.bf16 %v2138, %v2134
        %v4655 = vpack.c.bf16 %v2148, %v2144
        %v4656 = vpack.c.bf16 %v2158, %v2154
        %v4657 = vpack.c.bf16 %v2168, %v2164
        %v4658 = vpack.c.bf16 %v2178, %v2174
        %v4659 = vpack.c.bf16 %v2188, %v2184
        %v4660 = vpack.c.bf16 %v2198, %v2194
        %v4661 = vpack.c.bf16 %v2356, %v2352
        %v4662 = vpack.c.bf16 %v2366, %v2362
        %v4663 = vpack.c.bf16 %v2376, %v2372
        %v4664 = vpack.c.bf16 %v2386, %v2382
        %v4665 = vpack.c.bf16 %v2396, %v2392
        %v4666 = vpack.c.bf16 %v2406, %v2402
        %v4667 = vpack.c.bf16 %v2416, %v2412
        %v4668 = vpack.c.bf16 %v2426, %v2422
        %v4669 = vpack.c.bf16 %v2789, %v2786
        %v4670 = vpack.c.bf16 %v2797, %v2794
        %v4671 = vpack.c.bf16 %v2805, %v2802
        %v4672 = vpack.c.bf16 %v2813, %v2810
        %v4673 = vpack.c.bf16 %v2821, %v2818
        %v4674 = vpack.c.bf16 %v2829, %v2826
        %v4675 = vpack.c.bf16 %v2837, %v2834
        %v4676 = vpack.c.bf16 %v2845, %v2842
        %4685 = vrot.lane.b32.xlu0 %v3350, 64
        %v4686 = vpop.permute.xlu0 %4685
        %4687 = vrot.lane.b32.xlu0 %v4653, 64
        %v4688 = vpop.permute.xlu0 %4687
        %4689 = vrot.lane.b32.xlu0 %v3351, 64
        %v4690 = vpop.permute.xlu0 %4689
        %4691 = vrot.lane.b32.xlu0 %v4654, 64
        %v4692 = vpop.permute.xlu0 %4691
        %4693 = vrot.lane.b32.xlu0 %v3352, 64
        %v4694 = vpop.permute.xlu0 %4693
        %4695 = vrot.lane.b32.xlu0 %v4655, 64
        %v4696 = vpop.permute.xlu0 %4695
        %4697 = vrot.lane.b32.xlu0 %v3353, 64
        %v4698 = vpop.permute.xlu0 %4697
        %4699 = vrot.lane.b32.xlu0 %v4656, 64
        %v4700 = vpop.permute.xlu0 %4699
        %4701 = vrot.lane.b32.xlu0 %v3354, 64
        %v4702 = vpop.permute.xlu0 %4701
        %4703 = vrot.lane.b32.xlu0 %v4657, 64
        %v4704 = vpop.permute.xlu0 %4703
        %4705 = vrot.lane.b32.xlu0 %v3355, 64
        %v4706 = vpop.permute.xlu0 %4705
        %4707 = vrot.lane.b32.xlu0 %v4658, 64
        %v4708 = vpop.permute.xlu0 %4707
        %4709 = vrot.lane.b32.xlu0 %v3356, 64
        %v4710 = vpop.permute.xlu0 %4709
        %4711 = vrot.lane.b32.xlu0 %v4659, 64
        %v4712 = vpop.permute.xlu0 %4711
        %4713 = vrot.lane.b32.xlu0 %v3357, 64
        %v4714 = vpop.permute.xlu0 %4713
        %4715 = vrot.lane.b32.xlu0 %v4660, 64
        %v4716 = vpop.permute.xlu0 %4715
        %vm4717 = vcmask 523264
        %v4718 = vsel %vm4717, %v4686, %v4688
        %v4719 = vsel %vm4717, %v4690, %v4692
        %v4720 = vsel %vm4717, %v4694, %v4696
        %v4721 = vsel %vm4717, %v4698, %v4700
        %v4722 = vsel %vm4717, %v4702, %v4704
        %v4723 = vsel %vm4717, %v4706, %v4708
        %v4724 = vsel %vm4717, %v4710, %v4712
        %v4725 = vsel %vm4717, %v4714, %v4716
        %4734 = vrot.lane.b32.xlu0 %v3358, 64
        %v4735 = vpop.permute.xlu0 %4734
        %4736 = vrot.lane.b32.xlu0 %v4661, 64
        %v4737 = vpop.permute.xlu0 %4736
        %4738 = vrot.lane.b32.xlu0 %v3359, 64
        %v4739 = vpop.permute.xlu0 %4738
        %4740 = vrot.lane.b32.xlu0 %v4662, 64
        %v4741 = vpop.permute.xlu0 %4740
        %4742 = vrot.lane.b32.xlu0 %v3360, 64
        %v4743 = vpop.permute.xlu0 %4742
        %4744 = vrot.lane.b32.xlu0 %v4663, 64
        %v4745 = vpop.permute.xlu0 %4744
        %4746 = vrot.lane.b32.xlu0 %v3361, 64
        %v4747 = vpop.permute.xlu0 %4746
        %4748 = vrot.lane.b32.xlu0 %v4664, 64
        %v4749 = vpop.permute.xlu0 %4748
        %4750 = vrot.lane.b32.xlu0 %v3362, 64
        %v4751 = vpop.permute.xlu0 %4750
        %4752 = vrot.lane.b32.xlu0 %v4665, 64
        %v4753 = vpop.permute.xlu0 %4752
        %4754 = vrot.lane.b32.xlu0 %v3363, 64
        %v4755 = vpop.permute.xlu0 %4754
        %4756 = vrot.lane.b32.xlu0 %v4666, 64
        %v4757 = vpop.permute.xlu0 %4756
        %4758 = vrot.lane.b32.xlu0 %v3364, 64
        %v4759 = vpop.permute.xlu0 %4758
        %4760 = vrot.lane.b32.xlu0 %v4667, 64
        %v4761 = vpop.permute.xlu0 %4760
        %4762 = vrot.lane.b32.xlu0 %v3365, 64
        %v4763 = vpop.permute.xlu0 %4762
        %4764 = vrot.lane.b32.xlu0 %v4668, 64
        %v4765 = vpop.permute.xlu0 %4764
        %v4766 = vsel %vm4717, %v4735, %v4737
        %v4767 = vsel %vm4717, %v4739, %v4741
        %v4768 = vsel %vm4717, %v4743, %v4745
        %v4769 = vsel %vm4717, %v4747, %v4749
        %v4770 = vsel %vm4717, %v4751, %v4753
        %v4771 = vsel %vm4717, %v4755, %v4757
        %v4772 = vsel %vm4717, %v4759, %v4761
        %v4773 = vsel %vm4717, %v4763, %v4765
        %v4775 = vsel %vm2907, %v4718, 0
        %v4778 = vsel %vm2907, %v4719, 0
        %v4781 = vsel %vm2907, %v4720, 0
        %v4784 = vsel %vm2907, %v4721, 0
        %v4787 = vsel %vm2907, %v4722, 0
        %v4790 = vsel %vm2907, %v4723, 0
        %v4793 = vsel %vm2907, %v4724, 0
        %v4796 = vsel %vm2907, %v4725, 0
        %v4799 = vsel %vm2907, %v4766, 0
        %v4802 = vsel %vm2907, %v4767, 0
        %v4805 = vsel %vm2907, %v4768, 0
        %v4808 = vsel %vm2907, %v4769, 0
        %v4811 = vsel %vm2907, %v4770, 0
        %v4814 = vsel %vm2907, %v4771, 0
        %v4817 = vsel %vm2907, %v4772, 0
        %v4820 = vsel %vm2907, %v4773, 0
        %4822 = vmatprep.subr.bf16.mxu0 0
        %4823 = vmatpush1.bf16.xpose.msra.mxu0 %v4799
        %4824 = vmatprep.subr.bf16.mxu0 0
        %4825 = vmatpush1.bf16.xpose.msra.mxu0 %v4802
        %4826 = vmatprep.subr.bf16.mxu0 0
        %4827 = vmatpush1.bf16.xpose.msra.mxu0 %v4805
        %4828 = vmatprep.subr.bf16.mxu0 0
        %4829 = vmatpush1.bf16.xpose.msra.mxu0 %v4808
        %4830 = vmatprep.subr.bf16.mxu0 0
        %4831 = vmatpush1.bf16.xpose.msra.mxu0 %v4811
        %4832 = vmatprep.subr.bf16.mxu0 0
        %4833 = vmatpush1.bf16.xpose.msra.mxu0 %v4814
        %4834 = vmatprep.subr.bf16.mxu0 0
        %4835 = vmatpush1.bf16.xpose.msra.mxu0 %v4817
        %4836 = vmatprep.subr.bf16.mxu0 0
        %4837 = vmatpush1.bf16.xpose.msra.mxu0 %v4820
        %4838 = vmatprep.subr.bf16.mxu0 0
        %4839 = vmatpush1.bf16.xpose.msra.mxu0 0
        %4840 = vmatprep.subr.bf16.mxu0 0
        %4841 = vmatpush1.bf16.xpose.msra.mxu0 0
        %4842 = vmatprep.subr.bf16.mxu0 0
        %4843 = vmatpush1.bf16.xpose.msra.mxu0 0
        %4844 = vmatprep.subr.bf16.mxu0 0
        %4845 = vmatpush1.bf16.xpose.msra.mxu0 0
        %4846 = vmatprep.subr.bf16.mxu0 0
        %4847 = vmatpush1.bf16.xpose.msra.mxu0 0
        %4848 = vmatprep.subr.bf16.mxu0 0
        %4849 = vmatpush1.bf16.xpose.msra.mxu0 0
        %4850 = vmatprep.subr.bf16.mxu0 0
        %4851 = vmatpush1.bf16.xpose.msra.mxu0 0
        %4852 = vmatprep.subr.bf16.mxu0 0
        %4853 = vmatpush1.bf16.xpose.msra.mxu0 0
        %4854 = vmatprep.mubr.bf16.mxu0 0
        %4855 = vmatmul.mubr.bf16.gmra.mrb[0].mxu0 %v4775
        %v4856 = vpop.f32.mrb[0].mxu0
        %v4857 = vadd.f32 0.0, %v4856
        %v4858 = vpop.f32.mrb[0].mxu0
        %v4859 = vpop.f32.mrb[0].mxu0
        %v4860 = vadd.f32 0.0, %v4859
        %v4861 = vpop.f32.mrb[0].mxu0
        %4862 = vmatprep.mubr.bf16.mxu0 0
        %4863 = vmatmul.mubr.bf16.gmra.mrb[0].mxu0 %v4778
        %v4864 = vpop.f32.mrb[0].mxu0
        %v4865 = vadd.f32 0.0, %v4864
        %v4866 = vpop.f32.mrb[0].mxu0
        %v4867 = vpop.f32.mrb[0].mxu0
        %v4868 = vadd.f32 0.0, %v4867
        %v4869 = vpop.f32.mrb[0].mxu0
        %4870 = vmatprep.mubr.bf16.mxu0 0
        %4871 = vmatmul.mubr.bf16.gmra.mrb[0].mxu0 %v4781
        %v4872 = vpop.f32.mrb[0].mxu0
        %v4873 = vadd.f32 0.0, %v4872
        %v4874 = vpop.f32.mrb[0].mxu0
        %v4875 = vpop.f32.mrb[0].mxu0
        %v4876 = vadd.f32 0.0, %v4875
        %v4877 = vpop.f32.mrb[0].mxu0
        %4878 = vmatprep.mubr.bf16.mxu0 0
        %4879 = vmatmul.mubr.bf16.gmra.mrb[0].mxu0 %v4784
        %v4880 = vpop.f32.mrb[0].mxu0
        %v4881 = vadd.f32 0.0, %v4880
        %v4882 = vpop.f32.mrb[0].mxu0
        %v4883 = vpop.f32.mrb[0].mxu0
        %v4884 = vadd.f32 0.0, %v4883
        %v4885 = vpop.f32.mrb[0].mxu0
        %4886 = vmatprep.mubr.bf16.mxu0 0
        %4887 = vmatmul.mubr.bf16.gmra.mrb[0].mxu0 %v4787
        %v4888 = vpop.f32.mrb[0].mxu0
        %v4889 = vadd.f32 0.0, %v4888
        %v4890 = vpop.f32.mrb[0].mxu0
        %v4891 = vpop.f32.mrb[0].mxu0
        %v4892 = vadd.f32 0.0, %v4891
        %v4893 = vpop.f32.mrb[0].mxu0
        %4894 = vmatprep.mubr.bf16.mxu0 0
        %4895 = vmatmul.mubr.bf16.gmra.mrb[0].mxu0 %v4790
        %v4896 = vpop.f32.mrb[0].mxu0
        %v4897 = vadd.f32 0.0, %v4896
        %v4898 = vpop.f32.mrb[0].mxu0
        %v4899 = vpop.f32.mrb[0].mxu0
        %v4900 = vadd.f32 0.0, %v4899
        %v4901 = vpop.f32.mrb[0].mxu0
        %4902 = vmatprep.mubr.bf16.mxu0 0
        %4903 = vmatmul.mubr.bf16.gmra.mrb[0].mxu0 %v4793
        %v4904 = vpop.f32.mrb[0].mxu0
        %v4905 = vadd.f32 0.0, %v4904
        %v4906 = vpop.f32.mrb[0].mxu0
        %v4907 = vpop.f32.mrb[0].mxu0
        %v4908 = vadd.f32 0.0, %v4907
        %v4909 = vpop.f32.mrb[0].mxu0
        %4910 = vmatprep.mubr.bf16.mxu0 0
        %4911 = vmatmul.mubr.bf16.gmra.mrb[0].mxu0 %v4796
        %v4912 = vpop.f32.mrb[0].mxu0
        %v4913 = vadd.f32 0.0, %v4912
        %v4914 = vpop.f32.mrb[0].mxu0
        %v4915 = vpop.f32.mrb[0].mxu0
        %v4916 = vadd.f32 0.0, %v4915
        %v4917 = vpop.f32.mrb[0].mxu0
        %4918 = vdwg.mxu0
        %v4919 = vsel %vm2867, %v4857, -1e+30
        %v4920 = vsel %vm2868, %v4860, -1e+30
        %v4921 = vsel %vm2869, %v4865, -1e+30
        %v4922 = vsel %vm2870, %v4868, -1e+30
        %v4923 = vsel %vm2871, %v4873, -1e+30
        %v4924 = vsel %vm2872, %v4876, -1e+30
        %v4925 = vsel %vm2873, %v4881, -1e+30
        %v4926 = vsel %vm2874, %v4884, -1e+30
        %v4927 = vsel %vm2875, %v4889, -1e+30
        %v4928 = vsel %vm2876, %v4892, -1e+30
        %v4929 = vsel %vm2877, %v4897, -1e+30
        %v4930 = vsel %vm2878, %v4900, -1e+30
        %v4931 = vsel %vm2879, %v4905, -1e+30
        %v4932 = vsel %vm2880, %v4908, -1e+30
        %v4933 = vsel %vm2881, %v4913, -1e+30
        %v4934 = vsel %vm2882, %v4916, -1e+30
        %4935 = vmax.xlane.f32.xlu0 %v4919
        %v4936 = vpop.xlane.xlu0 %4935
        %4937 = vmax.xlane.f32.xlu0 %v4920
        %v4938 = vpop.xlane.xlu0 %4937
        %4939 = vmax.xlane.f32.xlu0 %v4921
        %v4940 = vpop.xlane.xlu0 %4939
        %4941 = vmax.xlane.f32.xlu0 %v4922
        %v4942 = vpop.xlane.xlu0 %4941
        %4943 = vmax.xlane.f32.xlu0 %v4923
        %v4944 = vpop.xlane.xlu0 %4943
        %4945 = vmax.xlane.f32.xlu0 %v4924
        %v4946 = vpop.xlane.xlu0 %4945
        %4947 = vmax.xlane.f32.xlu0 %v4925
        %v4948 = vpop.xlane.xlu0 %4947
        %4949 = vmax.xlane.f32.xlu0 %v4926
        %v4950 = vpop.xlane.xlu0 %4949
        %4951 = vmax.xlane.f32.xlu0 %v4927
        %v4952 = vpop.xlane.xlu0 %4951
        %4953 = vmax.xlane.f32.xlu0 %v4928
        %v4954 = vpop.xlane.xlu0 %4953
        %4955 = vmax.xlane.f32.xlu0 %v4929
        %v4956 = vpop.xlane.xlu0 %4955
        %4957 = vmax.xlane.f32.xlu0 %v4930
        %v4958 = vpop.xlane.xlu0 %4957
        %4959 = vmax.xlane.f32.xlu0 %v4931
        %v4960 = vpop.xlane.xlu0 %4959
        %4961 = vmax.xlane.f32.xlu0 %v4932
        %v4962 = vpop.xlane.xlu0 %4961
        %4963 = vmax.xlane.f32.xlu0 %v4933
        %v4964 = vpop.xlane.xlu0 %4963
        %4965 = vmax.xlane.f32.xlu0 %v4934
        %v4966 = vpop.xlane.xlu0 %4965
        %v4967 = vsub.f32 %v4919, %v4936
        %v4968 = vsub.f32 %v4920, %v4938
        %v4969 = vsub.f32 %v4921, %v4940
        %v4970 = vsub.f32 %v4922, %v4942
        %v4971 = vsub.f32 %v4923, %v4944
        %v4972 = vsub.f32 %v4924, %v4946
        %v4973 = vsub.f32 %v4925, %v4948
        %v4974 = vsub.f32 %v4926, %v4950
        %v4975 = vsub.f32 %v4927, %v4952
        %v4976 = vsub.f32 %v4928, %v4954
        %v4977 = vsub.f32 %v4929, %v4956
        %v4978 = vsub.f32 %v4930, %v4958
        %v4979 = vsub.f32 %v4931, %v4960
        %v4980 = vsub.f32 %v4932, %v4962
        %v4981 = vsub.f32 %v4933, %v4964
        %v4982 = vsub.f32 %v4934, %v4966
        %v4983 = vmul.f32 %v4967, 1.442695
        %v4984 = vpow.pop %v4983
        %v4985 = vmul.f32 %v4968, 1.442695
        %v4986 = vpow.pop %v4985
        %v4987 = vmul.f32 %v4969, 1.442695
        %v4988 = vpow.pop %v4987
        %v4989 = vmul.f32 %v4970, 1.442695
        %v4990 = vpow.pop %v4989
        %v4991 = vmul.f32 %v4971, 1.442695
        %v4992 = vpow.pop %v4991
        %v4993 = vmul.f32 %v4972, 1.442695
        %v4994 = vpow.pop %v4993
        %v4995 = vmul.f32 %v4973, 1.442695
        %v4996 = vpow.pop %v4995
        %v4997 = vmul.f32 %v4974, 1.442695
        %v4998 = vpow.pop %v4997
        %v4999 = vmul.f32 %v4975, 1.442695
        %v5000 = vpow.pop %v4999
        %v5001 = vmul.f32 %v4976, 1.442695
        %v5002 = vpow.pop %v5001
        %v5003 = vmul.f32 %v4977, 1.442695
        %v5004 = vpow.pop %v5003
        %v5005 = vmul.f32 %v4978, 1.442695
        %v5006 = vpow.pop %v5005
        %v5007 = vmul.f32 %v4979, 1.442695
        %v5008 = vpow.pop %v5007
        %v5009 = vmul.f32 %v4980, 1.442695
        %v5010 = vpow.pop %v5009
        %v5011 = vmul.f32 %v4981, 1.442695
        %v5012 = vpow.pop %v5011
        %v5013 = vmul.f32 %v4982, 1.442695
        %v5014 = vpow.pop %v5013
        %5015 = vadd.xlane.f32.xlu0 %v4984
        %v5016 = vpop.xlane.xlu0 %5015
        %5017 = vadd.xlane.f32.xlu0 %v4986
        %v5018 = vpop.xlane.xlu0 %5017
        %5019 = vadd.xlane.f32.xlu0 %v4988
        %v5020 = vpop.xlane.xlu0 %5019
        %5021 = vadd.xlane.f32.xlu0 %v4990
        %v5022 = vpop.xlane.xlu0 %5021
        %5023 = vadd.xlane.f32.xlu0 %v4992
        %v5024 = vpop.xlane.xlu0 %5023
        %5025 = vadd.xlane.f32.xlu0 %v4994
        %v5026 = vpop.xlane.xlu0 %5025
        %5027 = vadd.xlane.f32.xlu0 %v4996
        %v5028 = vpop.xlane.xlu0 %5027
        %5029 = vadd.xlane.f32.xlu0 %v4998
        %v5030 = vpop.xlane.xlu0 %5029
        %5031 = vadd.xlane.f32.xlu0 %v5000
        %v5032 = vpop.xlane.xlu0 %5031
        %5033 = vadd.xlane.f32.xlu0 %v5002
        %v5034 = vpop.xlane.xlu0 %5033
        %5035 = vadd.xlane.f32.xlu0 %v5004
        %v5036 = vpop.xlane.xlu0 %5035
        %5037 = vadd.xlane.f32.xlu0 %v5006
        %v5038 = vpop.xlane.xlu0 %5037
        %5039 = vadd.xlane.f32.xlu0 %v5008
        %v5040 = vpop.xlane.xlu0 %5039
        %5041 = vadd.xlane.f32.xlu0 %v5010
        %v5042 = vpop.xlane.xlu0 %5041
        %5043 = vadd.xlane.f32.xlu0 %v5012
        %v5044 = vpop.xlane.xlu0 %5043
        %5045 = vadd.xlane.f32.xlu0 %v5014
        %v5046 = vpop.xlane.xlu0 %5045
        %v5047 = vrcp.pop %v5016
        %v5048 = vrcp.pop %v5018
        %v5049 = vrcp.pop %v5020
        %v5050 = vrcp.pop %v5022
        %v5051 = vrcp.pop %v5024
        %v5052 = vrcp.pop %v5026
        %v5053 = vrcp.pop %v5028
        %v5054 = vrcp.pop %v5030
        %v5055 = vrcp.pop %v5032
        %v5056 = vrcp.pop %v5034
        %v5057 = vrcp.pop %v5036
        %v5058 = vrcp.pop %v5038
        %v5059 = vrcp.pop %v5040
        %v5060 = vrcp.pop %v5042
        %v5061 = vrcp.pop %v5044
        %v5062 = vrcp.pop %v5046
        %v5063 = vpack.c.bf16 %v4986, %v4984
        %v5064 = vpack.c.bf16 %v4990, %v4988
        %v5065 = vpack.c.bf16 %v4994, %v4992
        %v5066 = vpack.c.bf16 %v4998, %v4996
        %v5067 = vpack.c.bf16 %v5002, %v5000
        %v5068 = vpack.c.bf16 %v5006, %v5004
        %v5069 = vpack.c.bf16 %v5010, %v5008
        %v5070 = vpack.c.bf16 %v5014, %v5012
        %5079 = vrot.lane.b32.xlu0 %v3366, 64
        %v5080 = vpop.permute.xlu0 %5079
        %5081 = vrot.lane.b32.xlu0 %v4669, 64
        %v5082 = vpop.permute.xlu0 %5081
        %5083 = vrot.lane.b32.xlu0 %v3367, 64
        %v5084 = vpop.permute.xlu0 %5083
        %5085 = vrot.lane.b32.xlu0 %v4670, 64
        %v5086 = vpop.permute.xlu0 %5085
        %5087 = vrot.lane.b32.xlu0 %v3368, 64
        %v5088 = vpop.permute.xlu0 %5087
        %5089 = vrot.lane.b32.xlu0 %v4671, 64
        %v5090 = vpop.permute.xlu0 %5089
        %5091 = vrot.lane.b32.xlu0 %v3369, 64
        %v5092 = vpop.permute.xlu0 %5091
        %5093 = vrot.lane.b32.xlu0 %v4672, 64
        %v5094 = vpop.permute.xlu0 %5093
        %5095 = vrot.lane.b32.xlu0 %v3370, 64
        %v5096 = vpop.permute.xlu0 %5095
        %5097 = vrot.lane.b32.xlu0 %v4673, 64
        %v5098 = vpop.permute.xlu0 %5097
        %5099 = vrot.lane.b32.xlu0 %v3371, 64
        %v5100 = vpop.permute.xlu0 %5099
        %5101 = vrot.lane.b32.xlu0 %v4674, 64
        %v5102 = vpop.permute.xlu0 %5101
        %5103 = vrot.lane.b32.xlu0 %v3372, 64
        %v5104 = vpop.permute.xlu0 %5103
        %5105 = vrot.lane.b32.xlu0 %v4675, 64
        %v5106 = vpop.permute.xlu0 %5105
        %5107 = vrot.lane.b32.xlu0 %v3373, 64
        %v5108 = vpop.permute.xlu0 %5107
        %5109 = vrot.lane.b32.xlu0 %v4676, 64
        %v5110 = vpop.permute.xlu0 %5109
        %v5111 = vsel %vm4717, %v5080, %v5082
        %v5112 = vsel %vm4717, %v5084, %v5086
        %v5113 = vsel %vm4717, %v5088, %v5090
        %v5114 = vsel %vm4717, %v5092, %v5094
        %v5115 = vsel %vm4717, %v5096, %v5098
        %v5116 = vsel %vm4717, %v5100, %v5102
        %v5117 = vsel %vm4717, %v5104, %v5106
        %v5118 = vsel %vm4717, %v5108, %v5110
        %5127 = vmatprep.subr.bf16.mxu0 0
        %5128 = vmatpush1.bf16.msra.mxu0 %v5111
        %5129 = vmatprep.subr.bf16.mxu0 0
        %5130 = vmatpush1.bf16.msra.mxu0 %v5112
        %5131 = vmatprep.subr.bf16.mxu0 0
        %5132 = vmatpush1.bf16.msra.mxu0 %v5113
        %5133 = vmatprep.subr.bf16.mxu0 0
        %5134 = vmatpush1.bf16.msra.mxu0 %v5114
        %5135 = vmatprep.subr.bf16.mxu0 0
        %5136 = vmatpush1.bf16.msra.mxu0 %v5115
        %5137 = vmatprep.subr.bf16.mxu0 0
        %5138 = vmatpush1.bf16.msra.mxu0 %v5116
        %5139 = vmatprep.subr.bf16.mxu0 0
        %5140 = vmatpush1.bf16.msra.mxu0 %v5117
        %5141 = vmatprep.subr.bf16.mxu0 0
        %5142 = vmatpush1.bf16.msra.mxu0 %v5118
        %5143 = vmatprep.subr.bf16.mxu0 0
        %5144 = vmatpush1.bf16.msra.mxu0 0
        %5145 = vmatprep.subr.bf16.mxu0 0
        %5146 = vmatpush1.bf16.msra.mxu0 0
        %5147 = vmatprep.subr.bf16.mxu0 0
        %5148 = vmatpush1.bf16.msra.mxu0 0
        %5149 = vmatprep.subr.bf16.mxu0 0
        %5150 = vmatpush1.bf16.msra.mxu0 0
        %5151 = vmatprep.subr.bf16.mxu0 0
        %5152 = vmatpush1.bf16.msra.mxu0 0
        %5153 = vmatprep.subr.bf16.mxu0 0
        %5154 = vmatpush1.bf16.msra.mxu0 0
        %5155 = vmatprep.subr.bf16.mxu0 0
        %5156 = vmatpush1.bf16.msra.mxu0 0
        %5157 = vmatprep.subr.bf16.mxu0 0
        %5158 = vmatpush1.bf16.msra.mxu0 0
        %5159 = vmatprep.mubr.bf16.mxu0 0
        %5160 = vmatmul.mubr.bf16.gmra.mrb[0].mxu0 %v5063
        %v5161 = vpop.f32.mrb[0].mxu0
        %v5162 = vadd.f32 0.0, %v5161
        %v5163 = vpop.f32.mrb[0].mxu0
        %v5164 = vpop.f32.mrb[0].mxu0
        %v5165 = vadd.f32 0.0, %v5164
        %v5166 = vpop.f32.mrb[0].mxu0
        %5167 = vmatprep.mubr.bf16.mxu0 0
        %5168 = vmatmul.mubr.bf16.gmra.mrb[0].mxu0 %v5064
        %v5169 = vpop.f32.mrb[0].mxu0
        %v5170 = vadd.f32 0.0, %v5169
        %v5171 = vpop.f32.mrb[0].mxu0
        %v5172 = vpop.f32.mrb[0].mxu0
        %v5173 = vadd.f32 0.0, %v5172
        %v5174 = vpop.f32.mrb[0].mxu0
        %5175 = vmatprep.mubr.bf16.mxu0 0
        %5176 = vmatmul.mubr.bf16.gmra.mrb[0].mxu0 %v5065
        %v5177 = vpop.f32.mrb[0].mxu0
        %v5178 = vadd.f32 0.0, %v5177
        %v5179 = vpop.f32.mrb[0].mxu0
        %v5180 = vpop.f32.mrb[0].mxu0
        %v5181 = vadd.f32 0.0, %v5180
        %v5182 = vpop.f32.mrb[0].mxu0
        %5183 = vmatprep.mubr.bf16.mxu0 0
        %5184 = vmatmul.mubr.bf16.gmra.mrb[0].mxu0 %v5066
        %v5185 = vpop.f32.mrb[0].mxu0
        %v5186 = vadd.f32 0.0, %v5185
        %v5187 = vpop.f32.mrb[0].mxu0
        %v5188 = vpop.f32.mrb[0].mxu0
        %v5189 = vadd.f32 0.0, %v5188
        %v5190 = vpop.f32.mrb[0].mxu0
        %5191 = vmatprep.mubr.bf16.mxu0 0
        %5192 = vmatmul.mubr.bf16.gmra.mrb[0].mxu0 %v5067
        %v5193 = vpop.f32.mrb[0].mxu0
        %v5194 = vadd.f32 0.0, %v5193
        %v5195 = vpop.f32.mrb[0].mxu0
        %v5196 = vpop.f32.mrb[0].mxu0
        %v5197 = vadd.f32 0.0, %v5196
        %v5198 = vpop.f32.mrb[0].mxu0
        %5199 = vmatprep.mubr.bf16.mxu0 0
        %5200 = vmatmul.mubr.bf16.gmra.mrb[0].mxu0 %v5068
        %v5201 = vpop.f32.mrb[0].mxu0
        %v5202 = vadd.f32 0.0, %v5201
        %v5203 = vpop.f32.mrb[0].mxu0
        %v5204 = vpop.f32.mrb[0].mxu0
        %v5205 = vadd.f32 0.0, %v5204
        %v5206 = vpop.f32.mrb[0].mxu0
        %5207 = vmatprep.mubr.bf16.mxu0 0
        %5208 = vmatmul.mubr.bf16.gmra.mrb[0].mxu0 %v5069
        %v5209 = vpop.f32.mrb[0].mxu0
        %v5210 = vadd.f32 0.0, %v5209
        %v5211 = vpop.f32.mrb[0].mxu0
        %v5212 = vpop.f32.mrb[0].mxu0
        %v5213 = vadd.f32 0.0, %v5212
        %v5214 = vpop.f32.mrb[0].mxu0
        %5215 = vmatprep.mubr.bf16.mxu0 0
        %5216 = vmatmul.mubr.bf16.gmra.mrb[0].mxu0 %v5070
        %v5217 = vpop.f32.mrb[0].mxu0
        %v5218 = vadd.f32 0.0, %v5217
        %v5219 = vpop.f32.mrb[0].mxu0
        %v5220 = vpop.f32.mrb[0].mxu0
        %v5221 = vadd.f32 0.0, %v5220
        %v5222 = vpop.f32.mrb[0].mxu0
        %5223 = vdwg.mxu0
        %v5224 = vmul.f32 %v5162, %v5047
        %v5225 = vmul.f32 %v5165, %v5048
        %v5226 = vmul.f32 %v5170, %v5049
        %v5227 = vmul.f32 %v5173, %v5050
        %v5228 = vmul.f32 %v5178, %v5051
        %v5229 = vmul.f32 %v5181, %v5052
        %v5230 = vmul.f32 %v5186, %v5053
        %v5231 = vmul.f32 %v5189, %v5054
        %v5232 = vmul.f32 %v5194, %v5055
        %v5233 = vmul.f32 %v5197, %v5056
        %v5234 = vmul.f32 %v5202, %v5057
        %v5235 = vmul.f32 %v5205, %v5058
        %v5236 = vmul.f32 %v5210, %v5059
        %v5237 = vmul.f32 %v5213, %v5060
        %v5238 = vmul.f32 %v5218, %v5061
        %v5239 = vmul.f32 %v5221, %v5062
        %v5240 = vpack.c.bf16 %v5225, %v5224
        %v5241 = vpack.c.bf16 %v5227, %v5226
        %v5242 = vpack.c.bf16 %v5229, %v5228
        %v5243 = vpack.c.bf16 %v5231, %v5230
        %v5244 = vpack.c.bf16 %v5233, %v5232
        %v5245 = vpack.c.bf16 %v5235, %v5234
        %v5246 = vpack.c.bf16 %v5237, %v5236
        %v5247 = vpack.c.bf16 %v5239, %v5238
        %v5248 = vld [vmem:[#allocation7 + $0x120] sm:$0xff]
        %v5249 = vld [vmem:[#allocation7 + $0x128] sm:$0xf]
        %v5250 = vld [vmem:[#allocation7 + $0x12c] sm:$0xff]
        %v5251 = vld [vmem:[#allocation7 + $0x134] sm:$0xf]
        %v5252 = vld [vmem:[#allocation7 + $0x138] sm:$0xff]
        %v5253 = vld [vmem:[#allocation7 + $0x140] sm:$0xf]
        %v5254 = vld [vmem:[#allocation7 + $0x144] sm:$0xff]
        %v5255 = vld [vmem:[#allocation7 + $0x14c] sm:$0xf]
        %v5256 = vld [vmem:[#allocation7 + $0x150] sm:$0xff]
        %v5257 = vld [vmem:[#allocation7 + $0x158] sm:$0xf]
        %v5258 = vld [vmem:[#allocation7 + $0x15c] sm:$0xff]
        %v5259 = vld [vmem:[#allocation7 + $0x164] sm:$0xf]
        %v5260 = vld [vmem:[#allocation7 + $0x168] sm:$0xff]
        %v5261 = vld [vmem:[#allocation7 + $0x170] sm:$0xf]
        %v5262 = vld [vmem:[#allocation7 + $0x174] sm:$0xff]
        %v5263 = vld [vmem:[#allocation7 + $0x17c] sm:$0xf]
        %v5264 = vld [vmem:[#allocation7 + $0x180] sm:$0xff]
        %v5265 = vld [vmem:[#allocation7 + $0x188] sm:$0xf]
        %v5266 = vld [vmem:[#allocation7 + $0x18c] sm:$0xff]
        %v5267 = vld [vmem:[#allocation7 + $0x194] sm:$0xf]
        %v5268 = vld [vmem:[#allocation7 + $0x198] sm:$0xff]
        %v5269 = vld [vmem:[#allocation7 + $0x1a0] sm:$0xf]
        %v5270 = vld [vmem:[#allocation7 + $0x1a4] sm:$0xff]
        %v5271 = vld [vmem:[#allocation7 + $0x1ac] sm:$0xf]
        %v5296 = vunpack.c.l.b16 %v5248
        %v5297 = vunpack.c.h.b16 %v5248
        %v5298 = vunpack.c.l.b16 %v5249
        %v5299 = vunpack.c.l.b16 %v5250
        %v5300 = vunpack.c.h.b16 %v5250
        %v5301 = vunpack.c.l.b16 %v5251
        %v5302 = vunpack.c.l.b16 %v5252
        %v5303 = vunpack.c.h.b16 %v5252
        %v5304 = vunpack.c.l.b16 %v5253
        %v5305 = vunpack.c.l.b16 %v5254
        %v5306 = vunpack.c.h.b16 %v5254
        %v5307 = vunpack.c.l.b16 %v5255
        %v5308 = vunpack.c.l.b16 %v5256
        %v5309 = vunpack.c.h.b16 %v5256
        %v5310 = vunpack.c.l.b16 %v5257
        %v5311 = vunpack.c.l.b16 %v5258
        %v5312 = vunpack.c.h.b16 %v5258
        %v5313 = vunpack.c.l.b16 %v5259
        %v5314 = vunpack.c.l.b16 %v5260
        %v5315 = vunpack.c.h.b16 %v5260
        %v5316 = vunpack.c.l.b16 %v5261
        %v5317 = vunpack.c.l.b16 %v5262
        %v5318 = vunpack.c.h.b16 %v5262
        %v5319 = vunpack.c.l.b16 %v5263
        %v5320 = vunpack.c.l.b16 %v5264
        %v5321 = vunpack.c.h.b16 %v5264
        %v5322 = vunpack.c.l.b16 %v5265
        %v5323 = vunpack.c.l.b16 %v5266
        %v5324 = vunpack.c.h.b16 %v5266
        %v5325 = vunpack.c.l.b16 %v5267
        %v5326 = vunpack.c.l.b16 %v5268
        %v5327 = vunpack.c.h.b16 %v5268
        %v5328 = vunpack.c.l.b16 %v5269
        %v5329 = vunpack.c.l.b16 %v5270
        %v5330 = vunpack.c.h.b16 %v5270
        %v5331 = vunpack.c.l.b16 %v5271
        %v5332 = vpack.c.b16 %v5299, %v5296
        %v5333 = vpack.c.b16 %v5300, %v5297
        %v5334 = vpack.c.b16 %v5301, %v5298
        %v5335 = vpack.c.b16 %v5305, %v5302
        %v5336 = vpack.c.b16 %v5306, %v5303
        %v5337 = vpack.c.b16 %v5307, %v5304
        %v5338 = vpack.c.b16 %v5311, %v5308
        %v5339 = vpack.c.b16 %v5312, %v5309
        %v5340 = vpack.c.b16 %v5313, %v5310
        %v5341 = vpack.c.b16 %v5317, %v5314
        %v5342 = vpack.c.b16 %v5318, %v5315
        %v5343 = vpack.c.b16 %v5319, %v5316
        %v5344 = vpack.c.b16 %v5323, %v5320
        %v5345 = vpack.c.b16 %v5324, %v5321
        %v5346 = vpack.c.b16 %v5325, %v5322
        %v5347 = vpack.c.b16 %v5329, %v5326
        %v5348 = vpack.c.b16 %v5330, %v5327
        %v5349 = vpack.c.b16 %v5331, %v5328
        %v5369 = vsel %vm2907, %v5240, 0
        %v5372 = vsel %vm2907, %v5241, 0
        %v5375 = vsel %vm2907, %v5242, 0
        %v5378 = vsel %vm2907, %v5243, 0
        %v5381 = vsel %vm2907, %v5244, 0
        %v5384 = vsel %vm2907, %v5245, 0
        %v5387 = vsel %vm2907, %v5246, 0
        %v5390 = vsel %vm2907, %v5247, 0
        %5392 = vmatprep.subr.bf16.mxu0 %v5333
        %5393 = vmatpush1.bf16.msra.mxu0 %v5332
        %5394 = vmatprep.subr.bf16.mxu0 %v5336
        %5395 = vmatpush1.bf16.msra.mxu0 %v5335
        %5396 = vmatprep.subr.bf16.mxu0 %v5339
        %5397 = vmatpush1.bf16.msra.mxu0 %v5338
        %5398 = vmatprep.subr.bf16.mxu0 %v5342
        %5399 = vmatpush1.bf16.msra.mxu0 %v5341
        %5400 = vmatprep.subr.bf16.mxu0 %v5345
        %5401 = vmatpush1.bf16.msra.mxu0 %v5344
        %5402 = vmatprep.subr.bf16.mxu0 %v5348
        %5403 = vmatpush1.bf16.msra.mxu0 %v5347
        %5404 = vmatprep.subr.bf16.mxu0 0
        %5405 = vmatpush1.bf16.msra.mxu0 0
        %5406 = vmatprep.subr.bf16.mxu0 0
        %5407 = vmatpush1.bf16.msra.mxu0 0
        %5408 = vmatprep.subr.bf16.mxu0 0
        %5409 = vmatpush1.bf16.msra.mxu0 0
        %5410 = vmatprep.subr.bf16.mxu0 0
        %5411 = vmatpush1.bf16.msra.mxu0 0
        %5412 = vmatprep.subr.bf16.mxu0 0
        %5413 = vmatpush1.bf16.msra.mxu0 0
        %5414 = vmatprep.subr.bf16.mxu0 0
        %5415 = vmatpush1.bf16.msra.mxu0 0
        %5416 = vmatprep.subr.bf16.mxu0 0
        %5417 = vmatpush1.bf16.msra.mxu0 0
        %5418 = vmatprep.subr.bf16.mxu0 0
        %5419 = vmatpush1.bf16.msra.mxu0 0
        %5420 = vmatprep.subr.bf16.mxu0 0
        %5421 = vmatpush1.bf16.msra.mxu0 0
        %5422 = vmatprep.subr.bf16.mxu0 0
        %5423 = vmatpush1.bf16.msra.mxu0 0
        %5424 = vmatprep.mubr.bf16.mxu0 0
        %5425 = vmatmul.mubr.bf16.gmra.mrb[0].mxu0 %v5369
        %v5426 = vpop.f32.mrb[0].mxu0
        %v5427 = vadd.f32 0.0, %v5426
        %v5428 = vpop.f32.mrb[0].mxu0
        %v5429 = vadd.f32 0.0, %v5428
        %v5430 = vpop.f32.mrb[0].mxu0
        %v5431 = vadd.f32 0.0, %v5430
        %v5432 = vpop.f32.mrb[0].mxu0
        %v5433 = vadd.f32 0.0, %v5432
        %5434 = vmatprep.mubr.bf16.mxu0 0
        %5435 = vmatmul.mubr.bf16.gmra.mrb[0].mxu0 %v5372
        %v5436 = vpop.f32.mrb[0].mxu0
        %v5437 = vadd.f32 0.0, %v5436
        %v5438 = vpop.f32.mrb[0].mxu0
        %v5439 = vadd.f32 0.0, %v5438
        %v5440 = vpop.f32.mrb[0].mxu0
        %v5441 = vadd.f32 0.0, %v5440
        %v5442 = vpop.f32.mrb[0].mxu0
        %v5443 = vadd.f32 0.0, %v5442
        %5444 = vmatprep.mubr.bf16.mxu0 0
        %5445 = vmatmul.mubr.bf16.gmra.mrb[0].mxu0 %v5375
        %v5446 = vpop.f32.mrb[0].mxu0
        %v5447 = vadd.f32 0.0, %v5446
        %v5448 = vpop.f32.mrb[0].mxu0
        %v5449 = vadd.f32 0.0, %v5448
        %v5450 = vpop.f32.mrb[0].mxu0
        %v5451 = vadd.f32 0.0, %v5450
        %v5452 = vpop.f32.mrb[0].mxu0
        %v5453 = vadd.f32 0.0, %v5452
        %5454 = vmatprep.mubr.bf16.mxu0 0
        %5455 = vmatmul.mubr.bf16.gmra.mrb[0].mxu0 %v5378
        %v5456 = vpop.f32.mrb[0].mxu0
        %v5457 = vadd.f32 0.0, %v5456
        %v5458 = vpop.f32.mrb[0].mxu0
        %v5459 = vadd.f32 0.0, %v5458
        %v5460 = vpop.f32.mrb[0].mxu0
        %v5461 = vadd.f32 0.0, %v5460
        %v5462 = vpop.f32.mrb[0].mxu0
        %v5463 = vadd.f32 0.0, %v5462
        %5464 = vmatprep.mubr.bf16.mxu0 0
        %5465 = vmatmul.mubr.bf16.gmra.mrb[0].mxu0 %v5381
        %v5466 = vpop.f32.mrb[0].mxu0
        %v5467 = vadd.f32 0.0, %v5466
        %v5468 = vpop.f32.mrb[0].mxu0
        %v5469 = vadd.f32 0.0, %v5468
        %v5470 = vpop.f32.mrb[0].mxu0
        %v5471 = vadd.f32 0.0, %v5470
        %v5472 = vpop.f32.mrb[0].mxu0
        %v5473 = vadd.f32 0.0, %v5472
        %5474 = vmatprep.mubr.bf16.mxu0 0
        %5475 = vmatmul.mubr.bf16.gmra.mrb[0].mxu0 %v5384
        %v5476 = vpop.f32.mrb[0].mxu0
        %v5477 = vadd.f32 0.0, %v5476
        %v5478 = vpop.f32.mrb[0].mxu0
        %v5479 = vadd.f32 0.0, %v5478
        %v5480 = vpop.f32.mrb[0].mxu0
        %v5481 = vadd.f32 0.0, %v5480
        %v5482 = vpop.f32.mrb[0].mxu0
        %v5483 = vadd.f32 0.0, %v5482
        %5484 = vmatprep.mubr.bf16.mxu0 0
        %5485 = vmatmul.mubr.bf16.gmra.mrb[0].mxu0 %v5387
        %v5486 = vpop.f32.mrb[0].mxu0
        %v5487 = vadd.f32 0.0, %v5486
        %v5488 = vpop.f32.mrb[0].mxu0
        %v5489 = vadd.f32 0.0, %v5488
        %v5490 = vpop.f32.mrb[0].mxu0
        %v5491 = vadd.f32 0.0, %v5490
        %v5492 = vpop.f32.mrb[0].mxu0
        %v5493 = vadd.f32 0.0, %v5492
        %5494 = vmatprep.mubr.bf16.mxu0 0
        %5495 = vmatmul.mubr.bf16.gmra.mrb[0].mxu0 %v5390
        %v5496 = vpop.f32.mrb[0].mxu0
        %v5497 = vadd.f32 0.0, %v5496
        %v5498 = vpop.f32.mrb[0].mxu0
        %v5499 = vadd.f32 0.0, %v5498
        %v5500 = vpop.f32.mrb[0].mxu0
        %v5501 = vadd.f32 0.0, %v5500
        %v5502 = vpop.f32.mrb[0].mxu0
        %v5503 = vadd.f32 0.0, %v5502
        %5504 = vdwg.mxu0
        %5505 = vmatprep.subr.bf16.mxu0 0
        %5506 = vmatpush1.bf16.msra.mxu0 %v5334
        %5507 = vmatprep.subr.bf16.mxu0 0
        %5508 = vmatpush1.bf16.msra.mxu0 %v5337
        %5509 = vmatprep.subr.bf16.mxu0 0
        %5510 = vmatpush1.bf16.msra.mxu0 %v5340
        %5511 = vmatprep.subr.bf16.mxu0 0
        %5512 = vmatpush1.bf16.msra.mxu0 %v5343
        %5513 = vmatprep.subr.bf16.mxu0 0
        %5514 = vmatpush1.bf16.msra.mxu0 %v5346
        %5515 = vmatprep.subr.bf16.mxu0 0
        %5516 = vmatpush1.bf16.msra.mxu0 %v5349
        %5517 = vmatprep.subr.bf16.mxu0 0
        %5518 = vmatpush1.bf16.msra.mxu0 0
        %5519 = vmatprep.subr.bf16.mxu0 0
        %5520 = vmatpush1.bf16.msra.mxu0 0
        %5521 = vmatprep.subr.bf16.mxu0 0
        %5522 = vmatpush1.bf16.msra.mxu0 0
        %5523 = vmatprep.subr.bf16.mxu0 0
        %5524 = vmatpush1.bf16.msra.mxu0 0
        %5525 = vmatprep.subr.bf16.mxu0 0
        %5526 = vmatpush1.bf16.msra.mxu0 0
        %5527 = vmatprep.subr.bf16.mxu0 0
        %5528 = vmatpush1.bf16.msra.mxu0 0
        %5529 = vmatprep.subr.bf16.mxu0 0
        %5530 = vmatpush1.bf16.msra.mxu0 0
        %5531 = vmatprep.subr.bf16.mxu0 0
        %5532 = vmatpush1.bf16.msra.mxu0 0
        %5533 = vmatprep.subr.bf16.mxu0 0
        %5534 = vmatpush1.bf16.msra.mxu0 0
        %5535 = vmatprep.subr.bf16.mxu0 0
        %5536 = vmatpush1.bf16.msra.mxu0 0
        %5537 = vmatprep.mubr.bf16.mxu0 0
        %5538 = vmatmul.mubr.bf16.gmra.mrb[0].mxu0 %v5369
        %v5539 = vpop.f32.mrb[0].mxu0
        %v5540 = vadd.f32 0.0, %v5539
        %v5541 = vpop.f32.mrb[0].mxu0
        %v5542 = vpop.f32.mrb[0].mxu0
        %v5543 = vadd.f32 0.0, %v5542
        %v5544 = vpop.f32.mrb[0].mxu0
        %5545 = vmatprep.mubr.bf16.mxu0 0
        %5546 = vmatmul.mubr.bf16.gmra.mrb[0].mxu0 %v5372
        %v5547 = vpop.f32.mrb[0].mxu0
        %v5548 = vadd.f32 0.0, %v5547
        %v5549 = vpop.f32.mrb[0].mxu0
        %v5550 = vpop.f32.mrb[0].mxu0
        %v5551 = vadd.f32 0.0, %v5550
        %v5552 = vpop.f32.mrb[0].mxu0
        %5553 = vmatprep.mubr.bf16.mxu0 0
        %5554 = vmatmul.mubr.bf16.gmra.mrb[0].mxu0 %v5375
        %v5555 = vpop.f32.mrb[0].mxu0
        %v5556 = vadd.f32 0.0, %v5555
        %v5557 = vpop.f32.mrb[0].mxu0
        %v5558 = vpop.f32.mrb[0].mxu0
        %v5559 = vadd.f32 0.0, %v5558
        %v5560 = vpop.f32.mrb[0].mxu0
        %5561 = vmatprep.mubr.bf16.mxu0 0
        %5562 = vmatmul.mubr.bf16.gmra.mrb[0].mxu0 %v5378
        %v5563 = vpop.f32.mrb[0].mxu0
        %v5564 = vadd.f32 0.0, %v5563
        %v5565 = vpop.f32.mrb[0].mxu0
        %v5566 = vpop.f32.mrb[0].mxu0
        %v5567 = vadd.f32 0.0, %v5566
        %v5568 = vpop.f32.mrb[0].mxu0
        %5569 = vmatprep.mubr.bf16.mxu0 0
        %5570 = vmatmul.mubr.bf16.gmra.mrb[0].mxu0 %v5381
        %v5571 = vpop.f32.mrb[0].mxu0
        %v5572 = vadd.f32 0.0, %v5571
        %v5573 = vpop.f32.mrb[0].mxu0
        %v5574 = vpop.f32.mrb[0].mxu0
        %v5575 = vadd.f32 0.0, %v5574
        %v5576 = vpop.f32.mrb[0].mxu0
        %5577 = vmatprep.mubr.bf16.mxu0 0
        %5578 = vmatmul.mubr.bf16.gmra.mrb[0].mxu0 %v5384
        %v5579 = vpop.f32.mrb[0].mxu0
        %v5580 = vadd.f32 0.0, %v5579
        %v5581 = vpop.f32.mrb[0].mxu0
        %v5582 = vpop.f32.mrb[0].mxu0
        %v5583 = vadd.f32 0.0, %v5582
        %v5584 = vpop.f32.mrb[0].mxu0
        %5585 = vmatprep.mubr.bf16.mxu0 0
        %5586 = vmatmul.mubr.bf16.gmra.mrb[0].mxu0 %v5387
        %v5587 = vpop.f32.mrb[0].mxu0
        %v5588 = vadd.f32 0.0, %v5587
        %v5589 = vpop.f32.mrb[0].mxu0
        %v5590 = vpop.f32.mrb[0].mxu0
        %v5591 = vadd.f32 0.0, %v5590
        %v5592 = vpop.f32.mrb[0].mxu0
        %5593 = vmatprep.mubr.bf16.mxu0 0
        %5594 = vmatmul.mubr.bf16.gmra.mrb[0].mxu0 %v5390
        %v5595 = vpop.f32.mrb[0].mxu0
        %v5596 = vadd.f32 0.0, %v5595
        %v5597 = vpop.f32.mrb[0].mxu0
        %v5598 = vpop.f32.mrb[0].mxu0
        %v5599 = vadd.f32 0.0, %v5598
        %v5600 = vpop.f32.mrb[0].mxu0
        %5601 = vdwg.mxu0
        %v5602 = vadd.f32 %v4478, %v5427
        %v5603 = vadd.f32 %v4480, %v5429
        %v5604 = vadd.f32 %v4591, %v5540
        %v5605 = vadd.f32 %v4482, %v5431
        %v5606 = vadd.f32 %v4484, %v5433
        %v5607 = vadd.f32 %v4594, %v5543
        %v5608 = vadd.f32 %v4488, %v5437
        %v5609 = vadd.f32 %v4490, %v5439
        %v5610 = vadd.f32 %v4599, %v5548
        %v5611 = vadd.f32 %v4492, %v5441
        %v5612 = vadd.f32 %v4494, %v5443
        %v5613 = vadd.f32 %v4602, %v5551
        %v5614 = vadd.f32 %v4498, %v5447
        %v5615 = vadd.f32 %v4500, %v5449
        %v5616 = vadd.f32 %v4607, %v5556
        %v5617 = vadd.f32 %v4502, %v5451
        %v5618 = vadd.f32 %v4504, %v5453
        %v5619 = vadd.f32 %v4610, %v5559
        %v5620 = vadd.f32 %v4508, %v5457
        %v5621 = vadd.f32 %v4510, %v5459
        %v5622 = vadd.f32 %v4615, %v5564
        %v5623 = vadd.f32 %v4512, %v5461
        %v5624 = vadd.f32 %v4514, %v5463
        %v5625 = vadd.f32 %v4618, %v5567
        %v5626 = vadd.f32 %v4518, %v5467
        %v5627 = vadd.f32 %v4520, %v5469
        %v5628 = vadd.f32 %v4623, %v5572
        %v5629 = vadd.f32 %v4522, %v5471
        %v5630 = vadd.f32 %v4524, %v5473
        %v5631 = vadd.f32 %v4626, %v5575
        %v5632 = vadd.f32 %v4528, %v5477
        %v5633 = vadd.f32 %v4530, %v5479
        %v5634 = vadd.f32 %v4631, %v5580
        %v5635 = vadd.f32 %v4532, %v5481
        %v5636 = vadd.f32 %v4534, %v5483
        %v5637 = vadd.f32 %v4634, %v5583
        %v5638 = vadd.f32 %v4538, %v5487
        %v5639 = vadd.f32 %v4540, %v5489
        %v5640 = vadd.f32 %v4639, %v5588
        %v5641 = vadd.f32 %v4542, %v5491
        %v5642 = vadd.f32 %v4544, %v5493
        %v5643 = vadd.f32 %v4642, %v5591
        %v5644 = vadd.f32 %v4548, %v5497
        %v5645 = vadd.f32 %v4550, %v5499
        %v5646 = vadd.f32 %v4647, %v5596
        %v5647 = vadd.f32 %v4552, %v5501
        %v5648 = vadd.f32 %v4554, %v5503
        %v5649 = vadd.f32 %v4650, %v5599
        %5650 = vrot.lane.b32.xlu0 %v4653, 96
        %v5651 = vpop.permute.xlu0 %5650
        %5652 = vrot.lane.b32.xlu0 %v4654, 96
        %v5653 = vpop.permute.xlu0 %5652
        %5654 = vrot.lane.b32.xlu0 %v4655, 96
        %v5655 = vpop.permute.xlu0 %5654
        %5656 = vrot.lane.b32.xlu0 %v4656, 96
        %v5657 = vpop.permute.xlu0 %5656
        %5658 = vrot.lane.b32.xlu0 %v4657, 96
        %v5659 = vpop.permute.xlu0 %5658
        %5660 = vrot.lane.b32.xlu0 %v4658, 96
        %v5661 = vpop.permute.xlu0 %5660
        %5662 = vrot.lane.b32.xlu0 %v4659, 96
        %v5663 = vpop.permute.xlu0 %5662
        %5664 = vrot.lane.b32.xlu0 %v4660, 96
        %v5665 = vpop.permute.xlu0 %5664
        %5666 = vrot.lane.b32.xlu0 %v4661, 96
        %v5667 = vpop.permute.xlu0 %5666
        %5668 = vrot.lane.b32.xlu0 %v4662, 96
        %v5669 = vpop.permute.xlu0 %5668
        %5670 = vrot.lane.b32.xlu0 %v4663, 96
        %v5671 = vpop.permute.xlu0 %5670
        %5672 = vrot.lane.b32.xlu0 %v4664, 96
        %v5673 = vpop.permute.xlu0 %5672
        %5674 = vrot.lane.b32.xlu0 %v4665, 96
        %v5675 = vpop.permute.xlu0 %5674
        %5676 = vrot.lane.b32.xlu0 %v4666, 96
        %v5677 = vpop.permute.xlu0 %5676
        %5678 = vrot.lane.b32.xlu0 %v4667, 96
        %v5679 = vpop.permute.xlu0 %5678
        %5680 = vrot.lane.b32.xlu0 %v4668, 96
        %v5681 = vpop.permute.xlu0 %5680
        %v5683 = vsel %vm2907, %v5651, 0
        %v5686 = vsel %vm2907, %v5653, 0
        %v5689 = vsel %vm2907, %v5655, 0
        %v5692 = vsel %vm2907, %v5657, 0
        %v5695 = vsel %vm2907, %v5659, 0
        %v5698 = vsel %vm2907, %v5661, 0
        %v5701 = vsel %vm2907, %v5663, 0
        %v5704 = vsel %vm2907, %v5665, 0
        %v5707 = vsel %vm2907, %v5667, 0
        %v5710 = vsel %vm2907, %v5669, 0
        %v5713 = vsel %vm2907, %v5671, 0
        %v5716 = vsel %vm2907, %v5673, 0
        %v5719 = vsel %vm2907, %v5675, 0
        %v5722 = vsel %vm2907, %v5677, 0
        %v5725 = vsel %vm2907, %v5679, 0
        %v5728 = vsel %vm2907, %v5681, 0
        %5730 = vmatprep.subr.bf16.mxu0 0
        %5731 = vmatpush1.bf16.xpose.msra.mxu0 %v5707
        %5732 = vmatprep.subr.bf16.mxu0 0
        %5733 = vmatpush1.bf16.xpose.msra.mxu0 %v5710
        %5734 = vmatprep.subr.bf16.mxu0 0
        %5735 = vmatpush1.bf16.xpose.msra.mxu0 %v5713
        %5736 = vmatprep.subr.bf16.mxu0 0
        %5737 = vmatpush1.bf16.xpose.msra.mxu0 %v5716
        %5738 = vmatprep.subr.bf16.mxu0 0
        %5739 = vmatpush1.bf16.xpose.msra.mxu0 %v5719
        %5740 = vmatprep.subr.bf16.mxu0 0
        %5741 = vmatpush1.bf16.xpose.msra.mxu0 %v5722
        %5742 = vmatprep.subr.bf16.mxu0 0
        %5743 = vmatpush1.bf16.xpose.msra.mxu0 %v5725
        %5744 = vmatprep.subr.bf16.mxu0 0
        %5745 = vmatpush1.bf16.xpose.msra.mxu0 %v5728
        %5746 = vmatprep.subr.bf16.mxu0 0
        %5747 = vmatpush1.bf16.xpose.msra.mxu0 0
        %5748 = vmatprep.subr.bf16.mxu0 0
        %5749 = vmatpush1.bf16.xpose.msra.mxu0 0
        %5750 = vmatprep.subr.bf16.mxu0 0
        %5751 = vmatpush1.bf16.xpose.msra.mxu0 0
        %5752 = vmatprep.subr.bf16.mxu0 0
        %5753 = vmatpush1.bf16.xpose.msra.mxu0 0
        %5754 = vmatprep.subr.bf16.mxu0 0
        %5755 = vmatpush1.bf16.xpose.msra.mxu0 0
        %5756 = vmatprep.subr.bf16.mxu0 0
        %5757 = vmatpush1.bf16.xpose.msra.mxu0 0
        %5758 = vmatprep.subr.bf16.mxu0 0
        %5759 = vmatpush1.bf16.xpose.msra.mxu0 0
        %5760 = vmatprep.subr.bf16.mxu0 0
        %5761 = vmatpush1.bf16.xpose.msra.mxu0 0
        %5762 = vmatprep.mubr.bf16.mxu0 0
        %5763 = vmatmul.mubr.bf16.gmra.mrb[0].mxu0 %v5683
        %v5764 = vpop.f32.mrb[0].mxu0
        %v5765 = vadd.f32 0.0, %v5764
        %v5766 = vpop.f32.mrb[0].mxu0
        %v5767 = vpop.f32.mrb[0].mxu0
        %v5768 = vadd.f32 0.0, %v5767
        %v5769 = vpop.f32.mrb[0].mxu0
        %5770 = vmatprep.mubr.bf16.mxu0 0
        %5771 = vmatmul.mubr.bf16.gmra.mrb[0].mxu0 %v5686
        %v5772 = vpop.f32.mrb[0].mxu0
        %v5773 = vadd.f32 0.0, %v5772
        %v5774 = vpop.f32.mrb[0].mxu0
        %v5775 = vpop.f32.mrb[0].mxu0
        %v5776 = vadd.f32 0.0, %v5775
        %v5777 = vpop.f32.mrb[0].mxu0
        %5778 = vmatprep.mubr.bf16.mxu0 0
        %5779 = vmatmul.mubr.bf16.gmra.mrb[0].mxu0 %v5689
        %v5780 = vpop.f32.mrb[0].mxu0
        %v5781 = vadd.f32 0.0, %v5780
        %v5782 = vpop.f32.mrb[0].mxu0
        %v5783 = vpop.f32.mrb[0].mxu0
        %v5784 = vadd.f32 0.0, %v5783
        %v5785 = vpop.f32.mrb[0].mxu0
        %5786 = vmatprep.mubr.bf16.mxu0 0
        %5787 = vmatmul.mubr.bf16.gmra.mrb[0].mxu0 %v5692
        %v5788 = vpop.f32.mrb[0].mxu0
        %v5789 = vadd.f32 0.0, %v5788
        %v5790 = vpop.f32.mrb[0].mxu0
        %v5791 = vpop.f32.mrb[0].mxu0
        %v5792 = vadd.f32 0.0, %v5791
        %v5793 = vpop.f32.mrb[0].mxu0
        %5794 = vmatprep.mubr.bf16.mxu0 0
        %5795 = vmatmul.mubr.bf16.gmra.mrb[0].mxu0 %v5695
        %v5796 = vpop.f32.mrb[0].mxu0
        %v5797 = vadd.f32 0.0, %v5796
        %v5798 = vpop.f32.mrb[0].mxu0
        %v5799 = vpop.f32.mrb[0].mxu0
        %v5800 = vadd.f32 0.0, %v5799
        %v5801 = vpop.f32.mrb[0].mxu0
        %5802 = vmatprep.mubr.bf16.mxu0 0
        %5803 = vmatmul.mubr.bf16.gmra.mrb[0].mxu0 %v5698
        %v5804 = vpop.f32.mrb[0].mxu0
        %v5805 = vadd.f32 0.0, %v5804
        %v5806 = vpop.f32.mrb[0].mxu0
        %v5807 = vpop.f32.mrb[0].mxu0
        %v5808 = vadd.f32 0.0, %v5807
        %v5809 = vpop.f32.mrb[0].mxu0
        %5810 = vmatprep.mubr.bf16.mxu0 0
        %5811 = vmatmul.mubr.bf16.gmra.mrb[0].mxu0 %v5701
        %v5812 = vpop.f32.mrb[0].mxu0
        %v5813 = vadd.f32 0.0, %v5812
        %v5814 = vpop.f32.mrb[0].mxu0
        %v5815 = vpop.f32.mrb[0].mxu0
        %v5816 = vadd.f32 0.0, %v5815
        %v5817 = vpop.f32.mrb[0].mxu0
        %5818 = vmatprep.mubr.bf16.mxu0 0
        %5819 = vmatmul.mubr.bf16.gmra.mrb[0].mxu0 %v5704
        %v5820 = vpop.f32.mrb[0].mxu0
        %v5821 = vadd.f32 0.0, %v5820
        %v5822 = vpop.f32.mrb[0].mxu0
        %v5823 = vpop.f32.mrb[0].mxu0
        %v5824 = vadd.f32 0.0, %v5823
        %v5825 = vpop.f32.mrb[0].mxu0
        %5826 = vdwg.mxu0
        %v5827 = vsel %vm2867, %v5765, -1e+30
        %v5828 = vsel %vm2868, %v5768, -1e+30
        %v5829 = vsel %vm2869, %v5773, -1e+30
        %v5830 = vsel %vm2870, %v5776, -1e+30
        %v5831 = vsel %vm2871, %v5781, -1e+30
        %v5832 = vsel %vm2872, %v5784, -1e+30
        %v5833 = vsel %vm2873, %v5789, -1e+30
        %v5834 = vsel %vm2874, %v5792, -1e+30
        %v5835 = vsel %vm2875, %v5797, -1e+30
        %v5836 = vsel %vm2876, %v5800, -1e+30
        %v5837 = vsel %vm2877, %v5805, -1e+30
        %v5838 = vsel %vm2878, %v5808, -1e+30
        %v5839 = vsel %vm2879, %v5813, -1e+30
        %v5840 = vsel %vm2880, %v5816, -1e+30
        %v5841 = vsel %vm2881, %v5821, -1e+30
        %v5842 = vsel %vm2882, %v5824, -1e+30
        %5843 = vmax.xlane.f32.xlu0 %v5827
        %v5844 = vpop.xlane.xlu0 %5843
        %5845 = vmax.xlane.f32.xlu0 %v5828
        %v5846 = vpop.xlane.xlu0 %5845
        %5847 = vmax.xlane.f32.xlu0 %v5829
        %v5848 = vpop.xlane.xlu0 %5847
        %5849 = vmax.xlane.f32.xlu0 %v5830
        %v5850 = vpop.xlane.xlu0 %5849
        %5851 = vmax.xlane.f32.xlu0 %v5831
        %v5852 = vpop.xlane.xlu0 %5851
        %5853 = vmax.xlane.f32.xlu0 %v5832
        %v5854 = vpop.xlane.xlu0 %5853
        %5855 = vmax.xlane.f32.xlu0 %v5833
        %v5856 = vpop.xlane.xlu0 %5855
        %5857 = vmax.xlane.f32.xlu0 %v5834
        %v5858 = vpop.xlane.xlu0 %5857
        %5859 = vmax.xlane.f32.xlu0 %v5835
        %v5860 = vpop.xlane.xlu0 %5859
        %5861 = vmax.xlane.f32.xlu0 %v5836
        %v5862 = vpop.xlane.xlu0 %5861
        %5863 = vmax.xlane.f32.xlu0 %v5837
        %v5864 = vpop.xlane.xlu0 %5863
        %5865 = vmax.xlane.f32.xlu0 %v5838
        %v5866 = vpop.xlane.xlu0 %5865
        %5867 = vmax.xlane.f32.xlu0 %v5839
        %v5868 = vpop.xlane.xlu0 %5867
        %5869 = vmax.xlane.f32.xlu0 %v5840
        %v5870 = vpop.xlane.xlu0 %5869
        %5871 = vmax.xlane.f32.xlu0 %v5841
        %v5872 = vpop.xlane.xlu0 %5871
        %5873 = vmax.xlane.f32.xlu0 %v5842
        %v5874 = vpop.xlane.xlu0 %5873
        %v5875 = vsub.f32 %v5827, %v5844
        %v5876 = vsub.f32 %v5828, %v5846
        %v5877 = vsub.f32 %v5829, %v5848
        %v5878 = vsub.f32 %v5830, %v5850
        %v5879 = vsub.f32 %v5831, %v5852
        %v5880 = vsub.f32 %v5832, %v5854
        %v5881 = vsub.f32 %v5833, %v5856
        %v5882 = vsub.f32 %v5834, %v5858
        %v5883 = vsub.f32 %v5835, %v5860
        %v5884 = vsub.f32 %v5836, %v5862
        %v5885 = vsub.f32 %v5837, %v5864
        %v5886 = vsub.f32 %v5838, %v5866
        %v5887 = vsub.f32 %v5839, %v5868
        %v5888 = vsub.f32 %v5840, %v5870
        %v5889 = vsub.f32 %v5841, %v5872
        %v5890 = vsub.f32 %v5842, %v5874
        %v5891 = vmul.f32 %v5875, 1.442695
        %v5892 = vpow.pop %v5891
        %v5893 = vmul.f32 %v5876, 1.442695
        %v5894 = vpow.pop %v5893
        %v5895 = vmul.f32 %v5877, 1.442695
        %v5896 = vpow.pop %v5895
        %v5897 = vmul.f32 %v5878, 1.442695
        %v5898 = vpow.pop %v5897
        %v5899 = vmul.f32 %v5879, 1.442695
        %v5900 = vpow.pop %v5899
        %v5901 = vmul.f32 %v5880, 1.442695
        %v5902 = vpow.pop %v5901
        %v5903 = vmul.f32 %v5881, 1.442695
        %v5904 = vpow.pop %v5903
        %v5905 = vmul.f32 %v5882, 1.442695
        %v5906 = vpow.pop %v5905
        %v5907 = vmul.f32 %v5883, 1.442695
        %v5908 = vpow.pop %v5907
        %v5909 = vmul.f32 %v5884, 1.442695
        %v5910 = vpow.pop %v5909
        %v5911 = vmul.f32 %v5885, 1.442695
        %v5912 = vpow.pop %v5911
        %v5913 = vmul.f32 %v5886, 1.442695
        %v5914 = vpow.pop %v5913
        %v5915 = vmul.f32 %v5887, 1.442695
        %v5916 = vpow.pop %v5915
        %v5917 = vmul.f32 %v5888, 1.442695
        %v5918 = vpow.pop %v5917
        %v5919 = vmul.f32 %v5889, 1.442695
        %v5920 = vpow.pop %v5919
        %v5921 = vmul.f32 %v5890, 1.442695
        %v5922 = vpow.pop %v5921
        %5923 = vadd.xlane.f32.xlu0 %v5892
        %v5924 = vpop.xlane.xlu0 %5923
        %5925 = vadd.xlane.f32.xlu0 %v5894
        %v5926 = vpop.xlane.xlu0 %5925
        %5927 = vadd.xlane.f32.xlu0 %v5896
        %v5928 = vpop.xlane.xlu0 %5927
        %5929 = vadd.xlane.f32.xlu0 %v5898
        %v5930 = vpop.xlane.xlu0 %5929
        %5931 = vadd.xlane.f32.xlu0 %v5900
        %v5932 = vpop.xlane.xlu0 %5931
        %5933 = vadd.xlane.f32.xlu0 %v5902
        %v5934 = vpop.xlane.xlu0 %5933
        %5935 = vadd.xlane.f32.xlu0 %v5904
        %v5936 = vpop.xlane.xlu0 %5935
        %5937 = vadd.xlane.f32.xlu0 %v5906
        %v5938 = vpop.xlane.xlu0 %5937
        %5939 = vadd.xlane.f32.xlu0 %v5908
        %v5940 = vpop.xlane.xlu0 %5939
        %5941 = vadd.xlane.f32.xlu0 %v5910
        %v5942 = vpop.xlane.xlu0 %5941
        %5943 = vadd.xlane.f32.xlu0 %v5912
        %v5944 = vpop.xlane.xlu0 %5943
        %5945 = vadd.xlane.f32.xlu0 %v5914
        %v5946 = vpop.xlane.xlu0 %5945
        %5947 = vadd.xlane.f32.xlu0 %v5916
        %v5948 = vpop.xlane.xlu0 %5947
        %5949 = vadd.xlane.f32.xlu0 %v5918
        %v5950 = vpop.xlane.xlu0 %5949
        %5951 = vadd.xlane.f32.xlu0 %v5920
        %v5952 = vpop.xlane.xlu0 %5951
        %5953 = vadd.xlane.f32.xlu0 %v5922
        %v5954 = vpop.xlane.xlu0 %5953
        %v5955 = vrcp.pop %v5924
        %v5956 = vrcp.pop %v5926
        %v5957 = vrcp.pop %v5928
        %v5958 = vrcp.pop %v5930
        %v5959 = vrcp.pop %v5932
        %v5960 = vrcp.pop %v5934
        %v5961 = vrcp.pop %v5936
        %v5962 = vrcp.pop %v5938
        %v5963 = vrcp.pop %v5940
        %v5964 = vrcp.pop %v5942
        %v5965 = vrcp.pop %v5944
        %v5966 = vrcp.pop %v5946
        %v5967 = vrcp.pop %v5948
        %v5968 = vrcp.pop %v5950
        %v5969 = vrcp.pop %v5952
        %v5970 = vrcp.pop %v5954
        %v5971 = vpack.c.bf16 %v5894, %v5892
        %v5972 = vpack.c.bf16 %v5898, %v5896
        %v5973 = vpack.c.bf16 %v5902, %v5900
        %v5974 = vpack.c.bf16 %v5906, %v5904
        %v5975 = vpack.c.bf16 %v5910, %v5908
        %v5976 = vpack.c.bf16 %v5914, %v5912
        %v5977 = vpack.c.bf16 %v5918, %v5916
        %v5978 = vpack.c.bf16 %v5922, %v5920
        %5979 = vrot.lane.b32.xlu0 %v4669, 96
        %v5980 = vpop.permute.xlu0 %5979
        %5981 = vrot.lane.b32.xlu0 %v4670, 96
        %v5982 = vpop.permute.xlu0 %5981
        %5983 = vrot.lane.b32.xlu0 %v4671, 96
        %v5984 = vpop.permute.xlu0 %5983
        %5985 = vrot.lane.b32.xlu0 %v4672, 96
        %v5986 = vpop.permute.xlu0 %5985
        %5987 = vrot.lane.b32.xlu0 %v4673, 96
        %v5988 = vpop.permute.xlu0 %5987
        %5989 = vrot.lane.b32.xlu0 %v4674, 96
        %v5990 = vpop.permute.xlu0 %5989
        %5991 = vrot.lane.b32.xlu0 %v4675, 96
        %v5992 = vpop.permute.xlu0 %5991
        %5993 = vrot.lane.b32.xlu0 %v4676, 96
        %v5994 = vpop.permute.xlu0 %5993
        %6003 = vmatprep.subr.bf16.mxu0 0
        %6004 = vmatpush1.bf16.msra.mxu0 %v5980
        %6005 = vmatprep.subr.bf16.mxu0 0
        %6006 = vmatpush1.bf16.msra.mxu0 %v5982
        %6007 = vmatprep.subr.bf16.mxu0 0
        %6008 = vmatpush1.bf16.msra.mxu0 %v5984
        %6009 = vmatprep.subr.bf16.mxu0 0
        %6010 = vmatpush1.bf16.msra.mxu0 %v5986
        %6011 = vmatprep.subr.bf16.mxu0 0
        %6012 = vmatpush1.bf16.msra.mxu0 %v5988
        %6013 = vmatprep.subr.bf16.mxu0 0
        %6014 = vmatpush1.bf16.msra.mxu0 %v5990
        %6015 = vmatprep.subr.bf16.mxu0 0
        %6016 = vmatpush1.bf16.msra.mxu0 %v5992
        %6017 = vmatprep.subr.bf16.mxu0 0
        %6018 = vmatpush1.bf16.msra.mxu0 %v5994
        %6019 = vmatprep.subr.bf16.mxu0 0
        %6020 = vmatpush1.bf16.msra.mxu0 0
        %6021 = vmatprep.subr.bf16.mxu0 0
        %6022 = vmatpush1.bf16.msra.mxu0 0
        %6023 = vmatprep.subr.bf16.mxu0 0
        %6024 = vmatpush1.bf16.msra.mxu0 0
        %6025 = vmatprep.subr.bf16.mxu0 0
        %6026 = vmatpush1.bf16.msra.mxu0 0
        %6027 = vmatprep.subr.bf16.mxu0 0
        %6028 = vmatpush1.bf16.msra.mxu0 0
        %6029 = vmatprep.subr.bf16.mxu0 0
        %6030 = vmatpush1.bf16.msra.mxu0 0
        %6031 = vmatprep.subr.bf16.mxu0 0
        %6032 = vmatpush1.bf16.msra.mxu0 0
        %6033 = vmatprep.subr.bf16.mxu0 0
        %6034 = vmatpush1.bf16.msra.mxu0 0
        %6035 = vmatprep.mubr.bf16.mxu0 0
        %6036 = vmatmul.mubr.bf16.gmra.mrb[0].mxu0 %v5971
        %v6037 = vpop.f32.mrb[0].mxu0
        %v6038 = vadd.f32 0.0, %v6037
        %v6039 = vpop.f32.mrb[0].mxu0
        %v6040 = vpop.f32.mrb[0].mxu0
        %v6041 = vadd.f32 0.0, %v6040
        %v6042 = vpop.f32.mrb[0].mxu0
        %6043 = vmatprep.mubr.bf16.mxu0 0
        %6044 = vmatmul.mubr.bf16.gmra.mrb[0].mxu0 %v5972
        %v6045 = vpop.f32.mrb[0].mxu0
        %v6046 = vadd.f32 0.0, %v6045
        %v6047 = vpop.f32.mrb[0].mxu0
        %v6048 = vpop.f32.mrb[0].mxu0
        %v6049 = vadd.f32 0.0, %v6048
        %v6050 = vpop.f32.mrb[0].mxu0
        %6051 = vmatprep.mubr.bf16.mxu0 0
        %6052 = vmatmul.mubr.bf16.gmra.mrb[0].mxu0 %v5973
        %v6053 = vpop.f32.mrb[0].mxu0
        %v6054 = vadd.f32 0.0, %v6053
        %v6055 = vpop.f32.mrb[0].mxu0
        %v6056 = vpop.f32.mrb[0].mxu0
        %v6057 = vadd.f32 0.0, %v6056
        %v6058 = vpop.f32.mrb[0].mxu0
        %6059 = vmatprep.mubr.bf16.mxu0 0
        %6060 = vmatmul.mubr.bf16.gmra.mrb[0].mxu0 %v5974
        %v6061 = vpop.f32.mrb[0].mxu0
        %v6062 = vadd.f32 0.0, %v6061
        %v6063 = vpop.f32.mrb[0].mxu0
        %v6064 = vpop.f32.mrb[0].mxu0
        %v6065 = vadd.f32 0.0, %v6064
        %v6066 = vpop.f32.mrb[0].mxu0
        %6067 = vmatprep.mubr.bf16.mxu0 0
        %6068 = vmatmul.mubr.bf16.gmra.mrb[0].mxu0 %v5975
        %v6069 = vpop.f32.mrb[0].mxu0
        %v6070 = vadd.f32 0.0, %v6069
        %v6071 = vpop.f32.mrb[0].mxu0
        %v6072 = vpop.f32.mrb[0].mxu0
        %v6073 = vadd.f32 0.0, %v6072
        %v6074 = vpop.f32.mrb[0].mxu0
        %6075 = vmatprep.mubr.bf16.mxu0 0
        %6076 = vmatmul.mubr.bf16.gmra.mrb[0].mxu0 %v5976
        %v6077 = vpop.f32.mrb[0].mxu0
        %v6078 = vadd.f32 0.0, %v6077
        %v6079 = vpop.f32.mrb[0].mxu0
        %v6080 = vpop.f32.mrb[0].mxu0
        %v6081 = vadd.f32 0.0, %v6080
        %v6082 = vpop.f32.mrb[0].mxu0
        %6083 = vmatprep.mubr.bf16.mxu0 0
        %6084 = vmatmul.mubr.bf16.gmra.mrb[0].mxu0 %v5977
        %v6085 = vpop.f32.mrb[0].mxu0
        %v6086 = vadd.f32 0.0, %v6085
        %v6087 = vpop.f32.mrb[0].mxu0
        %v6088 = vpop.f32.mrb[0].mxu0
        %v6089 = vadd.f32 0.0, %v6088
        %v6090 = vpop.f32.mrb[0].mxu0
        %6091 = vmatprep.mubr.bf16.mxu0 0
        %6092 = vmatmul.mubr.bf16.gmra.mrb[0].mxu0 %v5978
        %v6093 = vpop.f32.mrb[0].mxu0
        %v6094 = vadd.f32 0.0, %v6093
        %v6095 = vpop.f32.mrb[0].mxu0
        %v6096 = vpop.f32.mrb[0].mxu0
        %v6097 = vadd.f32 0.0, %v6096
        %v6098 = vpop.f32.mrb[0].mxu0
        %6099 = vdwg.mxu0
        %v6100 = vmul.f32 %v6038, %v5955
        %v6101 = vmul.f32 %v6041, %v5956
        %v6102 = vmul.f32 %v6046, %v5957
        %v6103 = vmul.f32 %v6049, %v5958
        %v6104 = vmul.f32 %v6054, %v5959
        %v6105 = vmul.f32 %v6057, %v5960
        %v6106 = vmul.f32 %v6062, %v5961
        %v6107 = vmul.f32 %v6065, %v5962
        %v6108 = vmul.f32 %v6070, %v5963
        %v6109 = vmul.f32 %v6073, %v5964
        %v6110 = vmul.f32 %v6078, %v5965
        %v6111 = vmul.f32 %v6081, %v5966
        %v6112 = vmul.f32 %v6086, %v5967
        %v6113 = vmul.f32 %v6089, %v5968
        %v6114 = vmul.f32 %v6094, %v5969
        %v6115 = vmul.f32 %v6097, %v5970
        %v6116 = vpack.c.bf16 %v6101, %v6100
        %v6117 = vpack.c.bf16 %v6103, %v6102
        %v6118 = vpack.c.bf16 %v6105, %v6104
        %v6119 = vpack.c.bf16 %v6107, %v6106
        %v6120 = vpack.c.bf16 %v6109, %v6108
        %v6121 = vpack.c.bf16 %v6111, %v6110
        %v6122 = vpack.c.bf16 %v6113, %v6112
        %v6123 = vpack.c.bf16 %v6115, %v6114
        %v6124 = vld [vmem:[#allocation7 + $0x1b0] sm:$0xff]
        %v6125 = vld [vmem:[#allocation7 + $0x1b8] sm:$0xf]
        %v6126 = vld [vmem:[#allocation7 + $0x1bc] sm:$0xff]
        %v6127 = vld [vmem:[#allocation7 + $0x1c4] sm:$0xf]
        %v6128 = vld [vmem:[#allocation7 + $0x1c8] sm:$0xff]
        %v6129 = vld [vmem:[#allocation7 + $0x1d0] sm:$0xf]
        %v6130 = vld [vmem:[#allocation7 + $0x1d4] sm:$0xff]
        %v6131 = vld [vmem:[#allocation7 + $0x1dc] sm:$0xf]
        %v6132 = vld [vmem:[#allocation7 + $0x1e0] sm:$0xff]
        %v6133 = vld [vmem:[#allocation7 + $0x1e8] sm:$0xf]
        %v6134 = vld [vmem:[#allocation7 + $0x1ec] sm:$0xff]
        %v6135 = vld [vmem:[#allocation7 + $0x1f4] sm:$0xf]
        %v6136 = vld [vmem:[#allocation7 + $0x1f8] sm:$0xff]
        %v6137 = vld [vmem:[#allocation7 + $0x200] sm:$0xf]
        %v6138 = vld [vmem:[#allocation7 + $0x204] sm:$0xff]
        %v6139 = vld [vmem:[#allocation7 + $0x20c] sm:$0xf]
        %v6140 = vld [vmem:[#allocation7 + $0x210] sm:$0xff]
        %v6141 = vld [vmem:[#allocation7 + $0x218] sm:$0xf]
        %v6142 = vld [vmem:[#allocation7 + $0x21c] sm:$0xff]
        %v6143 = vld [vmem:[#allocation7 + $0x224] sm:$0xf]
        %v6144 = vld [vmem:[#allocation7 + $0x228] sm:$0xff]
        %v6145 = vld [vmem:[#allocation7 + $0x230] sm:$0xf]
        %v6146 = vld [vmem:[#allocation7 + $0x234] sm:$0xff]
        %v6147 = vld [vmem:[#allocation7 + $0x23c] sm:$0xf]
        %v6172 = vunpack.c.l.b16 %v6124
        %v6173 = vunpack.c.h.b16 %v6124
        %v6174 = vunpack.c.l.b16 %v6125
        %v6175 = vunpack.c.l.b16 %v6126
        %v6176 = vunpack.c.h.b16 %v6126
        %v6177 = vunpack.c.l.b16 %v6127
        %v6178 = vunpack.c.l.b16 %v6128
        %v6179 = vunpack.c.h.b16 %v6128
        %v6180 = vunpack.c.l.b16 %v6129
        %v6181 = vunpack.c.l.b16 %v6130
        %v6182 = vunpack.c.h.b16 %v6130
        %v6183 = vunpack.c.l.b16 %v6131
        %v6184 = vunpack.c.l.b16 %v6132
        %v6185 = vunpack.c.h.b16 %v6132
        %v6186 = vunpack.c.l.b16 %v6133
        %v6187 = vunpack.c.l.b16 %v6134
        %v6188 = vunpack.c.h.b16 %v6134
        %v6189 = vunpack.c.l.b16 %v6135
        %v6190 = vunpack.c.l.b16 %v6136
        %v6191 = vunpack.c.h.b16 %v6136
        %v6192 = vunpack.c.l.b16 %v6137
        %v6193 = vunpack.c.l.b16 %v6138
        %v6194 = vunpack.c.h.b16 %v6138
        %v6195 = vunpack.c.l.b16 %v6139
        %v6196 = vunpack.c.l.b16 %v6140
        %v6197 = vunpack.c.h.b16 %v6140
        %v6198 = vunpack.c.l.b16 %v6141
        %v6199 = vunpack.c.l.b16 %v6142
        %v6200 = vunpack.c.h.b16 %v6142
        %v6201 = vunpack.c.l.b16 %v6143
        %v6202 = vunpack.c.l.b16 %v6144
        %v6203 = vunpack.c.h.b16 %v6144
        %v6204 = vunpack.c.l.b16 %v6145
        %v6205 = vunpack.c.l.b16 %v6146
        %v6206 = vunpack.c.h.b16 %v6146
        %v6207 = vunpack.c.l.b16 %v6147
        %v6208 = vpack.c.b16 %v6175, %v6172
        %v6209 = vpack.c.b16 %v6176, %v6173
        %v6210 = vpack.c.b16 %v6177, %v6174
        %v6211 = vpack.c.b16 %v6181, %v6178
        %v6212 = vpack.c.b16 %v6182, %v6179
        %v6213 = vpack.c.b16 %v6183, %v6180
        %v6214 = vpack.c.b16 %v6187, %v6184
        %v6215 = vpack.c.b16 %v6188, %v6185
        %v6216 = vpack.c.b16 %v6189, %v6186
        %v6217 = vpack.c.b16 %v6193, %v6190
        %v6218 = vpack.c.b16 %v6194, %v6191
        %v6219 = vpack.c.b16 %v6195, %v6192
        %v6220 = vpack.c.b16 %v6199, %v6196
        %v6221 = vpack.c.b16 %v6200, %v6197
        %v6222 = vpack.c.b16 %v6201, %v6198
        %v6223 = vpack.c.b16 %v6205, %v6202
        %v6224 = vpack.c.b16 %v6206, %v6203
        %v6225 = vpack.c.b16 %v6207, %v6204
        %v6245 = vsel %vm2907, %v6116, 0
        %v6248 = vsel %vm2907, %v6117, 0
        %v6251 = vsel %vm2907, %v6118, 0
        %v6254 = vsel %vm2907, %v6119, 0
        %v6257 = vsel %vm2907, %v6120, 0
        %v6260 = vsel %vm2907, %v6121, 0
        %v6263 = vsel %vm2907, %v6122, 0
        %v6266 = vsel %vm2907, %v6123, 0
        %6268 = vmatprep.subr.bf16.mxu0 %v6209
        %6269 = vmatpush1.bf16.msra.mxu0 %v6208
        %6270 = vmatprep.subr.bf16.mxu0 %v6212
        %6271 = vmatpush1.bf16.msra.mxu0 %v6211
        %6272 = vmatprep.subr.bf16.mxu0 %v6215
        %6273 = vmatpush1.bf16.msra.mxu0 %v6214
        %6274 = vmatprep.subr.bf16.mxu0 %v6218
        %6275 = vmatpush1.bf16.msra.mxu0 %v6217
        %6276 = vmatprep.subr.bf16.mxu0 %v6221
        %6277 = vmatpush1.bf16.msra.mxu0 %v6220
        %6278 = vmatprep.subr.bf16.mxu0 %v6224
        %6279 = vmatpush1.bf16.msra.mxu0 %v6223
        %6280 = vmatprep.subr.bf16.mxu0 0
        %6281 = vmatpush1.bf16.msra.mxu0 0
        %6282 = vmatprep.subr.bf16.mxu0 0
        %6283 = vmatpush1.bf16.msra.mxu0 0
        %6284 = vmatprep.subr.bf16.mxu0 0
        %6285 = vmatpush1.bf16.msra.mxu0 0
        %6286 = vmatprep.subr.bf16.mxu0 0
        %6287 = vmatpush1.bf16.msra.mxu0 0
        %6288 = vmatprep.subr.bf16.mxu0 0
        %6289 = vmatpush1.bf16.msra.mxu0 0
        %6290 = vmatprep.subr.bf16.mxu0 0
        %6291 = vmatpush1.bf16.msra.mxu0 0
        %6292 = vmatprep.subr.bf16.mxu0 0
        %6293 = vmatpush1.bf16.msra.mxu0 0
        %6294 = vmatprep.subr.bf16.mxu0 0
        %6295 = vmatpush1.bf16.msra.mxu0 0
        %6296 = vmatprep.subr.bf16.mxu0 0
        %6297 = vmatpush1.bf16.msra.mxu0 0
        %6298 = vmatprep.subr.bf16.mxu0 0
        %6299 = vmatpush1.bf16.msra.mxu0 0
        %6300 = vmatprep.mubr.bf16.mxu0 0
        %6301 = vmatmul.mubr.bf16.gmra.mrb[0].mxu0 %v6245
        %v6302 = vpop.f32.mrb[0].mxu0
        %v6303 = vadd.f32 0.0, %v6302
        %v6304 = vpop.f32.mrb[0].mxu0
        %v6305 = vadd.f32 0.0, %v6304
        %v6306 = vpop.f32.mrb[0].mxu0
        %v6307 = vadd.f32 0.0, %v6306
        %v6308 = vpop.f32.mrb[0].mxu0
        %v6309 = vadd.f32 0.0, %v6308
        %6310 = vmatprep.mubr.bf16.mxu0 0
        %6311 = vmatmul.mubr.bf16.gmra.mrb[0].mxu0 %v6248
        %v6312 = vpop.f32.mrb[0].mxu0
        %v6313 = vadd.f32 0.0, %v6312
        %v6314 = vpop.f32.mrb[0].mxu0
        %v6315 = vadd.f32 0.0, %v6314
        %v6316 = vpop.f32.mrb[0].mxu0
        %v6317 = vadd.f32 0.0, %v6316
        %v6318 = vpop.f32.mrb[0].mxu0
        %v6319 = vadd.f32 0.0, %v6318
        %6320 = vmatprep.mubr.bf16.mxu0 0
        %6321 = vmatmul.mubr.bf16.gmra.mrb[0].mxu0 %v6251
        %v6322 = vpop.f32.mrb[0].mxu0
        %v6323 = vadd.f32 0.0, %v6322
        %v6324 = vpop.f32.mrb[0].mxu0
        %v6325 = vadd.f32 0.0, %v6324
        %v6326 = vpop.f32.mrb[0].mxu0
        %v6327 = vadd.f32 0.0, %v6326
        %v6328 = vpop.f32.mrb[0].mxu0
        %v6329 = vadd.f32 0.0, %v6328
        %6330 = vmatprep.mubr.bf16.mxu0 0
        %6331 = vmatmul.mubr.bf16.gmra.mrb[0].mxu0 %v6254
        %v6332 = vpop.f32.mrb[0].mxu0
        %v6333 = vadd.f32 0.0, %v6332
        %v6334 = vpop.f32.mrb[0].mxu0
        %v6335 = vadd.f32 0.0, %v6334
        %v6336 = vpop.f32.mrb[0].mxu0
        %v6337 = vadd.f32 0.0, %v6336
        %v6338 = vpop.f32.mrb[0].mxu0
        %v6339 = vadd.f32 0.0, %v6338
        %6340 = vmatprep.mubr.bf16.mxu0 0
        %6341 = vmatmul.mubr.bf16.gmra.mrb[0].mxu0 %v6257
        %v6342 = vpop.f32.mrb[0].mxu0
        %v6343 = vadd.f32 0.0, %v6342
        %v6344 = vpop.f32.mrb[0].mxu0
        %v6345 = vadd.f32 0.0, %v6344
        %v6346 = vpop.f32.mrb[0].mxu0
        %v6347 = vadd.f32 0.0, %v6346
        %v6348 = vpop.f32.mrb[0].mxu0
        %v6349 = vadd.f32 0.0, %v6348
        %6350 = vmatprep.mubr.bf16.mxu0 0
        %6351 = vmatmul.mubr.bf16.gmra.mrb[0].mxu0 %v6260
        %v6352 = vpop.f32.mrb[0].mxu0
        %v6353 = vadd.f32 0.0, %v6352
        %v6354 = vpop.f32.mrb[0].mxu0
        %v6355 = vadd.f32 0.0, %v6354
        %v6356 = vpop.f32.mrb[0].mxu0
        %v6357 = vadd.f32 0.0, %v6356
        %v6358 = vpop.f32.mrb[0].mxu0
        %v6359 = vadd.f32 0.0, %v6358
        %6360 = vmatprep.mubr.bf16.mxu0 0
        %6361 = vmatmul.mubr.bf16.gmra.mrb[0].mxu0 %v6263
        %v6362 = vpop.f32.mrb[0].mxu0
        %v6363 = vadd.f32 0.0, %v6362
        %v6364 = vpop.f32.mrb[0].mxu0
        %v6365 = vadd.f32 0.0, %v6364
        %v6366 = vpop.f32.mrb[0].mxu0
        %v6367 = vadd.f32 0.0, %v6366
        %v6368 = vpop.f32.mrb[0].mxu0
        %v6369 = vadd.f32 0.0, %v6368
        %6370 = vmatprep.mubr.bf16.mxu0 0
        %6371 = vmatmul.mubr.bf16.gmra.mrb[0].mxu0 %v6266
        %v6372 = vpop.f32.mrb[0].mxu0
        %v6373 = vadd.f32 0.0, %v6372
        %v6374 = vpop.f32.mrb[0].mxu0
        %v6375 = vadd.f32 0.0, %v6374
        %v6376 = vpop.f32.mrb[0].mxu0
        %v6377 = vadd.f32 0.0, %v6376
        %v6378 = vpop.f32.mrb[0].mxu0
        %v6379 = vadd.f32 0.0, %v6378
        %6380 = vdwg.mxu0
        %6381 = vmatprep.subr.bf16.mxu0 0
        %6382 = vmatpush1.bf16.msra.mxu0 %v6210
        %6383 = vmatprep.subr.bf16.mxu0 0
        %6384 = vmatpush1.bf16.msra.mxu0 %v6213
        %6385 = vmatprep.subr.bf16.mxu0 0
        %6386 = vmatpush1.bf16.msra.mxu0 %v6216
        %6387 = vmatprep.subr.bf16.mxu0 0
        %6388 = vmatpush1.bf16.msra.mxu0 %v6219
        %6389 = vmatprep.subr.bf16.mxu0 0
        %6390 = vmatpush1.bf16.msra.mxu0 %v6222
        %6391 = vmatprep.subr.bf16.mxu0 0
        %6392 = vmatpush1.bf16.msra.mxu0 %v6225
        %6393 = vmatprep.subr.bf16.mxu0 0
        %6394 = vmatpush1.bf16.msra.mxu0 0
        %6395 = vmatprep.subr.bf16.mxu0 0
        %6396 = vmatpush1.bf16.msra.mxu0 0
        %6397 = vmatprep.subr.bf16.mxu0 0
        %6398 = vmatpush1.bf16.msra.mxu0 0
        %6399 = vmatprep.subr.bf16.mxu0 0
        %6400 = vmatpush1.bf16.msra.mxu0 0
        %6401 = vmatprep.subr.bf16.mxu0 0
        %6402 = vmatpush1.bf16.msra.mxu0 0
        %6403 = vmatprep.subr.bf16.mxu0 0
        %6404 = vmatpush1.bf16.msra.mxu0 0
        %6405 = vmatprep.subr.bf16.mxu0 0
        %6406 = vmatpush1.bf16.msra.mxu0 0
        %6407 = vmatprep.subr.bf16.mxu0 0
        %6408 = vmatpush1.bf16.msra.mxu0 0
        %6409 = vmatprep.subr.bf16.mxu0 0
        %6410 = vmatpush1.bf16.msra.mxu0 0
        %6411 = vmatprep.subr.bf16.mxu0 0
        %6412 = vmatpush1.bf16.msra.mxu0 0
        %6413 = vmatprep.mubr.bf16.mxu0 0
        %6414 = vmatmul.mubr.bf16.gmra.mrb[0].mxu0 %v6245
        %v6415 = vpop.f32.mrb[0].mxu0
        %v6416 = vadd.f32 0.0, %v6415
        %v6417 = vpop.f32.mrb[0].mxu0
        %v6418 = vpop.f32.mrb[0].mxu0
        %v6419 = vadd.f32 0.0, %v6418
        %v6420 = vpop.f32.mrb[0].mxu0
        %6421 = vmatprep.mubr.bf16.mxu0 0
        %6422 = vmatmul.mubr.bf16.gmra.mrb[0].mxu0 %v6248
        %v6423 = vpop.f32.mrb[0].mxu0
        %v6424 = vadd.f32 0.0, %v6423
        %v6425 = vpop.f32.mrb[0].mxu0
        %v6426 = vpop.f32.mrb[0].mxu0
        %v6427 = vadd.f32 0.0, %v6426
        %v6428 = vpop.f32.mrb[0].mxu0
        %6429 = vmatprep.mubr.bf16.mxu0 0
        %6430 = vmatmul.mubr.bf16.gmra.mrb[0].mxu0 %v6251
        %v6431 = vpop.f32.mrb[0].mxu0
        %v6432 = vadd.f32 0.0, %v6431
        %v6433 = vpop.f32.mrb[0].mxu0
        %v6434 = vpop.f32.mrb[0].mxu0
        %v6435 = vadd.f32 0.0, %v6434
        %v6436 = vpop.f32.mrb[0].mxu0
        %6437 = vmatprep.mubr.bf16.mxu0 0
        %6438 = vmatmul.mubr.bf16.gmra.mrb[0].mxu0 %v6254
        %v6439 = vpop.f32.mrb[0].mxu0
        %v6440 = vadd.f32 0.0, %v6439
        %v6441 = vpop.f32.mrb[0].mxu0
        %v6442 = vpop.f32.mrb[0].mxu0
        %v6443 = vadd.f32 0.0, %v6442
        %v6444 = vpop.f32.mrb[0].mxu0
        %6445 = vmatprep.mubr.bf16.mxu0 0
        %6446 = vmatmul.mubr.bf16.gmra.mrb[0].mxu0 %v6257
        %v6447 = vpop.f32.mrb[0].mxu0
        %v6448 = vadd.f32 0.0, %v6447
        %v6449 = vpop.f32.mrb[0].mxu0
        %v6450 = vpop.f32.mrb[0].mxu0
        %v6451 = vadd.f32 0.0, %v6450
        %v6452 = vpop.f32.mrb[0].mxu0
        %6453 = vmatprep.mubr.bf16.mxu0 0
        %6454 = vmatmul.mubr.bf16.gmra.mrb[0].mxu0 %v6260
        %v6455 = vpop.f32.mrb[0].mxu0
        %v6456 = vadd.f32 0.0, %v6455
        %v6457 = vpop.f32.mrb[0].mxu0
        %v6458 = vpop.f32.mrb[0].mxu0
        %v6459 = vadd.f32 0.0, %v6458
        %v6460 = vpop.f32.mrb[0].mxu0
        %6461 = vmatprep.mubr.bf16.mxu0 0
        %6462 = vmatmul.mubr.bf16.gmra.mrb[0].mxu0 %v6263
        %v6463 = vpop.f32.mrb[0].mxu0
        %v6464 = vadd.f32 0.0, %v6463
        %v6465 = vpop.f32.mrb[0].mxu0
        %v6466 = vpop.f32.mrb[0].mxu0
        %v6467 = vadd.f32 0.0, %v6466
        %v6468 = vpop.f32.mrb[0].mxu0
        %6469 = vmatprep.mubr.bf16.mxu0 0
        %6470 = vmatmul.mubr.bf16.gmra.mrb[0].mxu0 %v6266
        %v6471 = vpop.f32.mrb[0].mxu0
        %v6472 = vadd.f32 0.0, %v6471
        %v6473 = vpop.f32.mrb[0].mxu0
        %v6474 = vpop.f32.mrb[0].mxu0
        %v6475 = vadd.f32 0.0, %v6474
        %v6476 = vpop.f32.mrb[0].mxu0
        %6477 = vdwg.mxu0
        %v6478 = vadd.f32 %v5602, %v6303
        %v6479 = vadd.f32 %v5603, %v6305
        %v6480 = vadd.f32 %v5604, %v6416
        %v6481 = vadd.f32 %v5605, %v6307
        %v6482 = vadd.f32 %v5606, %v6309
        %v6483 = vadd.f32 %v5607, %v6419
        %v6484 = vadd.f32 %v5608, %v6313
        %v6485 = vadd.f32 %v5609, %v6315
        %v6486 = vadd.f32 %v5610, %v6424
        %v6487 = vadd.f32 %v5611, %v6317
        %v6488 = vadd.f32 %v5612, %v6319
        %v6489 = vadd.f32 %v5613, %v6427
        %v6490 = vadd.f32 %v5614, %v6323
        %v6491 = vadd.f32 %v5615, %v6325
        %v6492 = vadd.f32 %v5616, %v6432
        %v6493 = vadd.f32 %v5617, %v6327
        %v6494 = vadd.f32 %v5618, %v6329
        %v6495 = vadd.f32 %v5619, %v6435
        %v6496 = vadd.f32 %v5620, %v6333
        %v6497 = vadd.f32 %v5621, %v6335
        %v6498 = vadd.f32 %v5622, %v6440
        %v6499 = vadd.f32 %v5623, %v6337
        %v6500 = vadd.f32 %v5624, %v6339
        %v6501 = vadd.f32 %v5625, %v6443
        %v6502 = vadd.f32 %v5626, %v6343
        %v6503 = vadd.f32 %v5627, %v6345
        %v6504 = vadd.f32 %v5628, %v6448
        %v6505 = vadd.f32 %v5629, %v6347
        %v6506 = vadd.f32 %v5630, %v6349
        %v6507 = vadd.f32 %v5631, %v6451
        %v6508 = vadd.f32 %v5632, %v6353
        %v6509 = vadd.f32 %v5633, %v6355
        %v6510 = vadd.f32 %v5634, %v6456
        %v6511 = vadd.f32 %v5635, %v6357
        %v6512 = vadd.f32 %v5636, %v6359
        %v6513 = vadd.f32 %v5637, %v6459
        %v6514 = vadd.f32 %v5638, %v6363
        %v6515 = vadd.f32 %v5639, %v6365
        %v6516 = vadd.f32 %v5640, %v6464
        %v6517 = vadd.f32 %v5641, %v6367
        %v6518 = vadd.f32 %v5642, %v6369
        %v6519 = vadd.f32 %v5643, %v6467
        %v6520 = vadd.f32 %v5644, %v6373
        %v6521 = vadd.f32 %v5645, %v6375
        %v6522 = vadd.f32 %v5646, %v6472
        %v6523 = vadd.f32 %v5647, %v6377
        %v6524 = vadd.f32 %v5648, %v6379
        %v6525 = vadd.f32 %v5649, %v6475
        %v6526 = vld [vmem:[%s3] sm:$0x7]
        %v6528 = vlaneseq
        %v6529 = vshrl.u32 %v6528, 7
        %v6530 = vsub.s32 0, %v6529
        %v6531 = vrot.slane %v6526, %v6530
        %v6532 = vlaneseq
        %v6533 = vshrl.u32 %v6532, 7
        %v6534 = vsub.s32 1, %v6533
        %v6535 = vrot.slane %v6526, %v6534
        %v6536 = vlaneseq
        %v6537 = vshrl.u32 %v6536, 7
        %v6538 = vsub.s32 2, %v6537
        %v6539 = vrot.slane %v6526, %v6538
        %v6543 = vadd.f32 %v6478, %v6531
        %v6544 = vadd.f32 %v6479, %v6535
        %v6545 = vadd.f32 %v6480, %v6539
        %v6546 = vadd.f32 %v6481, %v6531
        %v6547 = vadd.f32 %v6482, %v6535
        %v6548 = vadd.f32 %v6483, %v6539
        %v6549 = vadd.f32 %v6484, %v6531
        %v6550 = vadd.f32 %v6485, %v6535
        %v6551 = vadd.f32 %v6486, %v6539
        %v6552 = vadd.f32 %v6487, %v6531
        %v6553 = vadd.f32 %v6488, %v6535
        %v6554 = vadd.f32 %v6489, %v6539
        %v6555 = vadd.f32 %v6490, %v6531
        %v6556 = vadd.f32 %v6491, %v6535
        %v6557 = vadd.f32 %v6492, %v6539
        %v6558 = vadd.f32 %v6493, %v6531
        %v6559 = vadd.f32 %v6494, %v6535
        %v6560 = vadd.f32 %v6495, %v6539
        %v6561 = vadd.f32 %v6496, %v6531
        %v6562 = vadd.f32 %v6497, %v6535
        %v6563 = vadd.f32 %v6498, %v6539
        %v6564 = vadd.f32 %v6499, %v6531
        %v6565 = vadd.f32 %v6500, %v6535
        %v6566 = vadd.f32 %v6501, %v6539
        %v6567 = vadd.f32 %v6502, %v6531
        %v6568 = vadd.f32 %v6503, %v6535
        %v6569 = vadd.f32 %v6504, %v6539
        %v6570 = vadd.f32 %v6505, %v6531
        %v6571 = vadd.f32 %v6506, %v6535
        %v6572 = vadd.f32 %v6507, %v6539
        %v6573 = vadd.f32 %v6508, %v6531
        %v6574 = vadd.f32 %v6509, %v6535
        %v6575 = vadd.f32 %v6510, %v6539
        %v6576 = vadd.f32 %v6511, %v6531
        %v6577 = vadd.f32 %v6512, %v6535
        %v6578 = vadd.f32 %v6513, %v6539
        %v6579 = vadd.f32 %v6514, %v6531
        %v6580 = vadd.f32 %v6515, %v6535
        %v6581 = vadd.f32 %v6516, %v6539
        %v6582 = vadd.f32 %v6517, %v6531
        %v6583 = vadd.f32 %v6518, %v6535
        %v6584 = vadd.f32 %v6519, %v6539
        %v6585 = vadd.f32 %v6520, %v6531
        %v6586 = vadd.f32 %v6521, %v6535
        %v6587 = vadd.f32 %v6522, %v6539
        %v6588 = vadd.f32 %v6523, %v6531
        %v6589 = vadd.f32 %v6524, %v6535
        %v6590 = vadd.f32 %v6525, %v6539
        %6591 = vst [vmem:[%s244] sm:$0xff] %v6543
        %6592 = vst [vmem:[%s244 + $0x8] sm:$0xff] %v6544
        %6593 = vst [vmem:[%s244 + $0x10] sm:$0xff] %v6545
        %6594 = vst [vmem:[%s244 + $0x18] sm:$0xff] %v6546
        %6595 = vst [vmem:[%s244 + $0x20] sm:$0xff] %v6547
        %6596 = vst [vmem:[%s244 + $0x28] sm:$0xff] %v6548
        %6597 = vst [vmem:[%s244 + $0x30] sm:$0xff] %v6549
        %6598 = vst [vmem:[%s244 + $0x38] sm:$0xff] %v6550
        %6599 = vst [vmem:[%s244 + $0x40] sm:$0xff] %v6551
        %6600 = vst [vmem:[%s244 + $0x48] sm:$0xff] %v6552
        %6601 = vst [vmem:[%s244 + $0x50] sm:$0xff] %v6553
        %6602 = vst [vmem:[%s244 + $0x58] sm:$0xff] %v6554
        %6603 = vst [vmem:[%s244 + $0x60] sm:$0xff] %v6555
        %6604 = vst [vmem:[%s244 + $0x68] sm:$0xff] %v6556
        %6605 = vst [vmem:[%s244 + $0x70] sm:$0xff] %v6557
        %6606 = vst [vmem:[%s244 + $0x78] sm:$0xff] %v6558
        %6607 = vst [vmem:[%s244 + $0x80] sm:$0xff] %v6559
        %6608 = vst [vmem:[%s244 + $0x88] sm:$0xff] %v6560
        %6609 = vst [vmem:[%s244 + $0x90] sm:$0xff] %v6561
        %6610 = vst [vmem:[%s244 + $0x98] sm:$0xff] %v6562
        %6611 = vst [vmem:[%s244 + $0xa0] sm:$0xff] %v6563
        %6612 = vst [vmem:[%s244 + $0xa8] sm:$0xff] %v6564
        %6613 = vst [vmem:[%s244 + $0xb0] sm:$0xff] %v6565
        %6614 = vst [vmem:[%s244 + $0xb8] sm:$0xff] %v6566
        %6615 = vst [vmem:[%s244 + $0xc0] sm:$0xff] %v6567
        %6616 = vst [vmem:[%s244 + $0xc8] sm:$0xff] %v6568
        %6617 = vst [vmem:[%s244 + $0xd0] sm:$0xff] %v6569
        %6618 = vst [vmem:[%s244 + $0xd8] sm:$0xff] %v6570
        %6619 = vst [vmem:[%s244 + $0xe0] sm:$0xff] %v6571
        %6620 = vst [vmem:[%s244 + $0xe8] sm:$0xff] %v6572
        %6621 = vst [vmem:[%s244 + $0xf0] sm:$0xff] %v6573
        %6622 = vst [vmem:[%s244 + $0xf8] sm:$0xff] %v6574
        %6623 = vst [vmem:[%s244 + $0x100] sm:$0xff] %v6575
        %6624 = vst [vmem:[%s244 + $0x108] sm:$0xff] %v6576
        %6625 = vst [vmem:[%s244 + $0x110] sm:$0xff] %v6577
        %6626 = vst [vmem:[%s244 + $0x118] sm:$0xff] %v6578
        %6627 = vst [vmem:[%s244 + $0x120] sm:$0xff] %v6579
        %6628 = vst [vmem:[%s244 + $0x128] sm:$0xff] %v6580
        %6629 = vst [vmem:[%s244 + $0x130] sm:$0xff] %v6581
        %6630 = vst [vmem:[%s244 + $0x138] sm:$0xff] %v6582
        %6631 = vst [vmem:[%s244 + $0x140] sm:$0xff] %v6583
        %6632 = vst [vmem:[%s244 + $0x148] sm:$0xff] %v6584
        %6633 = vst [vmem:[%s244 + $0x150] sm:$0xff] %v6585
        %6634 = vst [vmem:[%s244 + $0x158] sm:$0xff] %v6586
        %6635 = vst [vmem:[%s244 + $0x160] sm:$0xff] %v6587
        %6636 = vst [vmem:[%s244 + $0x168] sm:$0xff] %v6588
        %6637 = vst [vmem:[%s244 + $0x170] sm:$0xff] %v6589
        %6638 = vst [vmem:[%s244 + $0x178] sm:$0xff] %v6590
        %s6639 = sand.u32 %s119, 1
        %s6640 = scalar_lea.sflag [#allocation4], %s6639
        %s6641 = sand.u32 %s119, 1
        %s6642 = smul.addr %s6641, 384
        %s6643 = scalar_lea.vmem [#allocation8], %s6642
        // Predicated region
        $region49: #{tpu_custom_call.1} parent=35 // pred_check
          %p6644 = pneg %p129
        $region50: #{tpu_custom_call.1} parent=35 // pred_check_branch
          %6646 = sbr.rel (%p6644) target = $region52
        $region51: #{tpu_custom_call.1} parent=35 // pred_region
          %s6648 = ssub.s32 6144, 6144
          %6649 = vsyncadd %s6640, %s6648
          %s6650 = smul.addr %s22, 48
          %s6651 = smul.addr %s6650, 128
          %s6652 = scalar_lea.hbm %s4, %s6651
          %s6653 = sshll.u32 %s6643, 4
          %s6654 = int_to_ptr.vmem [resolvable:$true] %s6653
          %6659 = dma.vmem_to_hbm [thread:$0]  %s6654, 6144, %s6652, %s6640, 384, 384, 24
        $region52: #{tpu_custom_call.1} parent=35 // pred_fallthru
          _
      $region36: #{tpu_custom_call.1} parent=5 // pred_fallthru
        _
      %p6660 = scmp.le.s32.totalorder 2, %s17
      // Predicated region
      $region53: #{tpu_custom_call.1} parent=5 // pred_check
        %p6661 = pneg %p6660
      $region54: #{tpu_custom_call.1} parent=5 // pred_check_branch
        %6663 = sbr.rel (%p6661) target = $region56
      $region55: #{tpu_custom_call.1} parent=5 // pred_region
        %s6664 = ssub.s32 %s17, 2
        // Predicated region
        $region57: #{tpu_custom_call.1} parent=55 // pred_check
          %p6665 = pneg %p135
        $region58: #{tpu_custom_call.1} parent=55 // pred_check_branch
          %6667 = sbr.rel (%p6665) target = $region60
        $region59: #{tpu_custom_call.1} parent=55 // pred_region
          %s6668 = sand.u32 %s120, 1
          %s6669 = scalar_lea.sflag [#allocation4], %s6668
          %s6670 = sand.u32 %s120, 1
          %s6671 = smul.addr %s6670, 384
          %s6672 = scalar_lea.vmem [#allocation8], %s6671
          %6673 = dma.done %s6669, 6144
        $region60: #{tpu_custom_call.1} parent=55 // pred_fallthru
          _
      $region56: #{tpu_custom_call.1} parent=5 // pred_fallthru
        _
    $region6: #{tpu_custom_call.1} parent=1 // loop_footer
      %s21 = sadd.s32 1, %s17
    $region7: #{tpu_custom_call.1} parent=1 // loop_footer_branch
      %16 = sbr.rel target = $region3
    $region8: #{tpu_custom_call.1} parent=1 // loop_exit
      _
    %6674 = vsyncpa [#allocation3], 1
    %s6675 = scalar_lea.sflag [#allocation3], 1
    %6676 = vsyncpa %s6675, 1
    %6677 = vsyncpa [#allocation6], 1
    %6678 = vsyncpa [#allocation4], 1
    %s6679 = scalar_lea.sflag [#allocation4], 1
    %6680 = vsyncpa %s6679, 1

</llo_original>
